<compile_context>
chip_gen: v7x
topology: tpu7x:2x2x1
jax: 0.10.0
libtpu: 0.0.40
codegen_flags: <defaults>
</compile_context>

<pallas_src>
import functools

import jax
import jax.numpy as jnp
from jax import lax
from jax.experimental import pallas as pl
from jax.experimental.pallas import tpu as pltpu

_NEG = -1e30  # effective -inf for the max-pool padding (every window has a
              # valid element, so any finite activation wins the max)


# ----------------------------------------------------------------------------
# Fused kernel: conv_skip + (conv1+BN1+ReLU) + (conv2+BN2+ReLU) + residual
#               + 3x3/s2/p1 max-pool, for one batch element.
# ----------------------------------------------------------------------------
def _fused_block_kernel(x_ref, w1s_ref, w2_ref, aff_ref, masks_ref, sel_ref,
                        o_ref, ext_ref, *, Cout, Wp, L, MARG, mxu_dtype):
    """
    x_ref:     (1, Cin, EXT)   zero-padded, flattened, margin-padded input
    w1s_ref:   (9, 2*Cout, Cin) per-tap [conv_skip; conv1] packed weights
    w2_ref:    (9, Cout, Cout)  per-tap conv2 weights
    aff_ref:   (Cout, 5)        cols = [b_skip, s1, sh1, s2, sh2]
    masks_ref: (2, L)           row0 = interior mask (0/1), row1 = 0 / -1e30
    sel_ref:   (L, Ho*Wo)       0/1 stride-2 interior selection matrix
    o_ref:     (1, Cout, Ho*Wo) pooled output (lane-dense slab)
    ext_ref:   (Cout, EXT) f32  scratch, reused for h and then the pre-pool map
    """
    f32 = jnp.float32
    EXT = L + 2 * MARG

    xe = x_ref[0]                     # (Cin, EXT), already in mxu_dtype
    aff = aff_ref[...]                # hoisted once, sliced in-register
    mask = masks_ref[0:1, :]          # (1, L)
    pool_bias = masks_ref[1:2, :]     # (1, L)

    # Tap offsets (dy, dx) in the flattened padded frame.
    offs = [dy * Wp + dx for dy in (-1, 0, 1) for dx in (-1, 0, 1)]

    # ---- stage 1: conv_skip & conv1 share the 9 shifted input slabs --------
    acc1 = jnp.zeros((2 * Cout, L), f32)
    for t, o in enumerate(offs):
        slab = xe[:, MARG + o: MARG + o + L]          # (Cin, L) lane slice
        acc1 = acc1 + jnp.dot(w1s_ref[t], slab, preferred_element_type=f32)

    residual = acc1[0:Cout, :] + aff[:, 0:1]                       # + bias
    h = jnp.maximum(acc1[Cout:2 * Cout, :] * aff[:, 1:2] + aff[:, 2:3], 0.0)
    h = h * mask                      # re-zero the 1-pixel padding ring

    # ---- stage 2: conv2 over h (staged once into the extended scratch) -----
    ext_ref[:, 0:MARG] = jnp.zeros((Cout, MARG), f32)              # margins
    ext_ref[:, MARG + L:EXT] = jnp.zeros((Cout, MARG), f32)        # only
    ext_ref[:, MARG:MARG + L] = h
    he = ext_ref[...].astype(mxu_dtype)                            # (Cout, EXT)

    acc2 = jnp.zeros((Cout, L), f32)
    for t, o in enumerate(offs):
        slab = he[:, MARG + o: MARG + o + L]
        acc2 = acc2 + jnp.dot(w2_ref[t], slab, preferred_element_type=f32)

    out = jnp.maximum(acc2 * aff[:, 3:4] + aff[:, 4:5], 0.0) + residual

    # ---- fused MaxPool2d(3, stride 2, pad 1); ext_ref reused (h is dead) ----
    ext_ref[:, MARG:MARG + L] = out * mask + pool_bias   # -1e30 outside frame
    pe = ext_ref[...]
    m = pe[:, MARG + offs[0]: MARG + offs[0] + L]
    for o in offs[1:]:
        m = jnp.maximum(m, pe[:, MARG + o: MARG + o + L])
    # Exact stride-2 interior subsample via a 0/1 selection matmul (f32).
    o_ref[0] = jnp.dot(m, sel_ref[...], preferred_element_type=f32)


# ----------------------------------------------------------------------------
# Wrapper: BN folding, weight/mask packing, one pallas_call over the batch.
# ----------------------------------------------------------------------------
def feature_base_block(x, params, *, mxu_dtype=jnp.bfloat16):
    """x: (B, Cin, H, W) NCHW (PyTorch layout). Returns (B, Cout, Ho, Wo).

    mxu_dtype=bfloat16 (default) feeds the native bf16 MXU on v5e/v6e/v7x with
    f32 accumulation; pass jnp.float32 for a strict-accuracy path.
    """
    eps = 1e-5
    B, Cin, H, W = x.shape
    Cout = params["w_skip"].shape[0]
    Hp, Wp = H + 2, W + 2
    L = Hp * Wp
    MARG = Wp + 1                       # max |tap shift| in the flat frame
    EXT = L + 2 * MARG
    Ho = (H + 2 - 3) // 2 + 1
    Wo = (W + 2 - 3) // 2 + 1

    # --- fold BatchNorm (running stats) into per-channel scale + shift -------
    s1 = params["bn1_gamma"] * lax.rsqrt(params["bn1_var"] + eps)
    sh1 = (params["b1"] - params["bn1_mean"]) * s1 + params["bn1_beta"]
    s2 = params["bn2_gamma"] * lax.rsqrt(params["bn2_var"] + eps)
    sh2 = (params["b2"] - params["bn2_mean"]) * s2 + params["bn2_beta"]
    aff = jnp.stack([params["b_skip"], s1, sh1, s2, sh2],
                    axis=1).astype(jnp.float32)                    # (Cout, 5)

    # --- tap-major weights: (9, M, K) for the transposed (out^T) matmuls -----
    w_skip_t = jnp.transpose(params["w_skip"], (2, 3, 0, 1)).reshape(9, Cout, Cin)
    w1_t = jnp.transpose(params["w1"], (2, 3, 0, 1)).reshape(9, Cout, Cin)
    w1s = jnp.concatenate([w_skip_t, w1_t], axis=1).astype(mxu_dtype)  # (9,2C,Cin)
    w2_t = (jnp.transpose(params["w2"], (2, 3, 0, 1))
            .reshape(9, Cout, Cout).astype(mxu_dtype))

    # --- interior mask / pool bias over the flattened padded frame -----------
    yy, xx = jnp.arange(Hp), jnp.arange(Wp)
    interior = (((yy >= 1) & (yy <= H))[:, None] &
                ((xx >= 1) & (xx <= W))[None, :]).reshape(1, L)
    mask = interior.astype(jnp.float32)
    masks = jnp.concatenate([mask, (1.0 - mask) * _NEG], axis=0)   # (2, L)

    # --- 0/1 selection matrix: stride-2 interior subsample as a matmul -------
    ii, jj = jnp.meshgrid(jnp.arange(Ho), jnp.arange(Wo), indexing="ij")
    src = ((2 * ii + 1) * Wp + (2 * jj + 1)).reshape(-1)
    sel = (jnp.zeros((L, Ho * Wo), jnp.float32)
           .at[src, jnp.arange(Ho * Wo)].set(1.0))

    # --- input: zero-pad spatially, flatten, add a zero lane margin ----------
    xe = jnp.pad(x.astype(jnp.float32), ((0, 0), (0, 0), (1, 1), (1, 1)))
    xe = jnp.pad(xe.reshape(B, Cin, L), ((0, 0), (0, 0), (MARG, MARG)))
    xe = xe.astype(mxu_dtype)                                      # (B,Cin,EXT)

    kernel = functools.partial(_fused_block_kernel, Cout=Cout, Wp=Wp, L=L,
                               MARG=MARG, mxu_dtype=mxu_dtype)

    out_flat = pl.pallas_call(
        kernel,
        out_shape=jax.ShapeDtypeStruct((B, Cout, Ho * Wo), jnp.float32),
        grid_spec=pltpu.PrefetchScalarGridSpec(
            num_scalar_prefetch=0,
            grid=(B,),
            in_specs=[
                pl.BlockSpec((1, Cin, EXT), lambda b: (b, 0, 0)),
                pl.BlockSpec((9, 2 * Cout, Cin), lambda b: (0, 0, 0)),
                pl.BlockSpec((9, Cout, Cout), lambda b: (0, 0, 0)),
                pl.BlockSpec((Cout, 5), lambda b: (0, 0)),
                pl.BlockSpec((2, L), lambda b: (0, 0)),
                pl.BlockSpec((L, Ho * Wo), lambda b: (0, 0)),
            ],
            out_specs=pl.BlockSpec((1, Cout, Ho * Wo), lambda b: (b, 0, 0)),
            scratch_shapes=[pltpu.VMEM((Cout, EXT), jnp.float32)],
        ),
        compiler_params=pltpu.CompilerParams(
            dimension_semantics=("parallel",),
            vmem_limit_bytes=32 * 1024 * 1024),
    )(xe, w1s, w2_t, aff, masks, sel)

    return out_flat.reshape(B, Cout, Ho, Wo)


# ----------------------------------------------------------------------------
# Pure-JAX reference (for correctness check), NCHW like the PyTorch module.
# ----------------------------------------------------------------------------
def _ref_conv(x, w, b):
    y = lax.conv_general_dilated(
        x, w, window_strides=(1, 1), padding=((1, 1), (1, 1)),
        dimension_numbers=("NCHW", "OIHW", "NCHW"))
    return y + b[None, :, None, None]


def feature_base_block_ref(x, params):
    eps = 1e-5

    def bn(h, p):
        return ((h - params[p + "_mean"][None, :, None, None])
                / jnp.sqrt(params[p + "_var"][None, :, None, None] + eps)
                * params[p + "_gamma"][None, :, None, None]
                + params[p + "_beta"][None, :, None, None])

    residual = _ref_conv(x, params["w_skip"], params["b_skip"])
    h = jnp.maximum(bn(_ref_conv(x, params["w1"], params["b1"]), "bn1"), 0.0)
    h = jnp.maximum(bn(_ref_conv(h, params["w2"], params["b2"]), "bn2"), 0.0)
    out = h + residual
    out = lax.reduce_window(
        out, -jnp.inf, lax.max,
        window_dimensions=(1, 1, 3, 3), window_strides=(1, 1, 2, 2),
        padding=((0, 0), (0, 0), (1, 1), (1, 1)))
    return out


# ----------------------------------------------------------------------------
# Main
# ----------------------------------------------------------------------------
if __name__ == "__main__":
    B, Cin, Cout, H, W = 2, 4, 8, 16, 16
    key = jax.random.PRNGKey(0)
    ks = jax.random.split(key, 12)

    x = jax.random.normal(ks[0], (B, Cin, H, W), jnp.float32)

    params = {
        "w_skip": 0.1 * jax.random.normal(ks[1], (Cout, Cin, 3, 3), jnp.float32),
        "b_skip": 0.1 * jax.random.normal(ks[2], (Cout,), jnp.float32),
        "w1": 0.1 * jax.random.normal(ks[3], (Cout, Cin, 3, 3), jnp.float32),
        "b1": 0.1 * jax.random.normal(ks[4], (Cout,), jnp.float32),
        "w2": 0.1 * jax.random.normal(ks[5], (Cout, Cout, 3, 3), jnp.float32),
        "b2": 0.1 * jax.random.normal(ks[6], (Cout,), jnp.float32),
        "bn1_gamma": 1.0 + 0.1 * jax.random.normal(ks[7], (Cout,), jnp.float32),
        "bn1_beta": 0.1 * jax.random.normal(ks[8], (Cout,), jnp.float32),
        "bn1_mean": 0.05 * jax.random.normal(ks[9], (Cout,), jnp.float32),
        "bn1_var": jnp.abs(1.0 + 0.1 * jax.random.normal(ks[10], (Cout,), jnp.float32)),
        "bn2_gamma": 1.0 + 0.05 * jax.random.normal(ks[11], (Cout,), jnp.float32),
        "bn2_beta": jnp.linspace(-0.1, 0.1, Cout, dtype=jnp.float32),
        "bn2_mean": jnp.linspace(-0.05, 0.05, Cout, dtype=jnp.float32),
        "bn2_var": jnp.linspace(0.9, 1.1, Cout, dtype=jnp.float32),
    }

    ref = feature_base_block_ref(x, params)

    # Strict check: f32 MXU operands.
    out_f32 = jax.block_until_ready(
        feature_base_block(x, params, mxu_dtype=jnp.float32))
    assert out_f32.shape == (B, Cout, 8, 8), out_f32.shape
    assert jnp.allclose(out_f32, ref, atol=5e-4, rtol=5e-4), \
        float(jnp.max(jnp.abs(out_f32 - ref)))

    # Default (bf16 MXU operand) path: f32 accumulation, looser tolerance.
    out_bf16 = jax.block_until_ready(feature_base_block(x, params))
    assert out_bf16.shape == (B, Cout, 8, 8), out_bf16.shape
    assert jnp.allclose(out_bf16, ref, atol=1e-1, rtol=1e-1), \
        float(jnp.max(jnp.abs(out_bf16 - ref)))

    print("KERNEL_OK")
</pallas_src>

<mosaic_0001>
module attributes {stable_mosaic.version = 11 : i64} {
  func.func @_fused_block_kernel(%arg0: i32, %arg1: memref<1x4x362xf32, #tpu.memory_space<vmem>>, %arg2: memref<9x16x4xf32, #tpu.memory_space<vmem>>, %arg3: memref<9x8x8xf32, #tpu.memory_space<vmem>>, %arg4: memref<8x5xf32, #tpu.memory_space<vmem>>, %arg5: memref<2x324xf32, #tpu.memory_space<vmem>>, %arg6: memref<324x64xf32, #tpu.memory_space<vmem>>, %arg7: memref<1x8x64xf32, #tpu.memory_space<vmem>>, %arg8: memref<8x362xf32, #tpu.memory_space<vmem>>) attributes {dimension_semantics = [#tpu.dimension_semantics<parallel>], iteration_bounds = array<i64: 2>, scalar_prefetch = 0 : i64, scratch_operands = 1 : i64, tpu.core_type = #tpu.core_type<tc>, window_params = [{transform_indices = @transform_0, window_bounds = array<i64: 1, 4, 362>}, {pipeline_mode = #tpu.pipeline_mode<synchronous>, transform_indices = @transform_1, window_bounds = array<i64: 9, 16, 4>}, {pipeline_mode = #tpu.pipeline_mode<synchronous>, transform_indices = @transform_2, window_bounds = array<i64: 9, 8, 8>}, {pipeline_mode = #tpu.pipeline_mode<synchronous>, transform_indices = @transform_3, window_bounds = array<i64: 8, 5>}, {pipeline_mode = #tpu.pipeline_mode<synchronous>, transform_indices = @transform_4, window_bounds = array<i64: 2, 324>}, {pipeline_mode = #tpu.pipeline_mode<synchronous>, transform_indices = @transform_5, window_bounds = array<i64: 324, 64>}, {transform_indices = @transform_6, window_bounds = array<i64: 1, 8, 64>}]} {
    %c0 = arith.constant 0 : index
    %c0_0 = arith.constant 0 : index
    %c0_1 = arith.constant 0 : index
    %0 = vector.load %arg1[%c0, %c0_0, %c0_1] : memref<1x4x362xf32, #tpu.memory_space<vmem>>, vector<1x4x362xf32>
    %1 = vector.shape_cast %0 : vector<1x4x362xf32> to vector<4x362xf32>
    %c0_2 = arith.constant 0 : index
    %c0_3 = arith.constant 0 : index
    %2 = vector.load %arg4[%c0_2, %c0_3] : memref<8x5xf32, #tpu.memory_space<vmem>>, vector<8x5xf32>
    %c0_4 = arith.constant 0 : index
    %c0_5 = arith.constant 0 : index
    %3 = vector.load %arg5[%c0_4, %c0_5] : memref<2x324xf32, #tpu.memory_space<vmem>>, vector<1x324xf32>
    %c1 = arith.constant 1 : index
    %c0_6 = arith.constant 0 : index
    %4 = vector.load %arg5[%c1, %c0_6] : memref<2x324xf32, #tpu.memory_space<vmem>>, vector<1x324xf32>
    %cst = arith.constant 0.000000e+00 : f32
    %5 = vector.broadcast %cst : f32 to vector<16x324xf32>
    %6 = vector.extract_strided_slice %1 {offsets = [0, 0], sizes = [4, 324], strides = [1, 1]} : vector<4x362xf32> to vector<4x324xf32>
    %c0_7 = arith.constant 0 : index
    %c0_8 = arith.constant 0 : index
    %c0_9 = arith.constant 0 : index
    %7 = vector.load %arg2[%c0_7, %c0_8, %c0_9] : memref<9x16x4xf32, #tpu.memory_space<vmem>>, vector<1x16x4xf32>
    %8 = vector.shape_cast %7 : vector<1x16x4xf32> to vector<16x4xf32>
    %cst_10 = arith.constant dense<0.000000e+00> : vector<16x324xf32>
    %9 = tpu.matmul %8, %6, %cst_10 {dimension_numbers = #tpu.dot_dimension_numbers<[1], [0], [0], [1], [0, 0, 1, 1], [], []>} : vector<16x4xf32>, vector<4x324xf32>, vector<16x324xf32> -> vector<16x324xf32>
    %10 = arith.addf %5, %9 : vector<16x324xf32>
    %11 = vector.extract_strided_slice %1 {offsets = [0, 1], sizes = [4, 324], strides = [1, 1]} : vector<4x362xf32> to vector<4x324xf32>
    %c1_11 = arith.constant 1 : index
    %c0_12 = arith.constant 0 : index
    %c0_13 = arith.constant 0 : index
    %12 = vector.load %arg2[%c1_11, %c0_12, %c0_13] : memref<9x16x4xf32, #tpu.memory_space<vmem>>, vector<1x16x4xf32>
    %13 = vector.shape_cast %12 : vector<1x16x4xf32> to vector<16x4xf32>
    %cst_14 = arith.constant dense<0.000000e+00> : vector<16x324xf32>
    %14 = tpu.matmul %13, %11, %cst_14 {dimension_numbers = #tpu.dot_dimension_numbers<[1], [0], [0], [1], [0, 0, 1, 1], [], []>} : vector<16x4xf32>, vector<4x324xf32>, vector<16x324xf32> -> vector<16x324xf32>
    %15 = arith.addf %10, %14 : vector<16x324xf32>
    %16 = vector.extract_strided_slice %1 {offsets = [0, 2], sizes = [4, 324], strides = [1, 1]} : vector<4x362xf32> to vector<4x324xf32>
    %c2 = arith.constant 2 : index
    %c0_15 = arith.constant 0 : index
    %c0_16 = arith.constant 0 : index
    %17 = vector.load %arg2[%c2, %c0_15, %c0_16] : memref<9x16x4xf32, #tpu.memory_space<vmem>>, vector<1x16x4xf32>
    %18 = vector.shape_cast %17 : vector<1x16x4xf32> to vector<16x4xf32>
    %cst_17 = arith.constant dense<0.000000e+00> : vector<16x324xf32>
    %19 = tpu.matmul %18, %16, %cst_17 {dimension_numbers = #tpu.dot_dimension_numbers<[1], [0], [0], [1], [0, 0, 1, 1], [], []>} : vector<16x4xf32>, vector<4x324xf32>, vector<16x324xf32> -> vector<16x324xf32>
    %20 = arith.addf %15, %19 : vector<16x324xf32>
    %21 = vector.extract_strided_slice %1 {offsets = [0, 18], sizes = [4, 324], strides = [1, 1]} : vector<4x362xf32> to vector<4x324xf32>
    %c3 = arith.constant 3 : index
    %c0_18 = arith.constant 0 : index
    %c0_19 = arith.constant 0 : index
    %22 = vector.load %arg2[%c3, %c0_18, %c0_19] : memref<9x16x4xf32, #tpu.memory_space<vmem>>, vector<1x16x4xf32>
    %23 = vector.shape_cast %22 : vector<1x16x4xf32> to vector<16x4xf32>
    %cst_20 = arith.constant dense<0.000000e+00> : vector<16x324xf32>
    %24 = tpu.matmul %23, %21, %cst_20 {dimension_numbers = #tpu.dot_dimension_numbers<[1], [0], [0], [1], [0, 0, 1, 1], [], []>} : vector<16x4xf32>, vector<4x324xf32>, vector<16x324xf32> -> vector<16x324xf32>
    %25 = arith.addf %20, %24 : vector<16x324xf32>
    %26 = vector.extract_strided_slice %1 {offsets = [0, 19], sizes = [4, 324], strides = [1, 1]} : vector<4x362xf32> to vector<4x324xf32>
    %c4 = arith.constant 4 : index
    %c0_21 = arith.constant 0 : index
    %c0_22 = arith.constant 0 : index
    %27 = vector.load %arg2[%c4, %c0_21, %c0_22] : memref<9x16x4xf32, #tpu.memory_space<vmem>>, vector<1x16x4xf32>
    %28 = vector.shape_cast %27 : vector<1x16x4xf32> to vector<16x4xf32>
    %cst_23 = arith.constant dense<0.000000e+00> : vector<16x324xf32>
    %29 = tpu.matmul %28, %26, %cst_23 {dimension_numbers = #tpu.dot_dimension_numbers<[1], [0], [0], [1], [0, 0, 1, 1], [], []>} : vector<16x4xf32>, vector<4x324xf32>, vector<16x324xf32> -> vector<16x324xf32>
    %30 = arith.addf %25, %29 : vector<16x324xf32>
    %31 = vector.extract_strided_slice %1 {offsets = [0, 20], sizes = [4, 324], strides = [1, 1]} : vector<4x362xf32> to vector<4x324xf32>
    %c5 = arith.constant 5 : index
    %c0_24 = arith.constant 0 : index
    %c0_25 = arith.constant 0 : index
    %32 = vector.load %arg2[%c5, %c0_24, %c0_25] : memref<9x16x4xf32, #tpu.memory_space<vmem>>, vector<1x16x4xf32>
    %33 = vector.shape_cast %32 : vector<1x16x4xf32> to vector<16x4xf32>
    %cst_26 = arith.constant dense<0.000000e+00> : vector<16x324xf32>
    %34 = tpu.matmul %33, %31, %cst_26 {dimension_numbers = #tpu.dot_dimension_numbers<[1], [0], [0], [1], [0, 0, 1, 1], [], []>} : vector<16x4xf32>, vector<4x324xf32>, vector<16x324xf32> -> vector<16x324xf32>
    %35 = arith.addf %30, %34 : vector<16x324xf32>
    %36 = vector.extract_strided_slice %1 {offsets = [0, 36], sizes = [4, 324], strides = [1, 1]} : vector<4x362xf32> to vector<4x324xf32>
    %c6 = arith.constant 6 : index
    %c0_27 = arith.constant 0 : index
    %c0_28 = arith.constant 0 : index
    %37 = vector.load %arg2[%c6, %c0_27, %c0_28] : memref<9x16x4xf32, #tpu.memory_space<vmem>>, vector<1x16x4xf32>
    %38 = vector.shape_cast %37 : vector<1x16x4xf32> to vector<16x4xf32>
    %cst_29 = arith.constant dense<0.000000e+00> : vector<16x324xf32>
    %39 = tpu.matmul %38, %36, %cst_29 {dimension_numbers = #tpu.dot_dimension_numbers<[1], [0], [0], [1], [0, 0, 1, 1], [], []>} : vector<16x4xf32>, vector<4x324xf32>, vector<16x324xf32> -> vector<16x324xf32>
    %40 = arith.addf %35, %39 : vector<16x324xf32>
    %41 = vector.extract_strided_slice %1 {offsets = [0, 37], sizes = [4, 324], strides = [1, 1]} : vector<4x362xf32> to vector<4x324xf32>
    %c7 = arith.constant 7 : index
    %c0_30 = arith.constant 0 : index
    %c0_31 = arith.constant 0 : index
    %42 = vector.load %arg2[%c7, %c0_30, %c0_31] : memref<9x16x4xf32, #tpu.memory_space<vmem>>, vector<1x16x4xf32>
    %43 = vector.shape_cast %42 : vector<1x16x4xf32> to vector<16x4xf32>
    %cst_32 = arith.constant dense<0.000000e+00> : vector<16x324xf32>
    %44 = tpu.matmul %43, %41, %cst_32 {dimension_numbers = #tpu.dot_dimension_numbers<[1], [0], [0], [1], [0, 0, 1, 1], [], []>} : vector<16x4xf32>, vector<4x324xf32>, vector<16x324xf32> -> vector<16x324xf32>
    %45 = arith.addf %40, %44 : vector<16x324xf32>
    %46 = vector.extract_strided_slice %1 {offsets = [0, 38], sizes = [4, 324], strides = [1, 1]} : vector<4x362xf32> to vector<4x324xf32>
    %c8 = arith.constant 8 : index
    %c0_33 = arith.constant 0 : index
    %c0_34 = arith.constant 0 : index
    %47 = vector.load %arg2[%c8, %c0_33, %c0_34] : memref<9x16x4xf32, #tpu.memory_space<vmem>>, vector<1x16x4xf32>
    %48 = vector.shape_cast %47 : vector<1x16x4xf32> to vector<16x4xf32>
    %cst_35 = arith.constant dense<0.000000e+00> : vector<16x324xf32>
    %49 = tpu.matmul %48, %46, %cst_35 {dimension_numbers = #tpu.dot_dimension_numbers<[1], [0], [0], [1], [0, 0, 1, 1], [], []>} : vector<16x4xf32>, vector<4x324xf32>, vector<16x324xf32> -> vector<16x324xf32>
    %50 = arith.addf %45, %49 : vector<16x324xf32>
    %51 = vector.extract_strided_slice %50 {offsets = [0, 0], sizes = [8, 324], strides = [1, 1]} : vector<16x324xf32> to vector<8x324xf32>
    %52 = vector.extract_strided_slice %2 {offsets = [0, 0], sizes = [8, 1], strides = [1, 1]} : vector<8x5xf32> to vector<8x1xf32>
    %53 = vector.broadcast %52 : vector<8x1xf32> to vector<8x324xf32>
    %54 = arith.addf %51, %53 : vector<8x324xf32>
    %55 = vector.extract_strided_slice %50 {offsets = [8, 0], sizes = [8, 324], strides = [1, 1]} : vector<16x324xf32> to vector<8x324xf32>
    %56 = vector.extract_strided_slice %2 {offsets = [0, 1], sizes = [8, 1], strides = [1, 1]} : vector<8x5xf32> to vector<8x1xf32>
    %57 = vector.broadcast %56 : vector<8x1xf32> to vector<8x324xf32>
    %58 = arith.mulf %55, %57 : vector<8x324xf32>
    %59 = vector.extract_strided_slice %2 {offsets = [0, 2], sizes = [8, 1], strides = [1, 1]} : vector<8x5xf32> to vector<8x1xf32>
    %60 = vector.broadcast %59 : vector<8x1xf32> to vector<8x324xf32>
    %61 = arith.addf %58, %60 : vector<8x324xf32>
    %cst_36 = arith.constant 0.000000e+00 : f32
    %62 = vector.broadcast %cst_36 : f32 to vector<8x324xf32>
    %63 = arith.maximumf %61, %62 : vector<8x324xf32>
    %64 = vector.broadcast %3 : vector<1x324xf32> to vector<8x324xf32>
    %65 = arith.mulf %63, %64 : vector<8x324xf32>
    %cst_37 = arith.constant 0.000000e+00 : f32
    %66 = vector.broadcast %cst_37 : f32 to vector<8x19xf32>
    %c0_38 = arith.constant 0 : index
    %c0_39 = arith.constant 0 : index
    %67 = vector.load %arg8[%c0_38, %c0_39] : memref<8x362xf32, #tpu.memory_space<vmem>>, vector<8x19xf32>
    tpu.vector_store %arg8[%c0_38, %c0_39], %66 {strides = array<i32>} : memref<8x362xf32, #tpu.memory_space<vmem>>, vector<8x19xf32>,
    %cst_40 = arith.constant 0.000000e+00 : f32
    %68 = vector.broadcast %cst_40 : f32 to vector<8x19xf32>
    %c0_41 = arith.constant 0 : index
    %c343 = arith.constant 343 : index
    %69 = vector.load %arg8[%c0_41, %c343] : memref<8x362xf32, #tpu.memory_space<vmem>>, vector<8x19xf32>
    tpu.vector_store %arg8[%c0_41, %c343], %68 {strides = array<i32>} : memref<8x362xf32, #tpu.memory_space<vmem>>, vector<8x19xf32>,
    %c0_42 = arith.constant 0 : index
    %c19 = arith.constant 19 : index
    %70 = vector.load %arg8[%c0_42, %c19] : memref<8x362xf32, #tpu.memory_space<vmem>>, vector<8x324xf32>
    tpu.vector_store %arg8[%c0_42, %c19], %65 {strides = array<i32>} : memref<8x362xf32, #tpu.memory_space<vmem>>, vector<8x324xf32>,
    %c0_43 = arith.constant 0 : index
    %c0_44 = arith.constant 0 : index
    %71 = vector.load %arg8[%c0_43, %c0_44] : memref<8x362xf32, #tpu.memory_space<vmem>>, vector<8x362xf32>
    %cst_45 = arith.constant 0.000000e+00 : f32
    %72 = vector.broadcast %cst_45 : f32 to vector<8x324xf32>
    %73 = vector.extract_strided_slice %71 {offsets = [0, 0], sizes = [8, 324], strides = [1, 1]} : vector<8x362xf32> to vector<8x324xf32>
    %c0_46 = arith.constant 0 : index
    %c0_47 = arith.constant 0 : index
    %c0_48 = arith.constant 0 : index
    %74 = vector.load %arg3[%c0_46, %c0_47, %c0_48] : memref<9x8x8xf32, #tpu.memory_space<vmem>>, vector<1x8x8xf32>
    %75 = vector.shape_cast %74 : vector<1x8x8xf32> to vector<8x8xf32>
    %cst_49 = arith.constant dense<0.000000e+00> : vector<8x324xf32>
    %76 = tpu.matmul %75, %73, %cst_49 {dimension_numbers = #tpu.dot_dimension_numbers<[1], [0], [0], [1], [0, 0, 1, 1], [], []>} : vector<8x8xf32>, vector<8x324xf32>, vector<8x324xf32> -> vector<8x324xf32>
    %77 = arith.addf %72, %76 : vector<8x324xf32>
    %78 = vector.extract_strided_slice %71 {offsets = [0, 1], sizes = [8, 324], strides = [1, 1]} : vector<8x362xf32> to vector<8x324xf32>
    %c1_50 = arith.constant 1 : index
    %c0_51 = arith.constant 0 : index
    %c0_52 = arith.constant 0 : index
    %79 = vector.load %arg3[%c1_50, %c0_51, %c0_52] : memref<9x8x8xf32, #tpu.memory_space<vmem>>, vector<1x8x8xf32>
    %80 = vector.shape_cast %79 : vector<1x8x8xf32> to vector<8x8xf32>
    %cst_53 = arith.constant dense<0.000000e+00> : vector<8x324xf32>
    %81 = tpu.matmul %80, %78, %cst_53 {dimension_numbers = #tpu.dot_dimension_numbers<[1], [0], [0], [1], [0, 0, 1, 1], [], []>} : vector<8x8xf32>, vector<8x324xf32>, vector<8x324xf32> -> vector<8x324xf32>
    %82 = arith.addf %77, %81 : vector<8x324xf32>
    %83 = vector.extract_strided_slice %71 {offsets = [0, 2], sizes = [8, 324], strides = [1, 1]} : vector<8x362xf32> to vector<8x324xf32>
    %c2_54 = arith.constant 2 : index
    %c0_55 = arith.constant 0 : index
    %c0_56 = arith.constant 0 : index
    %84 = vector.load %arg3[%c2_54, %c0_55, %c0_56] : memref<9x8x8xf32, #tpu.memory_space<vmem>>, vector<1x8x8xf32>
    %85 = vector.shape_cast %84 : vector<1x8x8xf32> to vector<8x8xf32>
    %cst_57 = arith.constant dense<0.000000e+00> : vector<8x324xf32>
    %86 = tpu.matmul %85, %83, %cst_57 {dimension_numbers = #tpu.dot_dimension_numbers<[1], [0], [0], [1], [0, 0, 1, 1], [], []>} : vector<8x8xf32>, vector<8x324xf32>, vector<8x324xf32> -> vector<8x324xf32>
    %87 = arith.addf %82, %86 : vector<8x324xf32>
    %88 = vector.extract_strided_slice %71 {offsets = [0, 18], sizes = [8, 324], strides = [1, 1]} : vector<8x362xf32> to vector<8x324xf32>
    %c3_58 = arith.constant 3 : index
    %c0_59 = arith.constant 0 : index
    %c0_60 = arith.constant 0 : index
    %89 = vector.load %arg3[%c3_58, %c0_59, %c0_60] : memref<9x8x8xf32, #tpu.memory_space<vmem>>, vector<1x8x8xf32>
    %90 = vector.shape_cast %89 : vector<1x8x8xf32> to vector<8x8xf32>
    %cst_61 = arith.constant dense<0.000000e+00> : vector<8x324xf32>
    %91 = tpu.matmul %90, %88, %cst_61 {dimension_numbers = #tpu.dot_dimension_numbers<[1], [0], [0], [1], [0, 0, 1, 1], [], []>} : vector<8x8xf32>, vector<8x324xf32>, vector<8x324xf32> -> vector<8x324xf32>
    %92 = arith.addf %87, %91 : vector<8x324xf32>
    %93 = vector.extract_strided_slice %71 {offsets = [0, 19], sizes = [8, 324], strides = [1, 1]} : vector<8x362xf32> to vector<8x324xf32>
    %c4_62 = arith.constant 4 : index
    %c0_63 = arith.constant 0 : index
    %c0_64 = arith.constant 0 : index
    %94 = vector.load %arg3[%c4_62, %c0_63, %c0_64] : memref<9x8x8xf32, #tpu.memory_space<vmem>>, vector<1x8x8xf32>
    %95 = vector.shape_cast %94 : vector<1x8x8xf32> to vector<8x8xf32>
    %cst_65 = arith.constant dense<0.000000e+00> : vector<8x324xf32>
    %96 = tpu.matmul %95, %93, %cst_65 {dimension_numbers = #tpu.dot_dimension_numbers<[1], [0], [0], [1], [0, 0, 1, 1], [], []>} : vector<8x8xf32>, vector<8x324xf32>, vector<8x324xf32> -> vector<8x324xf32>
    %97 = arith.addf %92, %96 : vector<8x324xf32>
    %98 = vector.extract_strided_slice %71 {offsets = [0, 20], sizes = [8, 324], strides = [1, 1]} : vector<8x362xf32> to vector<8x324xf32>
    %c5_66 = arith.constant 5 : index
    %c0_67 = arith.constant 0 : index
    %c0_68 = arith.constant 0 : index
    %99 = vector.load %arg3[%c5_66, %c0_67, %c0_68] : memref<9x8x8xf32, #tpu.memory_space<vmem>>, vector<1x8x8xf32>
    %100 = vector.shape_cast %99 : vector<1x8x8xf32> to vector<8x8xf32>
    %cst_69 = arith.constant dense<0.000000e+00> : vector<8x324xf32>
    %101 = tpu.matmul %100, %98, %cst_69 {dimension_numbers = #tpu.dot_dimension_numbers<[1], [0], [0], [1], [0, 0, 1, 1], [], []>} : vector<8x8xf32>, vector<8x324xf32>, vector<8x324xf32> -> vector<8x324xf32>
    %102 = arith.addf %97, %101 : vector<8x324xf32>
    %103 = vector.extract_strided_slice %71 {offsets = [0, 36], sizes = [8, 324], strides = [1, 1]} : vector<8x362xf32> to vector<8x324xf32>
    %c6_70 = arith.constant 6 : index
    %c0_71 = arith.constant 0 : index
    %c0_72 = arith.constant 0 : index
    %104 = vector.load %arg3[%c6_70, %c0_71, %c0_72] : memref<9x8x8xf32, #tpu.memory_space<vmem>>, vector<1x8x8xf32>
    %105 = vector.shape_cast %104 : vector<1x8x8xf32> to vector<8x8xf32>
    %cst_73 = arith.constant dense<0.000000e+00> : vector<8x324xf32>
    %106 = tpu.matmul %105, %103, %cst_73 {dimension_numbers = #tpu.dot_dimension_numbers<[1], [0], [0], [1], [0, 0, 1, 1], [], []>} : vector<8x8xf32>, vector<8x324xf32>, vector<8x324xf32> -> vector<8x324xf32>
    %107 = arith.addf %102, %106 : vector<8x324xf32>
    %108 = vector.extract_strided_slice %71 {offsets = [0, 37], sizes = [8, 324], strides = [1, 1]} : vector<8x362xf32> to vector<8x324xf32>
    %c7_74 = arith.constant 7 : index
    %c0_75 = arith.constant 0 : index
    %c0_76 = arith.constant 0 : index
    %109 = vector.load %arg3[%c7_74, %c0_75, %c0_76] : memref<9x8x8xf32, #tpu.memory_space<vmem>>, vector<1x8x8xf32>
    %110 = vector.shape_cast %109 : vector<1x8x8xf32> to vector<8x8xf32>
    %cst_77 = arith.constant dense<0.000000e+00> : vector<8x324xf32>
    %111 = tpu.matmul %110, %108, %cst_77 {dimension_numbers = #tpu.dot_dimension_numbers<[1], [0], [0], [1], [0, 0, 1, 1], [], []>} : vector<8x8xf32>, vector<8x324xf32>, vector<8x324xf32> -> vector<8x324xf32>
    %112 = arith.addf %107, %111 : vector<8x324xf32>
    %113 = vector.extract_strided_slice %71 {offsets = [0, 38], sizes = [8, 324], strides = [1, 1]} : vector<8x362xf32> to vector<8x324xf32>
    %c8_78 = arith.constant 8 : index
    %c0_79 = arith.constant 0 : index
    %c0_80 = arith.constant 0 : index
    %114 = vector.load %arg3[%c8_78, %c0_79, %c0_80] : memref<9x8x8xf32, #tpu.memory_space<vmem>>, vector<1x8x8xf32>
    %115 = vector.shape_cast %114 : vector<1x8x8xf32> to vector<8x8xf32>
    %cst_81 = arith.constant dense<0.000000e+00> : vector<8x324xf32>
    %116 = tpu.matmul %115, %113, %cst_81 {dimension_numbers = #tpu.dot_dimension_numbers<[1], [0], [0], [1], [0, 0, 1, 1], [], []>} : vector<8x8xf32>, vector<8x324xf32>, vector<8x324xf32> -> vector<8x324xf32>
    %117 = arith.addf %112, %116 : vector<8x324xf32>
    %118 = vector.extract_strided_slice %2 {offsets = [0, 3], sizes = [8, 1], strides = [1, 1]} : vector<8x5xf32> to vector<8x1xf32>
    %119 = vector.broadcast %118 : vector<8x1xf32> to vector<8x324xf32>
    %120 = arith.mulf %117, %119 : vector<8x324xf32>
    %121 = vector.extract_strided_slice %2 {offsets = [0, 4], sizes = [8, 1], strides = [1, 1]} : vector<8x5xf32> to vector<8x1xf32>
    %122 = vector.broadcast %121 : vector<8x1xf32> to vector<8x324xf32>
    %123 = arith.addf %120, %122 : vector<8x324xf32>
    %cst_82 = arith.constant 0.000000e+00 : f32
    %124 = vector.broadcast %cst_82 : f32 to vector<8x324xf32>
    %125 = arith.maximumf %123, %124 : vector<8x324xf32>
    %126 = arith.addf %125, %54 : vector<8x324xf32>
    %127 = vector.broadcast %3 : vector<1x324xf32> to vector<8x324xf32>
    %128 = arith.mulf %126, %127 : vector<8x324xf32>
    %129 = vector.broadcast %4 : vector<1x324xf32> to vector<8x324xf32>
    %130 = arith.addf %128, %129 : vector<8x324xf32>
    %c0_83 = arith.constant 0 : index
    %c19_84 = arith.constant 19 : index
    %131 = vector.load %arg8[%c0_83, %c19_84] : memref<8x362xf32, #tpu.memory_space<vmem>>, vector<8x324xf32>
    tpu.vector_store %arg8[%c0_83, %c19_84], %130 {strides = array<i32>} : memref<8x362xf32, #tpu.memory_space<vmem>>, vector<8x324xf32>,
    %c0_85 = arith.constant 0 : index
    %c0_86 = arith.constant 0 : index
    %132 = vector.load %arg8[%c0_85, %c0_86] : memref<8x362xf32, #tpu.memory_space<vmem>>, vector<8x362xf32>
    %133 = vector.extract_strided_slice %132 {offsets = [0, 0], sizes = [8, 324], strides = [1, 1]} : vector<8x362xf32> to vector<8x324xf32>
    %134 = vector.extract_strided_slice %132 {offsets = [0, 1], sizes = [8, 324], strides = [1, 1]} : vector<8x362xf32> to vector<8x324xf32>
    %135 = arith.maximumf %133, %134 : vector<8x324xf32>
    %136 = vector.extract_strided_slice %132 {offsets = [0, 2], sizes = [8, 324], strides = [1, 1]} : vector<8x362xf32> to vector<8x324xf32>
    %137 = arith.maximumf %135, %136 : vector<8x324xf32>
    %138 = vector.extract_strided_slice %132 {offsets = [0, 18], sizes = [8, 324], strides = [1, 1]} : vector<8x362xf32> to vector<8x324xf32>
    %139 = arith.maximumf %137, %138 : vector<8x324xf32>
    %140 = vector.extract_strided_slice %132 {offsets = [0, 19], sizes = [8, 324], strides = [1, 1]} : vector<8x362xf32> to vector<8x324xf32>
    %141 = arith.maximumf %139, %140 : vector<8x324xf32>
    %142 = vector.extract_strided_slice %132 {offsets = [0, 20], sizes = [8, 324], strides = [1, 1]} : vector<8x362xf32> to vector<8x324xf32>
    %143 = arith.maximumf %141, %142 : vector<8x324xf32>
    %144 = vector.extract_strided_slice %132 {offsets = [0, 36], sizes = [8, 324], strides = [1, 1]} : vector<8x362xf32> to vector<8x324xf32>
    %145 = arith.maximumf %143, %144 : vector<8x324xf32>
    %146 = vector.extract_strided_slice %132 {offsets = [0, 37], sizes = [8, 324], strides = [1, 1]} : vector<8x362xf32> to vector<8x324xf32>
    %147 = arith.maximumf %145, %146 : vector<8x324xf32>
    %148 = vector.extract_strided_slice %132 {offsets = [0, 38], sizes = [8, 324], strides = [1, 1]} : vector<8x362xf32> to vector<8x324xf32>
    %149 = arith.maximumf %147, %148 : vector<8x324xf32>
    %c0_87 = arith.constant 0 : index
    %c0_88 = arith.constant 0 : index
    %150 = vector.load %arg6[%c0_87, %c0_88] : memref<324x64xf32, #tpu.memory_space<vmem>>, vector<324x64xf32>
    %cst_89 = arith.constant dense<0.000000e+00> : vector<8x64xf32>
    %151 = tpu.matmul %149, %150, %cst_89 {dimension_numbers = #tpu.dot_dimension_numbers<[1], [0], [0], [1], [0, 0, 1, 1], [], []>} : vector<8x324xf32>, vector<324x64xf32>, vector<8x64xf32> -> vector<8x64xf32>
    %c0_90 = arith.constant 0 : index
    %c0_91 = arith.constant 0 : index
    %c0_92 = arith.constant 0 : index
    %152 = vector.load %arg7[%c0_90, %c0_91, %c0_92] : memref<1x8x64xf32, #tpu.memory_space<vmem>>, vector<1x8x64xf32>
    %153 = vector.shape_cast %152 : vector<1x8x64xf32> to vector<8x64xf32>
    %154 = vector.shape_cast %151 : vector<8x64xf32> to vector<1x8x64xf32>
    tpu.vector_store %arg7[%c0_90, %c0_91, %c0_92], %154 {strides = array<i32>} : memref<1x8x64xf32, #tpu.memory_space<vmem>>, vector<1x8x64xf32>,
    return
  }
  func.func @transform_0(%arg0: i32) -> (i32, i32, i32) {
    %c0_i32 = arith.constant 0 : i32
    %c0_i32_0 = arith.constant 0 : i32
    %c0_i32_1 = arith.constant 0 : i32
    return %arg0, %c0_i32, %c0_i32_0 : i32, i32, i32
  }
  func.func @transform_1(%arg0: i32) -> (i32, i32, i32) {
    %c0_i32 = arith.constant 0 : i32
    %c0_i32_0 = arith.constant 0 : i32
    %c0_i32_1 = arith.constant 0 : i32
    %c0_i32_2 = arith.constant 0 : i32
    return %c0_i32, %c0_i32_0, %c0_i32_1 : i32, i32, i32
  }
  func.func @transform_2(%arg0: i32) -> (i32, i32, i32) {
    %c0_i32 = arith.constant 0 : i32
    %c0_i32_0 = arith.constant 0 : i32
    %c0_i32_1 = arith.constant 0 : i32
    %c0_i32_2 = arith.constant 0 : i32
    return %c0_i32, %c0_i32_0, %c0_i32_1 : i32, i32, i32
  }
  func.func @transform_3(%arg0: i32) -> (i32, i32) {
    %c0_i32 = arith.constant 0 : i32
    %c0_i32_0 = arith.constant 0 : i32
    %c0_i32_1 = arith.constant 0 : i32
    return %c0_i32, %c0_i32_0 : i32, i32
  }
  func.func @transform_4(%arg0: i32) -> (i32, i32) {
    %c0_i32 = arith.constant 0 : i32
    %c0_i32_0 = arith.constant 0 : i32
    %c0_i32_1 = arith.constant 0 : i32
    return %c0_i32, %c0_i32_0 : i32, i32
  }
  func.func @transform_5(%arg0: i32) -> (i32, i32) {
    %c0_i32 = arith.constant 0 : i32
    %c0_i32_0 = arith.constant 0 : i32
    %c0_i32_1 = arith.constant 0 : i32
    return %c0_i32, %c0_i32_0 : i32, i32
  }
  func.func @transform_6(%arg0: i32) -> (i32, i32, i32) {
    %c0_i32 = arith.constant 0 : i32
    %c0_i32_0 = arith.constant 0 : i32
    %c0_i32_1 = arith.constant 0 : i32
    return %arg0, %c0_i32, %c0_i32_0 : i32, i32, i32
  }
}

</mosaic_0001>

<llo_original>
// kernel: tpu_custom_call.1
$region0: #{tpu_custom_call.1}
  #allocation0 [shape = 'u32[]', space=smem, size = 0x4, offset = 0x4, fixed_abs, tag = 'smem constant byte address 0x4 - core index']
  #allocation1 [shape = 'u32[144,128]{1,0:T(1,128)}', space=vmem, size = 0x12000, scoped, tag = 'internal scratch']
  #allocation2 [shape = 'f32[8,362]{1,0:T(8,128)}', space=vmem, size = 0x3000, scoped, tag = 'scratch operand']
  %s0 = inlined_call_operand.vmem [shape: f32[2,4,362], index: 0, kind: input, shape index: {}]
  %s1 = inlined_call_operand.vmem [shape: f32[9,16,4], index: 1, kind: input, shape index: {}]
  %s2 = inlined_call_operand.vmem [shape: f32[9,8,8], index: 2, kind: input, shape index: {}]
  %s3 = inlined_call_operand.vmem [shape: f32[8,5], index: 3, kind: input, shape index: {}]
  %s4 = inlined_call_operand.vmem [shape: f32[2,324], index: 4, kind: input, shape index: {}]
  %s5 = inlined_call_operand.vmem [shape: f32[324,64], index: 5, kind: input, shape index: {}]
  %s6 = inlined_call_operand.hbm [shape: f32[2,8,64], index: 6, kind: output, shape index: {}]
  %s7 = sld [smem:[#allocation0]]
  $region57: #{tpu_custom_call.1} parent=0
    _
  %s9 = ssub.s32 1, %s7
  %s10 = scalar_select 0, %s9, %s7
  $region1: #{tpu_custom_call.1} parent=0
    #allocation3 [shape = 'u8[8192]{0}', space=vmem, size = 0x2000, scoped, tag = 'output window, operand 0']
    #allocation4 [shape = 's32[2]{0}', space=sflag, size = 0x8, scoped, tag = 'scoped memory for tpu_custom_call.1']
    %11 = vsyncpa [#allocation4], 0
    %s12 = scalar_lea.sflag [#allocation4], 1
    %13 = vsyncpa %s12, 0
    loop: start=0, step=1, limit=4
    $region2: #{tpu_custom_call.1} parent=1 // loop_pre_header
      _
    $region3: #{tpu_custom_call.1} parent=1 // loop_header
      %s15 = sphi 0, %s19
      %p16 = scmp.ge.s32.totalorder %s15, 4
      %s25 = sphi 0, %s27
      %s28 = sphi 0, %s25
      %s29 = sphi 0, %s28
      %s45 = sphi 0, %s29
      %s49 = sphi 0, %s49
      %s51 = sphi 0, %s49
      %s52 = sphi 0, %s51
      %s66 = sphi 0, %s52
      %s70 = sphi 0, %s70
      %s72 = sphi 0, %s70
      %s73 = sphi 0, %s72
      %s87 = sphi 0, %s73
      %s91 = sphi 0, %s91
      %s93 = sphi 0, %s91
      %s94 = sphi 0, %s93
      %s108 = sphi 0, %s94
      %s112 = sphi 0, %s112
      %s114 = sphi 0, %s112
      %s115 = sphi 0, %s114
      %s129 = sphi 0, %s115
      %s133 = sphi 0, %s133
      %s135 = sphi 0, %s133
      %s136 = sphi 0, %s135
      %s150 = sphi 0, %s136
      %s156 = sphi 0, %s158
      %s159 = sphi 0, %s156
      %s160 = sphi 0, %s159
      %s176 = sphi 0, %s160
    $region4: #{tpu_custom_call.1} parent=1 // loop_header_branch
      %18 = sbr.rel (%p16) target = $region8
    $region5: #{tpu_custom_call.1} parent=1 // loop_body
      %s20 = ssub.s32 %s15, 1
      %s21 = ssub.s32 %s15, 2
      %s22 = sadd.s32 %s15, 1
      %s23 = ssub.s32 %s15, %s22
      %p24 = scmp.eq.s32.totalorder %s23, 0
      %s26 = sadd.s32 %s25, 1
      %s27 = scalar_select %p24, %s25, %s26
      %p30 = pneg %p24
      %p31 = scmp.eq.s32.totalorder %s15, 1
      %p32 = por %p30, %p31
      %p33 = scmp.ne.s32.totalorder %s25, %s28
      %p34 = scmp.eq.s32.totalorder %s15, 0
      %p35 = por %p33, %p34
      %p36 = scmp.ne.s32.totalorder %s25, %s28
      %p37 = scmp.eq.s32.totalorder %s20, 1
      %p38 = por %p36, %p37
      %p39 = scmp.ne.s32.totalorder %s28, %s29
      %p40 = scmp.eq.s32.totalorder %s20, 0
      %p41 = por %p39, %p40
      %p42 = scmp.ne.s32.totalorder %s28, %s29
      %p43 = scmp.eq.s32.totalorder %s21, 1
      %p44 = por %p42, %p43
      %p46 = scmp.ne.s32.totalorder %s29, %s45
      %p47 = scmp.eq.s32.totalorder %s21, 0
      %p48 = por %p46, %p47
      %s50 = sadd.s32 %s49, 1
      %p53 = scmp.eq.s32.totalorder %s15, 1
      %p54 = scmp.ne.s32.totalorder %s49, %s51
      %p55 = scmp.eq.s32.totalorder %s15, 0
      %p56 = por %p54, %p55
      %p57 = scmp.ne.s32.totalorder %s49, %s51
      %p58 = scmp.eq.s32.totalorder %s20, 1
      %p59 = por %p57, %p58
      %p60 = scmp.ne.s32.totalorder %s51, %s52
      %p61 = scmp.eq.s32.totalorder %s20, 0
      %p62 = por %p60, %p61
      %p63 = scmp.ne.s32.totalorder %s51, %s52
      %p64 = scmp.eq.s32.totalorder %s21, 1
      %p65 = por %p63, %p64
      %p67 = scmp.ne.s32.totalorder %s52, %s66
      %p68 = scmp.eq.s32.totalorder %s21, 0
      %p69 = por %p67, %p68
      %s71 = sadd.s32 %s70, 1
      %p74 = scmp.eq.s32.totalorder %s15, 1
      %p75 = scmp.ne.s32.totalorder %s70, %s72
      %p76 = scmp.eq.s32.totalorder %s15, 0
      %p77 = por %p75, %p76
      %p78 = scmp.ne.s32.totalorder %s70, %s72
      %p79 = scmp.eq.s32.totalorder %s20, 1
      %p80 = por %p78, %p79
      %p81 = scmp.ne.s32.totalorder %s72, %s73
      %p82 = scmp.eq.s32.totalorder %s20, 0
      %p83 = por %p81, %p82
      %p84 = scmp.ne.s32.totalorder %s72, %s73
      %p85 = scmp.eq.s32.totalorder %s21, 1
      %p86 = por %p84, %p85
      %p88 = scmp.ne.s32.totalorder %s73, %s87
      %p89 = scmp.eq.s32.totalorder %s21, 0
      %p90 = por %p88, %p89
      %s92 = sadd.s32 %s91, 1
      %p95 = scmp.eq.s32.totalorder %s15, 1
      %p96 = scmp.ne.s32.totalorder %s91, %s93
      %p97 = scmp.eq.s32.totalorder %s15, 0
      %p98 = por %p96, %p97
      %p99 = scmp.ne.s32.totalorder %s91, %s93
      %p100 = scmp.eq.s32.totalorder %s20, 1
      %p101 = por %p99, %p100
      %p102 = scmp.ne.s32.totalorder %s93, %s94
      %p103 = scmp.eq.s32.totalorder %s20, 0
      %p104 = por %p102, %p103
      %p105 = scmp.ne.s32.totalorder %s93, %s94
      %p106 = scmp.eq.s32.totalorder %s21, 1
      %p107 = por %p105, %p106
      %p109 = scmp.ne.s32.totalorder %s94, %s108
      %p110 = scmp.eq.s32.totalorder %s21, 0
      %p111 = por %p109, %p110
      %s113 = sadd.s32 %s112, 1
      %p116 = scmp.eq.s32.totalorder %s15, 1
      %p117 = scmp.ne.s32.totalorder %s112, %s114
      %p118 = scmp.eq.s32.totalorder %s15, 0
      %p119 = por %p117, %p118
      %p120 = scmp.ne.s32.totalorder %s112, %s114
      %p121 = scmp.eq.s32.totalorder %s20, 1
      %p122 = por %p120, %p121
      %p123 = scmp.ne.s32.totalorder %s114, %s115
      %p124 = scmp.eq.s32.totalorder %s20, 0
      %p125 = por %p123, %p124
      %p126 = scmp.ne.s32.totalorder %s114, %s115
      %p127 = scmp.eq.s32.totalorder %s21, 1
      %p128 = por %p126, %p127
      %p130 = scmp.ne.s32.totalorder %s115, %s129
      %p131 = scmp.eq.s32.totalorder %s21, 0
      %p132 = por %p130, %p131
      %s134 = sadd.s32 %s133, 1
      %p137 = scmp.eq.s32.totalorder %s15, 1
      %p138 = scmp.ne.s32.totalorder %s133, %s135
      %p139 = scmp.eq.s32.totalorder %s15, 0
      %p140 = por %p138, %p139
      %p141 = scmp.ne.s32.totalorder %s133, %s135
      %p142 = scmp.eq.s32.totalorder %s20, 1
      %p143 = por %p141, %p142
      %p144 = scmp.ne.s32.totalorder %s135, %s136
      %p145 = scmp.eq.s32.totalorder %s20, 0
      %p146 = por %p144, %p145
      %p147 = scmp.ne.s32.totalorder %s135, %s136
      %p148 = scmp.eq.s32.totalorder %s21, 1
      %p149 = por %p147, %p148
      %p151 = scmp.ne.s32.totalorder %s136, %s150
      %p152 = scmp.eq.s32.totalorder %s21, 0
      %p153 = por %p151, %p152
      %s154 = ssub.s32 %s15, %s22
      %p155 = scmp.eq.s32.totalorder %s154, 0
      %s157 = sadd.s32 %s156, 1
      %s158 = scalar_select %p155, %s156, %s157
      %p161 = pneg %p155
      %p162 = scmp.eq.s32.totalorder %s15, 1
      %p163 = por %p161, %p162
      %p164 = scmp.ne.s32.totalorder %s156, %s159
      %p165 = scmp.eq.s32.totalorder %s15, 0
      %p166 = por %p164, %p165
      %p167 = scmp.ne.s32.totalorder %s156, %s159
      %p168 = scmp.eq.s32.totalorder %s20, 1
      %p169 = por %p167, %p168
      %p170 = scmp.ne.s32.totalorder %s159, %s160
      %p171 = scmp.eq.s32.totalorder %s20, 0
      %p172 = por %p170, %p171
      %p173 = scmp.ne.s32.totalorder %s159, %s160
      %p174 = scmp.eq.s32.totalorder %s21, 1
      %p175 = por %p173, %p174
      %p177 = scmp.ne.s32.totalorder %s160, %s176
      %p178 = scmp.eq.s32.totalorder %s21, 0
      %p179 = por %p177, %p178
      %p180 = scmp.le.s32.totalorder 1, %s15
      %p181 = scmp.lt.s32.totalorder %s15, 3
      %p182 = pnand %p180, %p181
      %p183 = pneg %p182
      // Predicated region
      $region9: #{tpu_custom_call.1} parent=5 // pred_check
        _
      $region10: #{tpu_custom_call.1} parent=5 // pred_check_branch
        %185 = sbr.rel (%p182) target = $region12
      $region11: #{tpu_custom_call.1} parent=5 // pred_region
        %s186 = ssub.s32 %s15, 1
        // Predicated region
        $region13: #{tpu_custom_call.1} parent=11 // pred_check
          %p187 = pneg %p62
        $region14: #{tpu_custom_call.1} parent=11 // pred_check_branch
          %189 = sbr.rel (%p187) target = $region16
        $region15: #{tpu_custom_call.1} parent=11 // pred_region
          _
        $region16: #{tpu_custom_call.1} parent=11 // pred_fallthru
          _
        // Predicated region
        $region17: #{tpu_custom_call.1} parent=11 // pred_check
          %p190 = pneg %p83
        $region18: #{tpu_custom_call.1} parent=11 // pred_check_branch
          %192 = sbr.rel (%p190) target = $region20
        $region19: #{tpu_custom_call.1} parent=11 // pred_region
          _
        $region20: #{tpu_custom_call.1} parent=11 // pred_fallthru
          _
        // Predicated region
        $region21: #{tpu_custom_call.1} parent=11 // pred_check
          %p193 = pneg %p104
        $region22: #{tpu_custom_call.1} parent=11 // pred_check_branch
          %195 = sbr.rel (%p193) target = $region24
        $region23: #{tpu_custom_call.1} parent=11 // pred_region
          _
        $region24: #{tpu_custom_call.1} parent=11 // pred_fallthru
          _
        // Predicated region
        $region25: #{tpu_custom_call.1} parent=11 // pred_check
          %p196 = pneg %p125
        $region26: #{tpu_custom_call.1} parent=11 // pred_check_branch
          %198 = sbr.rel (%p196) target = $region28
        $region27: #{tpu_custom_call.1} parent=11 // pred_region
          _
        $region28: #{tpu_custom_call.1} parent=11 // pred_fallthru
          _
        // Predicated region
        $region29: #{tpu_custom_call.1} parent=11 // pred_check
          %p199 = pneg %p146
        $region30: #{tpu_custom_call.1} parent=11 // pred_check_branch
          %201 = sbr.rel (%p199) target = $region32
        $region31: #{tpu_custom_call.1} parent=11 // pred_region
          _
        $region32: #{tpu_custom_call.1} parent=11 // pred_fallthru
          _
      $region12: #{tpu_custom_call.1} parent=5 // pred_fallthru
        _
      %p202 = scmp.lt.s32.totalorder %s15, 2
      // Predicated region
      $region33: #{tpu_custom_call.1} parent=5 // pred_check
        %p203 = pneg %p202
      $region34: #{tpu_custom_call.1} parent=5 // pred_check_branch
        %205 = sbr.rel (%p203) target = $region36
      $region35: #{tpu_custom_call.1} parent=5 // pred_region
        // Predicated region
        $region37: #{tpu_custom_call.1} parent=35 // pred_check
          %p206 = pneg %p35
        $region38: #{tpu_custom_call.1} parent=35 // pred_check_branch
          %208 = sbr.rel (%p206) target = $region40
        $region39: #{tpu_custom_call.1} parent=35 // pred_region
          %p209 = scmp.lt.s32.totalorder %s15, 1
          %s210 = scalar_select %p209, %s15, 1
          %s211 = smul.addr %s210, 3
          %s212 = smul.addr %s211, 4
          %s213 = scalar_lea.vmem %s0, %s212
        $region40: #{tpu_custom_call.1} parent=35 // pred_fallthru
          _
      $region36: #{tpu_custom_call.1} parent=5 // pred_fallthru
        _
      %p214 = scmp.le.s32.totalorder 1, %s15
      %p215 = scmp.lt.s32.totalorder %s15, 3
      %p216 = pnand %p214, %p215
      %p217 = pneg %p216
      // Predicated region
      $region41: #{tpu_custom_call.1} parent=5 // pred_check
        _
      $region42: #{tpu_custom_call.1} parent=5 // pred_check_branch
        %219 = sbr.rel (%p216) target = $region44
      $region43: #{tpu_custom_call.1} parent=5 // pred_region
        %s220 = ssub.s32 %s15, 1
        %p221 = scmp.lt.s32.totalorder %s20, 1
        %s222 = scalar_select %p221, %s20, 1
        %s223 = smul.addr %s222, 3
        %s224 = smul.addr %s223, 4
        %s225 = scalar_lea.vmem %s0, %s224
        %p226 = pneg %p41
        %p227 = pneg %p38
        %p228 = pneg %p62
        %p229 = pneg %p59
        %p230 = pneg %p83
        %p231 = pneg %p80
        %p232 = pneg %p104
        %p233 = pneg %p101
        %p234 = pneg %p125
        %p235 = pneg %p122
        %p236 = pneg %p146
        %p237 = pneg %p143
        %p238 = pneg %p172
        %p239 = pneg %p169
        %s240 = sand.u32 %s159, 1
        %s241 = scalar_lea.sflag [#allocation4], %s240
        %s242 = sand.u32 %s159, 1
        %s243 = smul.addr %s242, 8
        %s244 = scalar_lea.vmem [#allocation3], %s243
        %p245 = scmp.lt.s32.totalorder %s20, 1
        %s246 = scalar_select %p245, %s20, 1
        %s247 = smul.addr %s246, 3
        %s248 = smul.addr %s247, 4
        %s249 = scalar_lea.vmem %s0, %s248
        %v250 = vld [vmem:[%s249] sm:$0xff]
        %v251 = vld [vmem:[%s249 + $0x8] sm:$0xf]
        %v252 = vld [vmem:[%s3] sm:$0xff]
        %v253 = vld [vmem:[%s4] ss:$2 sm:$0x7]
        %s254 = scalar_lea.vmem %s4, 1
        %v255 = vld [vmem:[%s254] ss:$2 sm:$0x7]
        %v256 = vld [vmem:[%s1] sm:$0xff]
        %v257 = vld [vmem:[%s1 + $0x8] sm:$0xff]
        %s258 = scalar_lea.vmem %s1, 16
        %v259 = vld [vmem:[%s258] sm:$0xff]
        %v260 = vld [vmem:[%s258 + $0x8] sm:$0xff]
        %v263 = vcombine.high %v250, %v250
        %264 = vrot.lane.b32.xlu0 %v250, 127
        %v265 = vpop.permute.xlu0 %264
        %266 = vrot.lane.b32.xlu0 %v263, 127
        %v267 = vpop.permute.xlu0 %266
        %268 = vrot.lane.b32.xlu0 %v251, 127
        %v269 = vpop.permute.xlu0 %268
        %vm270 = vcmask 1039360
        %v271 = vsel %vm270, %v265, %v267
        %v272 = vsel %vm270, %v267, %v269
        %vm273 = vcmask 31744
        %v275 = vsel %vm273, %v259, 0
        %v278 = vsel %vm273, %v260, 0
        %vm280 = vcmask 1043456
        %v281 = vsel %vm280, %v271, 0
        %v283 = vsel %vm280, %v272, 0
        %v285 = vsel %vm280, %v269, 0
        %287 = vmatprep.subr.mxu0 %v283
        %288 = vmatpush1.msra.mxu0 %v281
        %289 = vmatprep.subr.mxu0 0.0
        %290 = vmatpush1.msra.mxu0 0.0
        %291 = vmatprep.subr.mxu0 0.0
        %292 = vmatpush1.msra.mxu0 0.0
        %293 = vmatprep.subr.mxu0 0.0
        %294 = vmatpush1.msra.mxu0 0.0
        %295 = vmatprep.subr.mxu0 0.0
        %296 = vmatpush1.msra.mxu0 0.0
        %297 = vmatprep.subr.mxu0 0.0
        %298 = vmatpush1.msra.mxu0 0.0
        %299 = vmatprep.subr.mxu0 0.0
        %300 = vmatpush1.msra.mxu0 0.0
        %301 = vmatprep.subr.mxu0 0.0
        %302 = vmatpush1.msra.mxu0 0.0
        %303 = vmatprep.subr.mxu0 0.0
        %304 = vmatpush1.msra.mxu0 0.0
        %305 = vmatprep.subr.mxu0 0.0
        %306 = vmatpush1.msra.mxu0 0.0
        %307 = vmatprep.subr.mxu0 0.0
        %308 = vmatpush1.msra.mxu0 0.0
        %309 = vmatprep.subr.mxu0 0.0
        %310 = vmatpush1.msra.mxu0 0.0
        %311 = vmatprep.subr.mxu0 0.0
        %312 = vmatpush1.msra.mxu0 0.0
        %313 = vmatprep.subr.mxu0 0.0
        %314 = vmatpush1.msra.mxu0 0.0
        %315 = vmatprep.subr.mxu0 0.0
        %316 = vmatpush1.msra.mxu0 0.0
        %317 = vmatprep.subr.mxu0 0.0
        %318 = vmatpush1.msra.mxu0 0.0
        %319 = vmatprep.subr.mxu0 0.0
        %320 = vmatpush1.msra.mxu0 0.0
        %321 = vmatprep.subr.mxu0 0.0
        %322 = vmatpush1.msra.mxu0 0.0
        %323 = vmatprep.subr.mxu0 0.0
        %324 = vmatpush1.msra.mxu0 0.0
        %325 = vmatprep.subr.mxu0 0.0
        %326 = vmatpush1.msra.mxu0 0.0
        %327 = vmatprep.subr.mxu0 0.0
        %328 = vmatpush1.msra.mxu0 0.0
        %329 = vmatprep.subr.mxu0 0.0
        %330 = vmatpush1.msra.mxu0 0.0
        %331 = vmatprep.subr.mxu0 0.0
        %332 = vmatpush1.msra.mxu0 0.0
        %333 = vmatprep.subr.mxu0 0.0
        %334 = vmatpush1.msra.mxu0 0.0
        %335 = vmatprep.subr.mxu0 0.0
        %336 = vmatpush1.msra.mxu0 0.0
        %337 = vmatprep.subr.mxu0 0.0
        %338 = vmatpush1.msra.mxu0 0.0
        %339 = vmatprep.subr.mxu0 0.0
        %340 = vmatpush1.msra.mxu0 0.0
        %341 = vmatprep.subr.mxu0 0.0
        %342 = vmatpush1.msra.mxu0 0.0
        %343 = vmatprep.subr.mxu0 0.0
        %344 = vmatpush1.msra.mxu0 0.0
        %345 = vmatprep.subr.mxu0 0.0
        %346 = vmatpush1.msra.mxu0 0.0
        %347 = vmatprep.subr.mxu0 0.0
        %348 = vmatpush1.msra.mxu0 0.0
        %349 = vmatprep.subr.mxu0 0.0
        %350 = vmatpush1.msra.mxu0 0.0
        %351 = vmatprep.mubr.f32.mxu0 0.0
        %352 = vmatmul.mubr.f32.gmra.mrb[0].mxu0 %v275
        %v353 = vpop.f32.mrb[0].mxu0
        %v354 = vadd.f32 0.0, %v353
        %v355 = vpop.f32.mrb[0].mxu0
        %v356 = vadd.f32 0.0, %v355
        %357 = vmatprep.mubr.f32.mxu0 0.0
        %358 = vmatmul.mubr.f32.gmra.mrb[0].mxu0 %v278
        %v359 = vpop.f32.mrb[0].mxu0
        %v360 = vadd.f32 0.0, %v359
        %v361 = vpop.f32.mrb[0].mxu0
        %v362 = vadd.f32 0.0, %v361
        %363 = vdwg.mxu0
        %364 = vmatprep.subr.mxu0 0.0
        %365 = vmatpush1.msra.mxu0 %v285
        %366 = vmatprep.subr.mxu0 0.0
        %367 = vmatpush1.msra.mxu0 0.0
        %368 = vmatprep.subr.mxu0 0.0
        %369 = vmatpush1.msra.mxu0 0.0
        %370 = vmatprep.subr.mxu0 0.0
        %371 = vmatpush1.msra.mxu0 0.0
        %372 = vmatprep.subr.mxu0 0.0
        %373 = vmatpush1.msra.mxu0 0.0
        %374 = vmatprep.subr.mxu0 0.0
        %375 = vmatpush1.msra.mxu0 0.0
        %376 = vmatprep.subr.mxu0 0.0
        %377 = vmatpush1.msra.mxu0 0.0
        %378 = vmatprep.subr.mxu0 0.0
        %379 = vmatpush1.msra.mxu0 0.0
        %380 = vmatprep.subr.mxu0 0.0
        %381 = vmatpush1.msra.mxu0 0.0
        %382 = vmatprep.subr.mxu0 0.0
        %383 = vmatpush1.msra.mxu0 0.0
        %384 = vmatprep.subr.mxu0 0.0
        %385 = vmatpush1.msra.mxu0 0.0
        %386 = vmatprep.subr.mxu0 0.0
        %387 = vmatpush1.msra.mxu0 0.0
        %388 = vmatprep.subr.mxu0 0.0
        %389 = vmatpush1.msra.mxu0 0.0
        %390 = vmatprep.subr.mxu0 0.0
        %391 = vmatpush1.msra.mxu0 0.0
        %392 = vmatprep.subr.mxu0 0.0
        %393 = vmatpush1.msra.mxu0 0.0
        %394 = vmatprep.subr.mxu0 0.0
        %395 = vmatpush1.msra.mxu0 0.0
        %396 = vmatprep.subr.mxu0 0.0
        %397 = vmatpush1.msra.mxu0 0.0
        %398 = vmatprep.subr.mxu0 0.0
        %399 = vmatpush1.msra.mxu0 0.0
        %400 = vmatprep.subr.mxu0 0.0
        %401 = vmatpush1.msra.mxu0 0.0
        %402 = vmatprep.subr.mxu0 0.0
        %403 = vmatpush1.msra.mxu0 0.0
        %404 = vmatprep.subr.mxu0 0.0
        %405 = vmatpush1.msra.mxu0 0.0
        %406 = vmatprep.subr.mxu0 0.0
        %407 = vmatpush1.msra.mxu0 0.0
        %408 = vmatprep.subr.mxu0 0.0
        %409 = vmatpush1.msra.mxu0 0.0
        %410 = vmatprep.subr.mxu0 0.0
        %411 = vmatpush1.msra.mxu0 0.0
        %412 = vmatprep.subr.mxu0 0.0
        %413 = vmatpush1.msra.mxu0 0.0
        %414 = vmatprep.subr.mxu0 0.0
        %415 = vmatpush1.msra.mxu0 0.0
        %416 = vmatprep.subr.mxu0 0.0
        %417 = vmatpush1.msra.mxu0 0.0
        %418 = vmatprep.subr.mxu0 0.0
        %419 = vmatpush1.msra.mxu0 0.0
        %420 = vmatprep.subr.mxu0 0.0
        %421 = vmatpush1.msra.mxu0 0.0
        %422 = vmatprep.subr.mxu0 0.0
        %423 = vmatpush1.msra.mxu0 0.0
        %424 = vmatprep.subr.mxu0 0.0
        %425 = vmatpush1.msra.mxu0 0.0
        %426 = vmatprep.subr.mxu0 0.0
        %427 = vmatpush1.msra.mxu0 0.0
        %428 = vmatprep.mubr.f32.mxu0 0.0
        %429 = vmatmul.mubr.f32.gmra.mrb[0].mxu0 %v275
        %v430 = vpop.f32.mrb[0].mxu0
        %v431 = vadd.f32 0.0, %v430
        %v432 = vpop.f32.mrb[0].mxu0
        %433 = vmatprep.mubr.f32.mxu0 0.0
        %434 = vmatmul.mubr.f32.gmra.mrb[0].mxu0 %v278
        %v435 = vpop.f32.mrb[0].mxu0
        %v436 = vadd.f32 0.0, %v435
        %v437 = vpop.f32.mrb[0].mxu0
        %438 = vdwg.mxu0
        %v440 = vsel %vm273, %v256, 0
        %v443 = vsel %vm273, %v257, 0
        %v445 = vsel %vm280, %v250, 0
        %v447 = vsel %vm280, %v263, 0
        %v449 = vsel %vm280, %v251, 0
        %451 = vmatprep.subr.mxu0 %v447
        %452 = vmatpush1.msra.mxu0 %v445
        %453 = vmatprep.subr.mxu0 0.0
        %454 = vmatpush1.msra.mxu0 0.0
        %455 = vmatprep.subr.mxu0 0.0
        %456 = vmatpush1.msra.mxu0 0.0
        %457 = vmatprep.subr.mxu0 0.0
        %458 = vmatpush1.msra.mxu0 0.0
        %459 = vmatprep.subr.mxu0 0.0
        %460 = vmatpush1.msra.mxu0 0.0
        %461 = vmatprep.subr.mxu0 0.0
        %462 = vmatpush1.msra.mxu0 0.0
        %463 = vmatprep.subr.mxu0 0.0
        %464 = vmatpush1.msra.mxu0 0.0
        %465 = vmatprep.subr.mxu0 0.0
        %466 = vmatpush1.msra.mxu0 0.0
        %467 = vmatprep.subr.mxu0 0.0
        %468 = vmatpush1.msra.mxu0 0.0
        %469 = vmatprep.subr.mxu0 0.0
        %470 = vmatpush1.msra.mxu0 0.0
        %471 = vmatprep.subr.mxu0 0.0
        %472 = vmatpush1.msra.mxu0 0.0
        %473 = vmatprep.subr.mxu0 0.0
        %474 = vmatpush1.msra.mxu0 0.0
        %475 = vmatprep.subr.mxu0 0.0
        %476 = vmatpush1.msra.mxu0 0.0
        %477 = vmatprep.subr.mxu0 0.0
        %478 = vmatpush1.msra.mxu0 0.0
        %479 = vmatprep.subr.mxu0 0.0
        %480 = vmatpush1.msra.mxu0 0.0
        %481 = vmatprep.subr.mxu0 0.0
        %482 = vmatpush1.msra.mxu0 0.0
        %483 = vmatprep.subr.mxu0 0.0
        %484 = vmatpush1.msra.mxu0 0.0
        %485 = vmatprep.subr.mxu0 0.0
        %486 = vmatpush1.msra.mxu0 0.0
        %487 = vmatprep.subr.mxu0 0.0
        %488 = vmatpush1.msra.mxu0 0.0
        %489 = vmatprep.subr.mxu0 0.0
        %490 = vmatpush1.msra.mxu0 0.0
        %491 = vmatprep.subr.mxu0 0.0
        %492 = vmatpush1.msra.mxu0 0.0
        %493 = vmatprep.subr.mxu0 0.0
        %494 = vmatpush1.msra.mxu0 0.0
        %495 = vmatprep.subr.mxu0 0.0
        %496 = vmatpush1.msra.mxu0 0.0
        %497 = vmatprep.subr.mxu0 0.0
        %498 = vmatpush1.msra.mxu0 0.0
        %499 = vmatprep.subr.mxu0 0.0
        %500 = vmatpush1.msra.mxu0 0.0
        %501 = vmatprep.subr.mxu0 0.0
        %502 = vmatpush1.msra.mxu0 0.0
        %503 = vmatprep.subr.mxu0 0.0
        %504 = vmatpush1.msra.mxu0 0.0
        %505 = vmatprep.subr.mxu0 0.0
        %506 = vmatpush1.msra.mxu0 0.0
        %507 = vmatprep.subr.mxu0 0.0
        %508 = vmatpush1.msra.mxu0 0.0
        %509 = vmatprep.subr.mxu0 0.0
        %510 = vmatpush1.msra.mxu0 0.0
        %511 = vmatprep.subr.mxu0 0.0
        %512 = vmatpush1.msra.mxu0 0.0
        %513 = vmatprep.subr.mxu0 0.0
        %514 = vmatpush1.msra.mxu0 0.0
        %515 = vmatprep.mubr.f32.mxu0 0.0
        %516 = vmatmul.mubr.f32.gmra.mrb[0].mxu0 %v440
        %v517 = vpop.f32.mrb[0].mxu0
        %v518 = vadd.f32 %v354, %v517
        %v519 = vpop.f32.mrb[0].mxu0
        %v520 = vadd.f32 %v356, %v519
        %521 = vmatprep.mubr.f32.mxu0 0.0
        %522 = vmatmul.mubr.f32.gmra.mrb[0].mxu0 %v443
        %v523 = vpop.f32.mrb[0].mxu0
        %v524 = vadd.f32 %v360, %v523
        %v525 = vpop.f32.mrb[0].mxu0
        %v526 = vadd.f32 %v362, %v525
        %527 = vdwg.mxu0
        %528 = vmatprep.subr.mxu0 0.0
        %529 = vmatpush1.msra.mxu0 %v449
        %530 = vmatprep.subr.mxu0 0.0
        %531 = vmatpush1.msra.mxu0 0.0
        %532 = vmatprep.subr.mxu0 0.0
        %533 = vmatpush1.msra.mxu0 0.0
        %534 = vmatprep.subr.mxu0 0.0
        %535 = vmatpush1.msra.mxu0 0.0
        %536 = vmatprep.subr.mxu0 0.0
        %537 = vmatpush1.msra.mxu0 0.0
        %538 = vmatprep.subr.mxu0 0.0
        %539 = vmatpush1.msra.mxu0 0.0
        %540 = vmatprep.subr.mxu0 0.0
        %541 = vmatpush1.msra.mxu0 0.0
        %542 = vmatprep.subr.mxu0 0.0
        %543 = vmatpush1.msra.mxu0 0.0
        %544 = vmatprep.subr.mxu0 0.0
        %545 = vmatpush1.msra.mxu0 0.0
        %546 = vmatprep.subr.mxu0 0.0
        %547 = vmatpush1.msra.mxu0 0.0
        %548 = vmatprep.subr.mxu0 0.0
        %549 = vmatpush1.msra.mxu0 0.0
        %550 = vmatprep.subr.mxu0 0.0
        %551 = vmatpush1.msra.mxu0 0.0
        %552 = vmatprep.subr.mxu0 0.0
        %553 = vmatpush1.msra.mxu0 0.0
        %554 = vmatprep.subr.mxu0 0.0
        %555 = vmatpush1.msra.mxu0 0.0
        %556 = vmatprep.subr.mxu0 0.0
        %557 = vmatpush1.msra.mxu0 0.0
        %558 = vmatprep.subr.mxu0 0.0
        %559 = vmatpush1.msra.mxu0 0.0
        %560 = vmatprep.subr.mxu0 0.0
        %561 = vmatpush1.msra.mxu0 0.0
        %562 = vmatprep.subr.mxu0 0.0
        %563 = vmatpush1.msra.mxu0 0.0
        %564 = vmatprep.subr.mxu0 0.0
        %565 = vmatpush1.msra.mxu0 0.0
        %566 = vmatprep.subr.mxu0 0.0
        %567 = vmatpush1.msra.mxu0 0.0
        %568 = vmatprep.subr.mxu0 0.0
        %569 = vmatpush1.msra.mxu0 0.0
        %570 = vmatprep.subr.mxu0 0.0
        %571 = vmatpush1.msra.mxu0 0.0
        %572 = vmatprep.subr.mxu0 0.0
        %573 = vmatpush1.msra.mxu0 0.0
        %574 = vmatprep.subr.mxu0 0.0
        %575 = vmatpush1.msra.mxu0 0.0
        %576 = vmatprep.subr.mxu0 0.0
        %577 = vmatpush1.msra.mxu0 0.0
        %578 = vmatprep.subr.mxu0 0.0
        %579 = vmatpush1.msra.mxu0 0.0
        %580 = vmatprep.subr.mxu0 0.0
        %581 = vmatpush1.msra.mxu0 0.0
        %582 = vmatprep.subr.mxu0 0.0
        %583 = vmatpush1.msra.mxu0 0.0
        %584 = vmatprep.subr.mxu0 0.0
        %585 = vmatpush1.msra.mxu0 0.0
        %586 = vmatprep.subr.mxu0 0.0
        %587 = vmatpush1.msra.mxu0 0.0
        %588 = vmatprep.subr.mxu0 0.0
        %589 = vmatpush1.msra.mxu0 0.0
        %590 = vmatprep.subr.mxu0 0.0
        %591 = vmatpush1.msra.mxu0 0.0
        %592 = vmatprep.mubr.f32.mxu0 0.0
        %593 = vmatmul.mubr.f32.gmra.mrb[0].mxu0 %v440
        %v594 = vpop.f32.mrb[0].mxu0
        %v595 = vadd.f32 %v431, %v594
        %v596 = vpop.f32.mrb[0].mxu0
        %597 = vmatprep.mubr.f32.mxu0 0.0
        %598 = vmatmul.mubr.f32.gmra.mrb[0].mxu0 %v443
        %v599 = vpop.f32.mrb[0].mxu0
        %v600 = vadd.f32 %v436, %v599
        %v601 = vpop.f32.mrb[0].mxu0
        %602 = vdwg.mxu0
        %s603 = scalar_lea.vmem %s1, 32
        %v604 = vld [vmem:[%s603] sm:$0xff]
        %v605 = vld [vmem:[%s603 + $0x8] sm:$0xff]
        %606 = vrot.lane.b32.xlu0 %v250, 126
        %v607 = vpop.permute.xlu0 %606
        %608 = vrot.lane.b32.xlu0 %v263, 126
        %v609 = vpop.permute.xlu0 %608
        %610 = vrot.lane.b32.xlu0 %v251, 126
        %v611 = vpop.permute.xlu0 %610
        %vm612 = vcmask 1031168
        %v613 = vsel %vm612, %v607, %v609
        %v614 = vsel %vm612, %v609, %v611
        %v616 = vsel %vm273, %v604, 0
        %v619 = vsel %vm273, %v605, 0
        %v621 = vsel %vm280, %v613, 0
        %v623 = vsel %vm280, %v614, 0
        %v625 = vsel %vm280, %v611, 0
        %627 = vmatprep.subr.mxu0 %v623
        %628 = vmatpush1.msra.mxu0 %v621
        %629 = vmatprep.subr.mxu0 0.0
        %630 = vmatpush1.msra.mxu0 0.0
        %631 = vmatprep.subr.mxu0 0.0
        %632 = vmatpush1.msra.mxu0 0.0
        %633 = vmatprep.subr.mxu0 0.0
        %634 = vmatpush1.msra.mxu0 0.0
        %635 = vmatprep.subr.mxu0 0.0
        %636 = vmatpush1.msra.mxu0 0.0
        %637 = vmatprep.subr.mxu0 0.0
        %638 = vmatpush1.msra.mxu0 0.0
        %639 = vmatprep.subr.mxu0 0.0
        %640 = vmatpush1.msra.mxu0 0.0
        %641 = vmatprep.subr.mxu0 0.0
        %642 = vmatpush1.msra.mxu0 0.0
        %643 = vmatprep.subr.mxu0 0.0
        %644 = vmatpush1.msra.mxu0 0.0
        %645 = vmatprep.subr.mxu0 0.0
        %646 = vmatpush1.msra.mxu0 0.0
        %647 = vmatprep.subr.mxu0 0.0
        %648 = vmatpush1.msra.mxu0 0.0
        %649 = vmatprep.subr.mxu0 0.0
        %650 = vmatpush1.msra.mxu0 0.0
        %651 = vmatprep.subr.mxu0 0.0
        %652 = vmatpush1.msra.mxu0 0.0
        %653 = vmatprep.subr.mxu0 0.0
        %654 = vmatpush1.msra.mxu0 0.0
        %655 = vmatprep.subr.mxu0 0.0
        %656 = vmatpush1.msra.mxu0 0.0
        %657 = vmatprep.subr.mxu0 0.0
        %658 = vmatpush1.msra.mxu0 0.0
        %659 = vmatprep.subr.mxu0 0.0
        %660 = vmatpush1.msra.mxu0 0.0
        %661 = vmatprep.subr.mxu0 0.0
        %662 = vmatpush1.msra.mxu0 0.0
        %663 = vmatprep.subr.mxu0 0.0
        %664 = vmatpush1.msra.mxu0 0.0
        %665 = vmatprep.subr.mxu0 0.0
        %666 = vmatpush1.msra.mxu0 0.0
        %667 = vmatprep.subr.mxu0 0.0
        %668 = vmatpush1.msra.mxu0 0.0
        %669 = vmatprep.subr.mxu0 0.0
        %670 = vmatpush1.msra.mxu0 0.0
        %671 = vmatprep.subr.mxu0 0.0
        %672 = vmatpush1.msra.mxu0 0.0
        %673 = vmatprep.subr.mxu0 0.0
        %674 = vmatpush1.msra.mxu0 0.0
        %675 = vmatprep.subr.mxu0 0.0
        %676 = vmatpush1.msra.mxu0 0.0
        %677 = vmatprep.subr.mxu0 0.0
        %678 = vmatpush1.msra.mxu0 0.0
        %679 = vmatprep.subr.mxu0 0.0
        %680 = vmatpush1.msra.mxu0 0.0
        %681 = vmatprep.subr.mxu0 0.0
        %682 = vmatpush1.msra.mxu0 0.0
        %683 = vmatprep.subr.mxu0 0.0
        %684 = vmatpush1.msra.mxu0 0.0
        %685 = vmatprep.subr.mxu0 0.0
        %686 = vmatpush1.msra.mxu0 0.0
        %687 = vmatprep.subr.mxu0 0.0
        %688 = vmatpush1.msra.mxu0 0.0
        %689 = vmatprep.subr.mxu0 0.0
        %690 = vmatpush1.msra.mxu0 0.0
        %691 = vmatprep.mubr.f32.mxu0 0.0
        %692 = vmatmul.mubr.f32.gmra.mrb[0].mxu0 %v616
        %v693 = vpop.f32.mrb[0].mxu0
        %v694 = vadd.f32 0.0, %v693
        %v695 = vpop.f32.mrb[0].mxu0
        %v696 = vadd.f32 0.0, %v695
        %697 = vmatprep.mubr.f32.mxu0 0.0
        %698 = vmatmul.mubr.f32.gmra.mrb[0].mxu0 %v619
        %v699 = vpop.f32.mrb[0].mxu0
        %v700 = vadd.f32 0.0, %v699
        %v701 = vpop.f32.mrb[0].mxu0
        %v702 = vadd.f32 0.0, %v701
        %703 = vdwg.mxu0
        %704 = vmatprep.subr.mxu0 0.0
        %705 = vmatpush1.msra.mxu0 %v625
        %706 = vmatprep.subr.mxu0 0.0
        %707 = vmatpush1.msra.mxu0 0.0
        %708 = vmatprep.subr.mxu0 0.0
        %709 = vmatpush1.msra.mxu0 0.0
        %710 = vmatprep.subr.mxu0 0.0
        %711 = vmatpush1.msra.mxu0 0.0
        %712 = vmatprep.subr.mxu0 0.0
        %713 = vmatpush1.msra.mxu0 0.0
        %714 = vmatprep.subr.mxu0 0.0
        %715 = vmatpush1.msra.mxu0 0.0
        %716 = vmatprep.subr.mxu0 0.0
        %717 = vmatpush1.msra.mxu0 0.0
        %718 = vmatprep.subr.mxu0 0.0
        %719 = vmatpush1.msra.mxu0 0.0
        %720 = vmatprep.subr.mxu0 0.0
        %721 = vmatpush1.msra.mxu0 0.0
        %722 = vmatprep.subr.mxu0 0.0
        %723 = vmatpush1.msra.mxu0 0.0
        %724 = vmatprep.subr.mxu0 0.0
        %725 = vmatpush1.msra.mxu0 0.0
        %726 = vmatprep.subr.mxu0 0.0
        %727 = vmatpush1.msra.mxu0 0.0
        %728 = vmatprep.subr.mxu0 0.0
        %729 = vmatpush1.msra.mxu0 0.0
        %730 = vmatprep.subr.mxu0 0.0
        %731 = vmatpush1.msra.mxu0 0.0
        %732 = vmatprep.subr.mxu0 0.0
        %733 = vmatpush1.msra.mxu0 0.0
        %734 = vmatprep.subr.mxu0 0.0
        %735 = vmatpush1.msra.mxu0 0.0
        %736 = vmatprep.subr.mxu0 0.0
        %737 = vmatpush1.msra.mxu0 0.0
        %738 = vmatprep.subr.mxu0 0.0
        %739 = vmatpush1.msra.mxu0 0.0
        %740 = vmatprep.subr.mxu0 0.0
        %741 = vmatpush1.msra.mxu0 0.0
        %742 = vmatprep.subr.mxu0 0.0
        %743 = vmatpush1.msra.mxu0 0.0
        %744 = vmatprep.subr.mxu0 0.0
        %745 = vmatpush1.msra.mxu0 0.0
        %746 = vmatprep.subr.mxu0 0.0
        %747 = vmatpush1.msra.mxu0 0.0
        %748 = vmatprep.subr.mxu0 0.0
        %749 = vmatpush1.msra.mxu0 0.0
        %750 = vmatprep.subr.mxu0 0.0
        %751 = vmatpush1.msra.mxu0 0.0
        %752 = vmatprep.subr.mxu0 0.0
        %753 = vmatpush1.msra.mxu0 0.0
        %754 = vmatprep.subr.mxu0 0.0
        %755 = vmatpush1.msra.mxu0 0.0
        %756 = vmatprep.subr.mxu0 0.0
        %757 = vmatpush1.msra.mxu0 0.0
        %758 = vmatprep.subr.mxu0 0.0
        %759 = vmatpush1.msra.mxu0 0.0
        %760 = vmatprep.subr.mxu0 0.0
        %761 = vmatpush1.msra.mxu0 0.0
        %762 = vmatprep.subr.mxu0 0.0
        %763 = vmatpush1.msra.mxu0 0.0
        %764 = vmatprep.subr.mxu0 0.0
        %765 = vmatpush1.msra.mxu0 0.0
        %766 = vmatprep.subr.mxu0 0.0
        %767 = vmatpush1.msra.mxu0 0.0
        %768 = vmatprep.mubr.f32.mxu0 0.0
        %769 = vmatmul.mubr.f32.gmra.mrb[0].mxu0 %v616
        %v770 = vpop.f32.mrb[0].mxu0
        %v771 = vadd.f32 0.0, %v770
        %v772 = vpop.f32.mrb[0].mxu0
        %773 = vmatprep.mubr.f32.mxu0 0.0
        %774 = vmatmul.mubr.f32.gmra.mrb[0].mxu0 %v619
        %v775 = vpop.f32.mrb[0].mxu0
        %v776 = vadd.f32 0.0, %v775
        %v777 = vpop.f32.mrb[0].mxu0
        %778 = vdwg.mxu0
        %v779 = vadd.f32 %v518, %v694
        %v780 = vadd.f32 %v520, %v696
        %v781 = vadd.f32 %v595, %v771
        %v782 = vadd.f32 %v524, %v700
        %v783 = vadd.f32 %v526, %v702
        %v784 = vadd.f32 %v600, %v776
        %s785 = scalar_lea.vmem %s1, 48
        %v786 = vld [vmem:[%s785] sm:$0xff]
        %v787 = vld [vmem:[%s785 + $0x8] sm:$0xff]
        %788 = vrot.lane.b32.xlu0 %v250, 110
        %v789 = vpop.permute.xlu0 %788
        %790 = vrot.lane.b32.xlu0 %v263, 110
        %v791 = vpop.permute.xlu0 %790
        %792 = vrot.lane.b32.xlu0 %v251, 110
        %v793 = vpop.permute.xlu0 %792
        %vm794 = vcmask 900096
        %v795 = vsel %vm794, %v789, %v791
        %v796 = vsel %vm794, %v791, %v793
        %v798 = vsel %vm273, %v786, 0
        %v801 = vsel %vm273, %v787, 0
        %v803 = vsel %vm280, %v795, 0
        %v805 = vsel %vm280, %v796, 0
        %v807 = vsel %vm280, %v793, 0
        %809 = vmatprep.subr.mxu0 %v805
        %810 = vmatpush1.msra.mxu0 %v803
        %811 = vmatprep.subr.mxu0 0.0
        %812 = vmatpush1.msra.mxu0 0.0
        %813 = vmatprep.subr.mxu0 0.0
        %814 = vmatpush1.msra.mxu0 0.0
        %815 = vmatprep.subr.mxu0 0.0
        %816 = vmatpush1.msra.mxu0 0.0
        %817 = vmatprep.subr.mxu0 0.0
        %818 = vmatpush1.msra.mxu0 0.0
        %819 = vmatprep.subr.mxu0 0.0
        %820 = vmatpush1.msra.mxu0 0.0
        %821 = vmatprep.subr.mxu0 0.0
        %822 = vmatpush1.msra.mxu0 0.0
        %823 = vmatprep.subr.mxu0 0.0
        %824 = vmatpush1.msra.mxu0 0.0
        %825 = vmatprep.subr.mxu0 0.0
        %826 = vmatpush1.msra.mxu0 0.0
        %827 = vmatprep.subr.mxu0 0.0
        %828 = vmatpush1.msra.mxu0 0.0
        %829 = vmatprep.subr.mxu0 0.0
        %830 = vmatpush1.msra.mxu0 0.0
        %831 = vmatprep.subr.mxu0 0.0
        %832 = vmatpush1.msra.mxu0 0.0
        %833 = vmatprep.subr.mxu0 0.0
        %834 = vmatpush1.msra.mxu0 0.0
        %835 = vmatprep.subr.mxu0 0.0
        %836 = vmatpush1.msra.mxu0 0.0
        %837 = vmatprep.subr.mxu0 0.0
        %838 = vmatpush1.msra.mxu0 0.0
        %839 = vmatprep.subr.mxu0 0.0
        %840 = vmatpush1.msra.mxu0 0.0
        %841 = vmatprep.subr.mxu0 0.0
        %842 = vmatpush1.msra.mxu0 0.0
        %843 = vmatprep.subr.mxu0 0.0
        %844 = vmatpush1.msra.mxu0 0.0
        %845 = vmatprep.subr.mxu0 0.0
        %846 = vmatpush1.msra.mxu0 0.0
        %847 = vmatprep.subr.mxu0 0.0
        %848 = vmatpush1.msra.mxu0 0.0
        %849 = vmatprep.subr.mxu0 0.0
        %850 = vmatpush1.msra.mxu0 0.0
        %851 = vmatprep.subr.mxu0 0.0
        %852 = vmatpush1.msra.mxu0 0.0
        %853 = vmatprep.subr.mxu0 0.0
        %854 = vmatpush1.msra.mxu0 0.0
        %855 = vmatprep.subr.mxu0 0.0
        %856 = vmatpush1.msra.mxu0 0.0
        %857 = vmatprep.subr.mxu0 0.0
        %858 = vmatpush1.msra.mxu0 0.0
        %859 = vmatprep.subr.mxu0 0.0
        %860 = vmatpush1.msra.mxu0 0.0
        %861 = vmatprep.subr.mxu0 0.0
        %862 = vmatpush1.msra.mxu0 0.0
        %863 = vmatprep.subr.mxu0 0.0
        %864 = vmatpush1.msra.mxu0 0.0
        %865 = vmatprep.subr.mxu0 0.0
        %866 = vmatpush1.msra.mxu0 0.0
        %867 = vmatprep.subr.mxu0 0.0
        %868 = vmatpush1.msra.mxu0 0.0
        %869 = vmatprep.subr.mxu0 0.0
        %870 = vmatpush1.msra.mxu0 0.0
        %871 = vmatprep.subr.mxu0 0.0
        %872 = vmatpush1.msra.mxu0 0.0
        %873 = vmatprep.mubr.f32.mxu0 0.0
        %874 = vmatmul.mubr.f32.gmra.mrb[0].mxu0 %v798
        %v875 = vpop.f32.mrb[0].mxu0
        %v876 = vadd.f32 0.0, %v875
        %v877 = vpop.f32.mrb[0].mxu0
        %v878 = vadd.f32 0.0, %v877
        %879 = vmatprep.mubr.f32.mxu0 0.0
        %880 = vmatmul.mubr.f32.gmra.mrb[0].mxu0 %v801
        %v881 = vpop.f32.mrb[0].mxu0
        %v882 = vadd.f32 0.0, %v881
        %v883 = vpop.f32.mrb[0].mxu0
        %v884 = vadd.f32 0.0, %v883
        %885 = vdwg.mxu0
        %886 = vmatprep.subr.mxu0 0.0
        %887 = vmatpush1.msra.mxu0 %v807
        %888 = vmatprep.subr.mxu0 0.0
        %889 = vmatpush1.msra.mxu0 0.0
        %890 = vmatprep.subr.mxu0 0.0
        %891 = vmatpush1.msra.mxu0 0.0
        %892 = vmatprep.subr.mxu0 0.0
        %893 = vmatpush1.msra.mxu0 0.0
        %894 = vmatprep.subr.mxu0 0.0
        %895 = vmatpush1.msra.mxu0 0.0
        %896 = vmatprep.subr.mxu0 0.0
        %897 = vmatpush1.msra.mxu0 0.0
        %898 = vmatprep.subr.mxu0 0.0
        %899 = vmatpush1.msra.mxu0 0.0
        %900 = vmatprep.subr.mxu0 0.0
        %901 = vmatpush1.msra.mxu0 0.0
        %902 = vmatprep.subr.mxu0 0.0
        %903 = vmatpush1.msra.mxu0 0.0
        %904 = vmatprep.subr.mxu0 0.0
        %905 = vmatpush1.msra.mxu0 0.0
        %906 = vmatprep.subr.mxu0 0.0
        %907 = vmatpush1.msra.mxu0 0.0
        %908 = vmatprep.subr.mxu0 0.0
        %909 = vmatpush1.msra.mxu0 0.0
        %910 = vmatprep.subr.mxu0 0.0
        %911 = vmatpush1.msra.mxu0 0.0
        %912 = vmatprep.subr.mxu0 0.0
        %913 = vmatpush1.msra.mxu0 0.0
        %914 = vmatprep.subr.mxu0 0.0
        %915 = vmatpush1.msra.mxu0 0.0
        %916 = vmatprep.subr.mxu0 0.0
        %917 = vmatpush1.msra.mxu0 0.0
        %918 = vmatprep.subr.mxu0 0.0
        %919 = vmatpush1.msra.mxu0 0.0
        %920 = vmatprep.subr.mxu0 0.0
        %921 = vmatpush1.msra.mxu0 0.0
        %922 = vmatprep.subr.mxu0 0.0
        %923 = vmatpush1.msra.mxu0 0.0
        %924 = vmatprep.subr.mxu0 0.0
        %925 = vmatpush1.msra.mxu0 0.0
        %926 = vmatprep.subr.mxu0 0.0
        %927 = vmatpush1.msra.mxu0 0.0
        %928 = vmatprep.subr.mxu0 0.0
        %929 = vmatpush1.msra.mxu0 0.0
        %930 = vmatprep.subr.mxu0 0.0
        %931 = vmatpush1.msra.mxu0 0.0
        %932 = vmatprep.subr.mxu0 0.0
        %933 = vmatpush1.msra.mxu0 0.0
        %934 = vmatprep.subr.mxu0 0.0
        %935 = vmatpush1.msra.mxu0 0.0
        %936 = vmatprep.subr.mxu0 0.0
        %937 = vmatpush1.msra.mxu0 0.0
        %938 = vmatprep.subr.mxu0 0.0
        %939 = vmatpush1.msra.mxu0 0.0
        %940 = vmatprep.subr.mxu0 0.0
        %941 = vmatpush1.msra.mxu0 0.0
        %942 = vmatprep.subr.mxu0 0.0
        %943 = vmatpush1.msra.mxu0 0.0
        %944 = vmatprep.subr.mxu0 0.0
        %945 = vmatpush1.msra.mxu0 0.0
        %946 = vmatprep.subr.mxu0 0.0
        %947 = vmatpush1.msra.mxu0 0.0
        %948 = vmatprep.subr.mxu0 0.0
        %949 = vmatpush1.msra.mxu0 0.0
        %950 = vmatprep.mubr.f32.mxu0 0.0
        %951 = vmatmul.mubr.f32.gmra.mrb[0].mxu0 %v798
        %v952 = vpop.f32.mrb[0].mxu0
        %v953 = vadd.f32 0.0, %v952
        %v954 = vpop.f32.mrb[0].mxu0
        %955 = vmatprep.mubr.f32.mxu0 0.0
        %956 = vmatmul.mubr.f32.gmra.mrb[0].mxu0 %v801
        %v957 = vpop.f32.mrb[0].mxu0
        %v958 = vadd.f32 0.0, %v957
        %v959 = vpop.f32.mrb[0].mxu0
        %960 = vdwg.mxu0
        %v961 = vadd.f32 %v779, %v876
        %v962 = vadd.f32 %v780, %v878
        %v963 = vadd.f32 %v781, %v953
        %v964 = vadd.f32 %v782, %v882
        %v965 = vadd.f32 %v783, %v884
        %v966 = vadd.f32 %v784, %v958
        %s967 = scalar_lea.vmem %s1, 64
        %v968 = vld [vmem:[%s967] sm:$0xff]
        %v969 = vld [vmem:[%s967 + $0x8] sm:$0xff]
        %970 = vrot.lane.b32.xlu0 %v250, 109
        %v971 = vpop.permute.xlu0 %970
        %972 = vrot.lane.b32.xlu0 %v263, 109
        %v973 = vpop.permute.xlu0 %972
        %974 = vrot.lane.b32.xlu0 %v251, 109
        %v975 = vpop.permute.xlu0 %974
        %vm976 = vcmask 891904
        %v977 = vsel %vm976, %v971, %v973
        %v978 = vsel %vm976, %v973, %v975
        %v980 = vsel %vm273, %v968, 0
        %v983 = vsel %vm273, %v969, 0
        %v985 = vsel %vm280, %v977, 0
        %v987 = vsel %vm280, %v978, 0
        %v989 = vsel %vm280, %v975, 0
        %991 = vmatprep.subr.mxu0 %v987
        %992 = vmatpush1.msra.mxu0 %v985
        %993 = vmatprep.subr.mxu0 0.0
        %994 = vmatpush1.msra.mxu0 0.0
        %995 = vmatprep.subr.mxu0 0.0
        %996 = vmatpush1.msra.mxu0 0.0
        %997 = vmatprep.subr.mxu0 0.0
        %998 = vmatpush1.msra.mxu0 0.0
        %999 = vmatprep.subr.mxu0 0.0
        %1000 = vmatpush1.msra.mxu0 0.0
        %1001 = vmatprep.subr.mxu0 0.0
        %1002 = vmatpush1.msra.mxu0 0.0
        %1003 = vmatprep.subr.mxu0 0.0
        %1004 = vmatpush1.msra.mxu0 0.0
        %1005 = vmatprep.subr.mxu0 0.0
        %1006 = vmatpush1.msra.mxu0 0.0
        %1007 = vmatprep.subr.mxu0 0.0
        %1008 = vmatpush1.msra.mxu0 0.0
        %1009 = vmatprep.subr.mxu0 0.0
        %1010 = vmatpush1.msra.mxu0 0.0
        %1011 = vmatprep.subr.mxu0 0.0
        %1012 = vmatpush1.msra.mxu0 0.0
        %1013 = vmatprep.subr.mxu0 0.0
        %1014 = vmatpush1.msra.mxu0 0.0
        %1015 = vmatprep.subr.mxu0 0.0
        %1016 = vmatpush1.msra.mxu0 0.0
        %1017 = vmatprep.subr.mxu0 0.0
        %1018 = vmatpush1.msra.mxu0 0.0
        %1019 = vmatprep.subr.mxu0 0.0
        %1020 = vmatpush1.msra.mxu0 0.0
        %1021 = vmatprep.subr.mxu0 0.0
        %1022 = vmatpush1.msra.mxu0 0.0
        %1023 = vmatprep.subr.mxu0 0.0
        %1024 = vmatpush1.msra.mxu0 0.0
        %1025 = vmatprep.subr.mxu0 0.0
        %1026 = vmatpush1.msra.mxu0 0.0
        %1027 = vmatprep.subr.mxu0 0.0
        %1028 = vmatpush1.msra.mxu0 0.0
        %1029 = vmatprep.subr.mxu0 0.0
        %1030 = vmatpush1.msra.mxu0 0.0
        %1031 = vmatprep.subr.mxu0 0.0
        %1032 = vmatpush1.msra.mxu0 0.0
        %1033 = vmatprep.subr.mxu0 0.0
        %1034 = vmatpush1.msra.mxu0 0.0
        %1035 = vmatprep.subr.mxu0 0.0
        %1036 = vmatpush1.msra.mxu0 0.0
        %1037 = vmatprep.subr.mxu0 0.0
        %1038 = vmatpush1.msra.mxu0 0.0
        %1039 = vmatprep.subr.mxu0 0.0
        %1040 = vmatpush1.msra.mxu0 0.0
        %1041 = vmatprep.subr.mxu0 0.0
        %1042 = vmatpush1.msra.mxu0 0.0
        %1043 = vmatprep.subr.mxu0 0.0
        %1044 = vmatpush1.msra.mxu0 0.0
        %1045 = vmatprep.subr.mxu0 0.0
        %1046 = vmatpush1.msra.mxu0 0.0
        %1047 = vmatprep.subr.mxu0 0.0
        %1048 = vmatpush1.msra.mxu0 0.0
        %1049 = vmatprep.subr.mxu0 0.0
        %1050 = vmatpush1.msra.mxu0 0.0
        %1051 = vmatprep.subr.mxu0 0.0
        %1052 = vmatpush1.msra.mxu0 0.0
        %1053 = vmatprep.subr.mxu0 0.0
        %1054 = vmatpush1.msra.mxu0 0.0
        %1055 = vmatprep.mubr.f32.mxu0 0.0
        %1056 = vmatmul.mubr.f32.gmra.mrb[0].mxu0 %v980
        %v1057 = vpop.f32.mrb[0].mxu0
        %v1058 = vadd.f32 0.0, %v1057
        %v1059 = vpop.f32.mrb[0].mxu0
        %v1060 = vadd.f32 0.0, %v1059
        %1061 = vmatprep.mubr.f32.mxu0 0.0
        %1062 = vmatmul.mubr.f32.gmra.mrb[0].mxu0 %v983
        %v1063 = vpop.f32.mrb[0].mxu0
        %v1064 = vadd.f32 0.0, %v1063
        %v1065 = vpop.f32.mrb[0].mxu0
        %v1066 = vadd.f32 0.0, %v1065
        %1067 = vdwg.mxu0
        %1068 = vmatprep.subr.mxu0 0.0
        %1069 = vmatpush1.msra.mxu0 %v989
        %1070 = vmatprep.subr.mxu0 0.0
        %1071 = vmatpush1.msra.mxu0 0.0
        %1072 = vmatprep.subr.mxu0 0.0
        %1073 = vmatpush1.msra.mxu0 0.0
        %1074 = vmatprep.subr.mxu0 0.0
        %1075 = vmatpush1.msra.mxu0 0.0
        %1076 = vmatprep.subr.mxu0 0.0
        %1077 = vmatpush1.msra.mxu0 0.0
        %1078 = vmatprep.subr.mxu0 0.0
        %1079 = vmatpush1.msra.mxu0 0.0
        %1080 = vmatprep.subr.mxu0 0.0
        %1081 = vmatpush1.msra.mxu0 0.0
        %1082 = vmatprep.subr.mxu0 0.0
        %1083 = vmatpush1.msra.mxu0 0.0
        %1084 = vmatprep.subr.mxu0 0.0
        %1085 = vmatpush1.msra.mxu0 0.0
        %1086 = vmatprep.subr.mxu0 0.0
        %1087 = vmatpush1.msra.mxu0 0.0
        %1088 = vmatprep.subr.mxu0 0.0
        %1089 = vmatpush1.msra.mxu0 0.0
        %1090 = vmatprep.subr.mxu0 0.0
        %1091 = vmatpush1.msra.mxu0 0.0
        %1092 = vmatprep.subr.mxu0 0.0
        %1093 = vmatpush1.msra.mxu0 0.0
        %1094 = vmatprep.subr.mxu0 0.0
        %1095 = vmatpush1.msra.mxu0 0.0
        %1096 = vmatprep.subr.mxu0 0.0
        %1097 = vmatpush1.msra.mxu0 0.0
        %1098 = vmatprep.subr.mxu0 0.0
        %1099 = vmatpush1.msra.mxu0 0.0
        %1100 = vmatprep.subr.mxu0 0.0
        %1101 = vmatpush1.msra.mxu0 0.0
        %1102 = vmatprep.subr.mxu0 0.0
        %1103 = vmatpush1.msra.mxu0 0.0
        %1104 = vmatprep.subr.mxu0 0.0
        %1105 = vmatpush1.msra.mxu0 0.0
        %1106 = vmatprep.subr.mxu0 0.0
        %1107 = vmatpush1.msra.mxu0 0.0
        %1108 = vmatprep.subr.mxu0 0.0
        %1109 = vmatpush1.msra.mxu0 0.0
        %1110 = vmatprep.subr.mxu0 0.0
        %1111 = vmatpush1.msra.mxu0 0.0
        %1112 = vmatprep.subr.mxu0 0.0
        %1113 = vmatpush1.msra.mxu0 0.0
        %1114 = vmatprep.subr.mxu0 0.0
        %1115 = vmatpush1.msra.mxu0 0.0
        %1116 = vmatprep.subr.mxu0 0.0
        %1117 = vmatpush1.msra.mxu0 0.0
        %1118 = vmatprep.subr.mxu0 0.0
        %1119 = vmatpush1.msra.mxu0 0.0
        %1120 = vmatprep.subr.mxu0 0.0
        %1121 = vmatpush1.msra.mxu0 0.0
        %1122 = vmatprep.subr.mxu0 0.0
        %1123 = vmatpush1.msra.mxu0 0.0
        %1124 = vmatprep.subr.mxu0 0.0
        %1125 = vmatpush1.msra.mxu0 0.0
        %1126 = vmatprep.subr.mxu0 0.0
        %1127 = vmatpush1.msra.mxu0 0.0
        %1128 = vmatprep.subr.mxu0 0.0
        %1129 = vmatpush1.msra.mxu0 0.0
        %1130 = vmatprep.subr.mxu0 0.0
        %1131 = vmatpush1.msra.mxu0 0.0
        %1132 = vmatprep.mubr.f32.mxu0 0.0
        %1133 = vmatmul.mubr.f32.gmra.mrb[0].mxu0 %v980
        %v1134 = vpop.f32.mrb[0].mxu0
        %v1135 = vadd.f32 0.0, %v1134
        %v1136 = vpop.f32.mrb[0].mxu0
        %1137 = vmatprep.mubr.f32.mxu0 0.0
        %1138 = vmatmul.mubr.f32.gmra.mrb[0].mxu0 %v983
        %v1139 = vpop.f32.mrb[0].mxu0
        %v1140 = vadd.f32 0.0, %v1139
        %v1141 = vpop.f32.mrb[0].mxu0
        %1142 = vdwg.mxu0
        %v1143 = vadd.f32 %v961, %v1058
        %v1144 = vadd.f32 %v962, %v1060
        %v1145 = vadd.f32 %v963, %v1135
        %v1146 = vadd.f32 %v964, %v1064
        %v1147 = vadd.f32 %v965, %v1066
        %v1148 = vadd.f32 %v966, %v1140
        %s1149 = scalar_lea.vmem %s1, 80
        %v1150 = vld [vmem:[%s1149] sm:$0xff]
        %v1151 = vld [vmem:[%s1149 + $0x8] sm:$0xff]
        %1152 = vrot.lane.b32.xlu0 %v250, 108
        %v1153 = vpop.permute.xlu0 %1152
        %1154 = vrot.lane.b32.xlu0 %v263, 108
        %v1155 = vpop.permute.xlu0 %1154
        %1156 = vrot.lane.b32.xlu0 %v251, 108
        %v1157 = vpop.permute.xlu0 %1156
        %vm1158 = vcmask 883712
        %v1159 = vsel %vm1158, %v1153, %v1155
        %v1160 = vsel %vm1158, %v1155, %v1157
        %v1162 = vsel %vm273, %v1150, 0
        %v1165 = vsel %vm273, %v1151, 0
        %v1167 = vsel %vm280, %v1159, 0
        %v1169 = vsel %vm280, %v1160, 0
        %v1171 = vsel %vm280, %v1157, 0
        %1173 = vmatprep.subr.mxu0 %v1169
        %1174 = vmatpush1.msra.mxu0 %v1167
        %1175 = vmatprep.subr.mxu0 0.0
        %1176 = vmatpush1.msra.mxu0 0.0
        %1177 = vmatprep.subr.mxu0 0.0
        %1178 = vmatpush1.msra.mxu0 0.0
        %1179 = vmatprep.subr.mxu0 0.0
        %1180 = vmatpush1.msra.mxu0 0.0
        %1181 = vmatprep.subr.mxu0 0.0
        %1182 = vmatpush1.msra.mxu0 0.0
        %1183 = vmatprep.subr.mxu0 0.0
        %1184 = vmatpush1.msra.mxu0 0.0
        %1185 = vmatprep.subr.mxu0 0.0
        %1186 = vmatpush1.msra.mxu0 0.0
        %1187 = vmatprep.subr.mxu0 0.0
        %1188 = vmatpush1.msra.mxu0 0.0
        %1189 = vmatprep.subr.mxu0 0.0
        %1190 = vmatpush1.msra.mxu0 0.0
        %1191 = vmatprep.subr.mxu0 0.0
        %1192 = vmatpush1.msra.mxu0 0.0
        %1193 = vmatprep.subr.mxu0 0.0
        %1194 = vmatpush1.msra.mxu0 0.0
        %1195 = vmatprep.subr.mxu0 0.0
        %1196 = vmatpush1.msra.mxu0 0.0
        %1197 = vmatprep.subr.mxu0 0.0
        %1198 = vmatpush1.msra.mxu0 0.0
        %1199 = vmatprep.subr.mxu0 0.0
        %1200 = vmatpush1.msra.mxu0 0.0
        %1201 = vmatprep.subr.mxu0 0.0
        %1202 = vmatpush1.msra.mxu0 0.0
        %1203 = vmatprep.subr.mxu0 0.0
        %1204 = vmatpush1.msra.mxu0 0.0
        %1205 = vmatprep.subr.mxu0 0.0
        %1206 = vmatpush1.msra.mxu0 0.0
        %1207 = vmatprep.subr.mxu0 0.0
        %1208 = vmatpush1.msra.mxu0 0.0
        %1209 = vmatprep.subr.mxu0 0.0
        %1210 = vmatpush1.msra.mxu0 0.0
        %1211 = vmatprep.subr.mxu0 0.0
        %1212 = vmatpush1.msra.mxu0 0.0
        %1213 = vmatprep.subr.mxu0 0.0
        %1214 = vmatpush1.msra.mxu0 0.0
        %1215 = vmatprep.subr.mxu0 0.0
        %1216 = vmatpush1.msra.mxu0 0.0
        %1217 = vmatprep.subr.mxu0 0.0
        %1218 = vmatpush1.msra.mxu0 0.0
        %1219 = vmatprep.subr.mxu0 0.0
        %1220 = vmatpush1.msra.mxu0 0.0
        %1221 = vmatprep.subr.mxu0 0.0
        %1222 = vmatpush1.msra.mxu0 0.0
        %1223 = vmatprep.subr.mxu0 0.0
        %1224 = vmatpush1.msra.mxu0 0.0
        %1225 = vmatprep.subr.mxu0 0.0
        %1226 = vmatpush1.msra.mxu0 0.0
        %1227 = vmatprep.subr.mxu0 0.0
        %1228 = vmatpush1.msra.mxu0 0.0
        %1229 = vmatprep.subr.mxu0 0.0
        %1230 = vmatpush1.msra.mxu0 0.0
        %1231 = vmatprep.subr.mxu0 0.0
        %1232 = vmatpush1.msra.mxu0 0.0
        %1233 = vmatprep.subr.mxu0 0.0
        %1234 = vmatpush1.msra.mxu0 0.0
        %1235 = vmatprep.subr.mxu0 0.0
        %1236 = vmatpush1.msra.mxu0 0.0
        %1237 = vmatprep.mubr.f32.mxu0 0.0
        %1238 = vmatmul.mubr.f32.gmra.mrb[0].mxu0 %v1162
        %v1239 = vpop.f32.mrb[0].mxu0
        %v1240 = vadd.f32 0.0, %v1239
        %v1241 = vpop.f32.mrb[0].mxu0
        %v1242 = vadd.f32 0.0, %v1241
        %1243 = vmatprep.mubr.f32.mxu0 0.0
        %1244 = vmatmul.mubr.f32.gmra.mrb[0].mxu0 %v1165
        %v1245 = vpop.f32.mrb[0].mxu0
        %v1246 = vadd.f32 0.0, %v1245
        %v1247 = vpop.f32.mrb[0].mxu0
        %v1248 = vadd.f32 0.0, %v1247
        %1249 = vdwg.mxu0
        %1250 = vmatprep.subr.mxu0 0.0
        %1251 = vmatpush1.msra.mxu0 %v1171
        %1252 = vmatprep.subr.mxu0 0.0
        %1253 = vmatpush1.msra.mxu0 0.0
        %1254 = vmatprep.subr.mxu0 0.0
        %1255 = vmatpush1.msra.mxu0 0.0
        %1256 = vmatprep.subr.mxu0 0.0
        %1257 = vmatpush1.msra.mxu0 0.0
        %1258 = vmatprep.subr.mxu0 0.0
        %1259 = vmatpush1.msra.mxu0 0.0
        %1260 = vmatprep.subr.mxu0 0.0
        %1261 = vmatpush1.msra.mxu0 0.0
        %1262 = vmatprep.subr.mxu0 0.0
        %1263 = vmatpush1.msra.mxu0 0.0
        %1264 = vmatprep.subr.mxu0 0.0
        %1265 = vmatpush1.msra.mxu0 0.0
        %1266 = vmatprep.subr.mxu0 0.0
        %1267 = vmatpush1.msra.mxu0 0.0
        %1268 = vmatprep.subr.mxu0 0.0
        %1269 = vmatpush1.msra.mxu0 0.0
        %1270 = vmatprep.subr.mxu0 0.0
        %1271 = vmatpush1.msra.mxu0 0.0
        %1272 = vmatprep.subr.mxu0 0.0
        %1273 = vmatpush1.msra.mxu0 0.0
        %1274 = vmatprep.subr.mxu0 0.0
        %1275 = vmatpush1.msra.mxu0 0.0
        %1276 = vmatprep.subr.mxu0 0.0
        %1277 = vmatpush1.msra.mxu0 0.0
        %1278 = vmatprep.subr.mxu0 0.0
        %1279 = vmatpush1.msra.mxu0 0.0
        %1280 = vmatprep.subr.mxu0 0.0
        %1281 = vmatpush1.msra.mxu0 0.0
        %1282 = vmatprep.subr.mxu0 0.0
        %1283 = vmatpush1.msra.mxu0 0.0
        %1284 = vmatprep.subr.mxu0 0.0
        %1285 = vmatpush1.msra.mxu0 0.0
        %1286 = vmatprep.subr.mxu0 0.0
        %1287 = vmatpush1.msra.mxu0 0.0
        %1288 = vmatprep.subr.mxu0 0.0
        %1289 = vmatpush1.msra.mxu0 0.0
        %1290 = vmatprep.subr.mxu0 0.0
        %1291 = vmatpush1.msra.mxu0 0.0
        %1292 = vmatprep.subr.mxu0 0.0
        %1293 = vmatpush1.msra.mxu0 0.0
        %1294 = vmatprep.subr.mxu0 0.0
        %1295 = vmatpush1.msra.mxu0 0.0
        %1296 = vmatprep.subr.mxu0 0.0
        %1297 = vmatpush1.msra.mxu0 0.0
        %1298 = vmatprep.subr.mxu0 0.0
        %1299 = vmatpush1.msra.mxu0 0.0
        %1300 = vmatprep.subr.mxu0 0.0
        %1301 = vmatpush1.msra.mxu0 0.0
        %1302 = vmatprep.subr.mxu0 0.0
        %1303 = vmatpush1.msra.mxu0 0.0
        %1304 = vmatprep.subr.mxu0 0.0
        %1305 = vmatpush1.msra.mxu0 0.0
        %1306 = vmatprep.subr.mxu0 0.0
        %1307 = vmatpush1.msra.mxu0 0.0
        %1308 = vmatprep.subr.mxu0 0.0
        %1309 = vmatpush1.msra.mxu0 0.0
        %1310 = vmatprep.subr.mxu0 0.0
        %1311 = vmatpush1.msra.mxu0 0.0
        %1312 = vmatprep.subr.mxu0 0.0
        %1313 = vmatpush1.msra.mxu0 0.0
        %1314 = vmatprep.mubr.f32.mxu0 0.0
        %1315 = vmatmul.mubr.f32.gmra.mrb[0].mxu0 %v1162
        %v1316 = vpop.f32.mrb[0].mxu0
        %v1317 = vadd.f32 0.0, %v1316
        %v1318 = vpop.f32.mrb[0].mxu0
        %1319 = vmatprep.mubr.f32.mxu0 0.0
        %1320 = vmatmul.mubr.f32.gmra.mrb[0].mxu0 %v1165
        %v1321 = vpop.f32.mrb[0].mxu0
        %v1322 = vadd.f32 0.0, %v1321
        %v1323 = vpop.f32.mrb[0].mxu0
        %1324 = vdwg.mxu0
        %v1325 = vadd.f32 %v1143, %v1240
        %v1326 = vadd.f32 %v1144, %v1242
        %v1327 = vadd.f32 %v1145, %v1317
        %v1328 = vadd.f32 %v1146, %v1246
        %v1329 = vadd.f32 %v1147, %v1248
        %v1330 = vadd.f32 %v1148, %v1322
        %s1331 = scalar_lea.vmem %s1, 96
        %v1332 = vld [vmem:[%s1331] sm:$0xff]
        %v1333 = vld [vmem:[%s1331 + $0x8] sm:$0xff]
        %1334 = vrot.lane.b32.xlu0 %v250, 92
        %v1335 = vpop.permute.xlu0 %1334
        %1336 = vrot.lane.b32.xlu0 %v263, 92
        %v1337 = vpop.permute.xlu0 %1336
        %1338 = vrot.lane.b32.xlu0 %v251, 92
        %v1339 = vpop.permute.xlu0 %1338
        %vm1340 = vcmask 752640
        %v1341 = vsel %vm1340, %v1335, %v1337
        %v1342 = vsel %vm1340, %v1337, %v1339
        %v1344 = vsel %vm273, %v1332, 0
        %v1347 = vsel %vm273, %v1333, 0
        %v1349 = vsel %vm280, %v1341, 0
        %v1351 = vsel %vm280, %v1342, 0
        %v1353 = vsel %vm280, %v1339, 0
        %1355 = vmatprep.subr.mxu0 %v1351
        %1356 = vmatpush1.msra.mxu0 %v1349
        %1357 = vmatprep.subr.mxu0 0.0
        %1358 = vmatpush1.msra.mxu0 0.0
        %1359 = vmatprep.subr.mxu0 0.0
        %1360 = vmatpush1.msra.mxu0 0.0
        %1361 = vmatprep.subr.mxu0 0.0
        %1362 = vmatpush1.msra.mxu0 0.0
        %1363 = vmatprep.subr.mxu0 0.0
        %1364 = vmatpush1.msra.mxu0 0.0
        %1365 = vmatprep.subr.mxu0 0.0
        %1366 = vmatpush1.msra.mxu0 0.0
        %1367 = vmatprep.subr.mxu0 0.0
        %1368 = vmatpush1.msra.mxu0 0.0
        %1369 = vmatprep.subr.mxu0 0.0
        %1370 = vmatpush1.msra.mxu0 0.0
        %1371 = vmatprep.subr.mxu0 0.0
        %1372 = vmatpush1.msra.mxu0 0.0
        %1373 = vmatprep.subr.mxu0 0.0
        %1374 = vmatpush1.msra.mxu0 0.0
        %1375 = vmatprep.subr.mxu0 0.0
        %1376 = vmatpush1.msra.mxu0 0.0
        %1377 = vmatprep.subr.mxu0 0.0
        %1378 = vmatpush1.msra.mxu0 0.0
        %1379 = vmatprep.subr.mxu0 0.0
        %1380 = vmatpush1.msra.mxu0 0.0
        %1381 = vmatprep.subr.mxu0 0.0
        %1382 = vmatpush1.msra.mxu0 0.0
        %1383 = vmatprep.subr.mxu0 0.0
        %1384 = vmatpush1.msra.mxu0 0.0
        %1385 = vmatprep.subr.mxu0 0.0
        %1386 = vmatpush1.msra.mxu0 0.0
        %1387 = vmatprep.subr.mxu0 0.0
        %1388 = vmatpush1.msra.mxu0 0.0
        %1389 = vmatprep.subr.mxu0 0.0
        %1390 = vmatpush1.msra.mxu0 0.0
        %1391 = vmatprep.subr.mxu0 0.0
        %1392 = vmatpush1.msra.mxu0 0.0
        %1393 = vmatprep.subr.mxu0 0.0
        %1394 = vmatpush1.msra.mxu0 0.0
        %1395 = vmatprep.subr.mxu0 0.0
        %1396 = vmatpush1.msra.mxu0 0.0
        %1397 = vmatprep.subr.mxu0 0.0
        %1398 = vmatpush1.msra.mxu0 0.0
        %1399 = vmatprep.subr.mxu0 0.0
        %1400 = vmatpush1.msra.mxu0 0.0
        %1401 = vmatprep.subr.mxu0 0.0
        %1402 = vmatpush1.msra.mxu0 0.0
        %1403 = vmatprep.subr.mxu0 0.0
        %1404 = vmatpush1.msra.mxu0 0.0
        %1405 = vmatprep.subr.mxu0 0.0
        %1406 = vmatpush1.msra.mxu0 0.0
        %1407 = vmatprep.subr.mxu0 0.0
        %1408 = vmatpush1.msra.mxu0 0.0
        %1409 = vmatprep.subr.mxu0 0.0
        %1410 = vmatpush1.msra.mxu0 0.0
        %1411 = vmatprep.subr.mxu0 0.0
        %1412 = vmatpush1.msra.mxu0 0.0
        %1413 = vmatprep.subr.mxu0 0.0
        %1414 = vmatpush1.msra.mxu0 0.0
        %1415 = vmatprep.subr.mxu0 0.0
        %1416 = vmatpush1.msra.mxu0 0.0
        %1417 = vmatprep.subr.mxu0 0.0
        %1418 = vmatpush1.msra.mxu0 0.0
        %1419 = vmatprep.mubr.f32.mxu0 0.0
        %1420 = vmatmul.mubr.f32.gmra.mrb[0].mxu0 %v1344
        %v1421 = vpop.f32.mrb[0].mxu0
        %v1422 = vadd.f32 0.0, %v1421
        %v1423 = vpop.f32.mrb[0].mxu0
        %v1424 = vadd.f32 0.0, %v1423
        %1425 = vmatprep.mubr.f32.mxu0 0.0
        %1426 = vmatmul.mubr.f32.gmra.mrb[0].mxu0 %v1347
        %v1427 = vpop.f32.mrb[0].mxu0
        %v1428 = vadd.f32 0.0, %v1427
        %v1429 = vpop.f32.mrb[0].mxu0
        %v1430 = vadd.f32 0.0, %v1429
        %1431 = vdwg.mxu0
        %1432 = vmatprep.subr.mxu0 0.0
        %1433 = vmatpush1.msra.mxu0 %v1353
        %1434 = vmatprep.subr.mxu0 0.0
        %1435 = vmatpush1.msra.mxu0 0.0
        %1436 = vmatprep.subr.mxu0 0.0
        %1437 = vmatpush1.msra.mxu0 0.0
        %1438 = vmatprep.subr.mxu0 0.0
        %1439 = vmatpush1.msra.mxu0 0.0
        %1440 = vmatprep.subr.mxu0 0.0
        %1441 = vmatpush1.msra.mxu0 0.0
        %1442 = vmatprep.subr.mxu0 0.0
        %1443 = vmatpush1.msra.mxu0 0.0
        %1444 = vmatprep.subr.mxu0 0.0
        %1445 = vmatpush1.msra.mxu0 0.0
        %1446 = vmatprep.subr.mxu0 0.0
        %1447 = vmatpush1.msra.mxu0 0.0
        %1448 = vmatprep.subr.mxu0 0.0
        %1449 = vmatpush1.msra.mxu0 0.0
        %1450 = vmatprep.subr.mxu0 0.0
        %1451 = vmatpush1.msra.mxu0 0.0
        %1452 = vmatprep.subr.mxu0 0.0
        %1453 = vmatpush1.msra.mxu0 0.0
        %1454 = vmatprep.subr.mxu0 0.0
        %1455 = vmatpush1.msra.mxu0 0.0
        %1456 = vmatprep.subr.mxu0 0.0
        %1457 = vmatpush1.msra.mxu0 0.0
        %1458 = vmatprep.subr.mxu0 0.0
        %1459 = vmatpush1.msra.mxu0 0.0
        %1460 = vmatprep.subr.mxu0 0.0
        %1461 = vmatpush1.msra.mxu0 0.0
        %1462 = vmatprep.subr.mxu0 0.0
        %1463 = vmatpush1.msra.mxu0 0.0
        %1464 = vmatprep.subr.mxu0 0.0
        %1465 = vmatpush1.msra.mxu0 0.0
        %1466 = vmatprep.subr.mxu0 0.0
        %1467 = vmatpush1.msra.mxu0 0.0
        %1468 = vmatprep.subr.mxu0 0.0
        %1469 = vmatpush1.msra.mxu0 0.0
        %1470 = vmatprep.subr.mxu0 0.0
        %1471 = vmatpush1.msra.mxu0 0.0
        %1472 = vmatprep.subr.mxu0 0.0
        %1473 = vmatpush1.msra.mxu0 0.0
        %1474 = vmatprep.subr.mxu0 0.0
        %1475 = vmatpush1.msra.mxu0 0.0
        %1476 = vmatprep.subr.mxu0 0.0
        %1477 = vmatpush1.msra.mxu0 0.0
        %1478 = vmatprep.subr.mxu0 0.0
        %1479 = vmatpush1.msra.mxu0 0.0
        %1480 = vmatprep.subr.mxu0 0.0
        %1481 = vmatpush1.msra.mxu0 0.0
        %1482 = vmatprep.subr.mxu0 0.0
        %1483 = vmatpush1.msra.mxu0 0.0
        %1484 = vmatprep.subr.mxu0 0.0
        %1485 = vmatpush1.msra.mxu0 0.0
        %1486 = vmatprep.subr.mxu0 0.0
        %1487 = vmatpush1.msra.mxu0 0.0
        %1488 = vmatprep.subr.mxu0 0.0
        %1489 = vmatpush1.msra.mxu0 0.0
        %1490 = vmatprep.subr.mxu0 0.0
        %1491 = vmatpush1.msra.mxu0 0.0
        %1492 = vmatprep.subr.mxu0 0.0
        %1493 = vmatpush1.msra.mxu0 0.0
        %1494 = vmatprep.subr.mxu0 0.0
        %1495 = vmatpush1.msra.mxu0 0.0
        %1496 = vmatprep.mubr.f32.mxu0 0.0
        %1497 = vmatmul.mubr.f32.gmra.mrb[0].mxu0 %v1344
        %v1498 = vpop.f32.mrb[0].mxu0
        %v1499 = vadd.f32 0.0, %v1498
        %v1500 = vpop.f32.mrb[0].mxu0
        %1501 = vmatprep.mubr.f32.mxu0 0.0
        %1502 = vmatmul.mubr.f32.gmra.mrb[0].mxu0 %v1347
        %v1503 = vpop.f32.mrb[0].mxu0
        %v1504 = vadd.f32 0.0, %v1503
        %v1505 = vpop.f32.mrb[0].mxu0
        %1506 = vdwg.mxu0
        %v1507 = vadd.f32 %v1325, %v1422
        %v1508 = vadd.f32 %v1326, %v1424
        %v1509 = vadd.f32 %v1327, %v1499
        %v1510 = vadd.f32 %v1328, %v1428
        %v1511 = vadd.f32 %v1329, %v1430
        %v1512 = vadd.f32 %v1330, %v1504
        %s1513 = scalar_lea.vmem %s1, 112
        %v1514 = vld [vmem:[%s1513] sm:$0xff]
        %v1515 = vld [vmem:[%s1513 + $0x8] sm:$0xff]
        %1516 = vrot.lane.b32.xlu0 %v250, 91
        %v1517 = vpop.permute.xlu0 %1516
        %1518 = vrot.lane.b32.xlu0 %v263, 91
        %v1519 = vpop.permute.xlu0 %1518
        %1520 = vrot.lane.b32.xlu0 %v251, 91
        %v1521 = vpop.permute.xlu0 %1520
        %vm1522 = vcmask 744448
        %v1523 = vsel %vm1522, %v1517, %v1519
        %v1524 = vsel %vm1522, %v1519, %v1521
        %v1526 = vsel %vm273, %v1514, 0
        %v1529 = vsel %vm273, %v1515, 0
        %v1531 = vsel %vm280, %v1523, 0
        %v1533 = vsel %vm280, %v1524, 0
        %v1535 = vsel %vm280, %v1521, 0
        %1537 = vmatprep.subr.mxu0 %v1533
        %1538 = vmatpush1.msra.mxu0 %v1531
        %1539 = vmatprep.subr.mxu0 0.0
        %1540 = vmatpush1.msra.mxu0 0.0
        %1541 = vmatprep.subr.mxu0 0.0
        %1542 = vmatpush1.msra.mxu0 0.0
        %1543 = vmatprep.subr.mxu0 0.0
        %1544 = vmatpush1.msra.mxu0 0.0
        %1545 = vmatprep.subr.mxu0 0.0
        %1546 = vmatpush1.msra.mxu0 0.0
        %1547 = vmatprep.subr.mxu0 0.0
        %1548 = vmatpush1.msra.mxu0 0.0
        %1549 = vmatprep.subr.mxu0 0.0
        %1550 = vmatpush1.msra.mxu0 0.0
        %1551 = vmatprep.subr.mxu0 0.0
        %1552 = vmatpush1.msra.mxu0 0.0
        %1553 = vmatprep.subr.mxu0 0.0
        %1554 = vmatpush1.msra.mxu0 0.0
        %1555 = vmatprep.subr.mxu0 0.0
        %1556 = vmatpush1.msra.mxu0 0.0
        %1557 = vmatprep.subr.mxu0 0.0
        %1558 = vmatpush1.msra.mxu0 0.0
        %1559 = vmatprep.subr.mxu0 0.0
        %1560 = vmatpush1.msra.mxu0 0.0
        %1561 = vmatprep.subr.mxu0 0.0
        %1562 = vmatpush1.msra.mxu0 0.0
        %1563 = vmatprep.subr.mxu0 0.0
        %1564 = vmatpush1.msra.mxu0 0.0
        %1565 = vmatprep.subr.mxu0 0.0
        %1566 = vmatpush1.msra.mxu0 0.0
        %1567 = vmatprep.subr.mxu0 0.0
        %1568 = vmatpush1.msra.mxu0 0.0
        %1569 = vmatprep.subr.mxu0 0.0
        %1570 = vmatpush1.msra.mxu0 0.0
        %1571 = vmatprep.subr.mxu0 0.0
        %1572 = vmatpush1.msra.mxu0 0.0
        %1573 = vmatprep.subr.mxu0 0.0
        %1574 = vmatpush1.msra.mxu0 0.0
        %1575 = vmatprep.subr.mxu0 0.0
        %1576 = vmatpush1.msra.mxu0 0.0
        %1577 = vmatprep.subr.mxu0 0.0
        %1578 = vmatpush1.msra.mxu0 0.0
        %1579 = vmatprep.subr.mxu0 0.0
        %1580 = vmatpush1.msra.mxu0 0.0
        %1581 = vmatprep.subr.mxu0 0.0
        %1582 = vmatpush1.msra.mxu0 0.0
        %1583 = vmatprep.subr.mxu0 0.0
        %1584 = vmatpush1.msra.mxu0 0.0
        %1585 = vmatprep.subr.mxu0 0.0
        %1586 = vmatpush1.msra.mxu0 0.0
        %1587 = vmatprep.subr.mxu0 0.0
        %1588 = vmatpush1.msra.mxu0 0.0
        %1589 = vmatprep.subr.mxu0 0.0
        %1590 = vmatpush1.msra.mxu0 0.0
        %1591 = vmatprep.subr.mxu0 0.0
        %1592 = vmatpush1.msra.mxu0 0.0
        %1593 = vmatprep.subr.mxu0 0.0
        %1594 = vmatpush1.msra.mxu0 0.0
        %1595 = vmatprep.subr.mxu0 0.0
        %1596 = vmatpush1.msra.mxu0 0.0
        %1597 = vmatprep.subr.mxu0 0.0
        %1598 = vmatpush1.msra.mxu0 0.0
        %1599 = vmatprep.subr.mxu0 0.0
        %1600 = vmatpush1.msra.mxu0 0.0
        %1601 = vmatprep.mubr.f32.mxu0 0.0
        %1602 = vmatmul.mubr.f32.gmra.mrb[0].mxu0 %v1526
        %v1603 = vpop.f32.mrb[0].mxu0
        %v1604 = vadd.f32 0.0, %v1603
        %v1605 = vpop.f32.mrb[0].mxu0
        %v1606 = vadd.f32 0.0, %v1605
        %1607 = vmatprep.mubr.f32.mxu0 0.0
        %1608 = vmatmul.mubr.f32.gmra.mrb[0].mxu0 %v1529
        %v1609 = vpop.f32.mrb[0].mxu0
        %v1610 = vadd.f32 0.0, %v1609
        %v1611 = vpop.f32.mrb[0].mxu0
        %v1612 = vadd.f32 0.0, %v1611
        %1613 = vdwg.mxu0
        %1614 = vmatprep.subr.mxu0 0.0
        %1615 = vmatpush1.msra.mxu0 %v1535
        %1616 = vmatprep.subr.mxu0 0.0
        %1617 = vmatpush1.msra.mxu0 0.0
        %1618 = vmatprep.subr.mxu0 0.0
        %1619 = vmatpush1.msra.mxu0 0.0
        %1620 = vmatprep.subr.mxu0 0.0
        %1621 = vmatpush1.msra.mxu0 0.0
        %1622 = vmatprep.subr.mxu0 0.0
        %1623 = vmatpush1.msra.mxu0 0.0
        %1624 = vmatprep.subr.mxu0 0.0
        %1625 = vmatpush1.msra.mxu0 0.0
        %1626 = vmatprep.subr.mxu0 0.0
        %1627 = vmatpush1.msra.mxu0 0.0
        %1628 = vmatprep.subr.mxu0 0.0
        %1629 = vmatpush1.msra.mxu0 0.0
        %1630 = vmatprep.subr.mxu0 0.0
        %1631 = vmatpush1.msra.mxu0 0.0
        %1632 = vmatprep.subr.mxu0 0.0
        %1633 = vmatpush1.msra.mxu0 0.0
        %1634 = vmatprep.subr.mxu0 0.0
        %1635 = vmatpush1.msra.mxu0 0.0
        %1636 = vmatprep.subr.mxu0 0.0
        %1637 = vmatpush1.msra.mxu0 0.0
        %1638 = vmatprep.subr.mxu0 0.0
        %1639 = vmatpush1.msra.mxu0 0.0
        %1640 = vmatprep.subr.mxu0 0.0
        %1641 = vmatpush1.msra.mxu0 0.0
        %1642 = vmatprep.subr.mxu0 0.0
        %1643 = vmatpush1.msra.mxu0 0.0
        %1644 = vmatprep.subr.mxu0 0.0
        %1645 = vmatpush1.msra.mxu0 0.0
        %1646 = vmatprep.subr.mxu0 0.0
        %1647 = vmatpush1.msra.mxu0 0.0
        %1648 = vmatprep.subr.mxu0 0.0
        %1649 = vmatpush1.msra.mxu0 0.0
        %1650 = vmatprep.subr.mxu0 0.0
        %1651 = vmatpush1.msra.mxu0 0.0
        %1652 = vmatprep.subr.mxu0 0.0
        %1653 = vmatpush1.msra.mxu0 0.0
        %1654 = vmatprep.subr.mxu0 0.0
        %1655 = vmatpush1.msra.mxu0 0.0
        %1656 = vmatprep.subr.mxu0 0.0
        %1657 = vmatpush1.msra.mxu0 0.0
        %1658 = vmatprep.subr.mxu0 0.0
        %1659 = vmatpush1.msra.mxu0 0.0
        %1660 = vmatprep.subr.mxu0 0.0
        %1661 = vmatpush1.msra.mxu0 0.0
        %1662 = vmatprep.subr.mxu0 0.0
        %1663 = vmatpush1.msra.mxu0 0.0
        %1664 = vmatprep.subr.mxu0 0.0
        %1665 = vmatpush1.msra.mxu0 0.0
        %1666 = vmatprep.subr.mxu0 0.0
        %1667 = vmatpush1.msra.mxu0 0.0
        %1668 = vmatprep.subr.mxu0 0.0
        %1669 = vmatpush1.msra.mxu0 0.0
        %1670 = vmatprep.subr.mxu0 0.0
        %1671 = vmatpush1.msra.mxu0 0.0
        %1672 = vmatprep.subr.mxu0 0.0
        %1673 = vmatpush1.msra.mxu0 0.0
        %1674 = vmatprep.subr.mxu0 0.0
        %1675 = vmatpush1.msra.mxu0 0.0
        %1676 = vmatprep.subr.mxu0 0.0
        %1677 = vmatpush1.msra.mxu0 0.0
        %1678 = vmatprep.mubr.f32.mxu0 0.0
        %1679 = vmatmul.mubr.f32.gmra.mrb[0].mxu0 %v1526
        %v1680 = vpop.f32.mrb[0].mxu0
        %v1681 = vadd.f32 0.0, %v1680
        %v1682 = vpop.f32.mrb[0].mxu0
        %1683 = vmatprep.mubr.f32.mxu0 0.0
        %1684 = vmatmul.mubr.f32.gmra.mrb[0].mxu0 %v1529
        %v1685 = vpop.f32.mrb[0].mxu0
        %v1686 = vadd.f32 0.0, %v1685
        %v1687 = vpop.f32.mrb[0].mxu0
        %1688 = vdwg.mxu0
        %v1689 = vadd.f32 %v1507, %v1604
        %v1690 = vadd.f32 %v1508, %v1606
        %v1691 = vadd.f32 %v1509, %v1681
        %v1692 = vadd.f32 %v1510, %v1610
        %v1693 = vadd.f32 %v1511, %v1612
        %v1694 = vadd.f32 %v1512, %v1686
        %s1695 = scalar_lea.vmem %s1, 128
        %v1696 = vld [vmem:[%s1695] sm:$0xff]
        %v1697 = vld [vmem:[%s1695 + $0x8] sm:$0xff]
        %1698 = vrot.lane.b32.xlu0 %v250, 90
        %v1699 = vpop.permute.xlu0 %1698
        %1700 = vrot.lane.b32.xlu0 %v263, 90
        %v1701 = vpop.permute.xlu0 %1700
        %1702 = vrot.lane.b32.xlu0 %v251, 90
        %v1703 = vpop.permute.xlu0 %1702
        %vm1704 = vcmask 736256
        %v1705 = vsel %vm1704, %v1699, %v1701
        %v1706 = vsel %vm1704, %v1701, %v1703
        %v1708 = vsel %vm273, %v1696, 0
        %v1711 = vsel %vm273, %v1697, 0
        %v1713 = vsel %vm280, %v1705, 0
        %v1715 = vsel %vm280, %v1706, 0
        %v1717 = vsel %vm280, %v1703, 0
        %1719 = vmatprep.subr.mxu0 %v1715
        %1720 = vmatpush1.msra.mxu0 %v1713
        %1721 = vmatprep.subr.mxu0 0.0
        %1722 = vmatpush1.msra.mxu0 0.0
        %1723 = vmatprep.subr.mxu0 0.0
        %1724 = vmatpush1.msra.mxu0 0.0
        %1725 = vmatprep.subr.mxu0 0.0
        %1726 = vmatpush1.msra.mxu0 0.0
        %1727 = vmatprep.subr.mxu0 0.0
        %1728 = vmatpush1.msra.mxu0 0.0
        %1729 = vmatprep.subr.mxu0 0.0
        %1730 = vmatpush1.msra.mxu0 0.0
        %1731 = vmatprep.subr.mxu0 0.0
        %1732 = vmatpush1.msra.mxu0 0.0
        %1733 = vmatprep.subr.mxu0 0.0
        %1734 = vmatpush1.msra.mxu0 0.0
        %1735 = vmatprep.subr.mxu0 0.0
        %1736 = vmatpush1.msra.mxu0 0.0
        %1737 = vmatprep.subr.mxu0 0.0
        %1738 = vmatpush1.msra.mxu0 0.0
        %1739 = vmatprep.subr.mxu0 0.0
        %1740 = vmatpush1.msra.mxu0 0.0
        %1741 = vmatprep.subr.mxu0 0.0
        %1742 = vmatpush1.msra.mxu0 0.0
        %1743 = vmatprep.subr.mxu0 0.0
        %1744 = vmatpush1.msra.mxu0 0.0
        %1745 = vmatprep.subr.mxu0 0.0
        %1746 = vmatpush1.msra.mxu0 0.0
        %1747 = vmatprep.subr.mxu0 0.0
        %1748 = vmatpush1.msra.mxu0 0.0
        %1749 = vmatprep.subr.mxu0 0.0
        %1750 = vmatpush1.msra.mxu0 0.0
        %1751 = vmatprep.subr.mxu0 0.0
        %1752 = vmatpush1.msra.mxu0 0.0
        %1753 = vmatprep.subr.mxu0 0.0
        %1754 = vmatpush1.msra.mxu0 0.0
        %1755 = vmatprep.subr.mxu0 0.0
        %1756 = vmatpush1.msra.mxu0 0.0
        %1757 = vmatprep.subr.mxu0 0.0
        %1758 = vmatpush1.msra.mxu0 0.0
        %1759 = vmatprep.subr.mxu0 0.0
        %1760 = vmatpush1.msra.mxu0 0.0
        %1761 = vmatprep.subr.mxu0 0.0
        %1762 = vmatpush1.msra.mxu0 0.0
        %1763 = vmatprep.subr.mxu0 0.0
        %1764 = vmatpush1.msra.mxu0 0.0
        %1765 = vmatprep.subr.mxu0 0.0
        %1766 = vmatpush1.msra.mxu0 0.0
        %1767 = vmatprep.subr.mxu0 0.0
        %1768 = vmatpush1.msra.mxu0 0.0
        %1769 = vmatprep.subr.mxu0 0.0
        %1770 = vmatpush1.msra.mxu0 0.0
        %1771 = vmatprep.subr.mxu0 0.0
        %1772 = vmatpush1.msra.mxu0 0.0
        %1773 = vmatprep.subr.mxu0 0.0
        %1774 = vmatpush1.msra.mxu0 0.0
        %1775 = vmatprep.subr.mxu0 0.0
        %1776 = vmatpush1.msra.mxu0 0.0
        %1777 = vmatprep.subr.mxu0 0.0
        %1778 = vmatpush1.msra.mxu0 0.0
        %1779 = vmatprep.subr.mxu0 0.0
        %1780 = vmatpush1.msra.mxu0 0.0
        %1781 = vmatprep.subr.mxu0 0.0
        %1782 = vmatpush1.msra.mxu0 0.0
        %1783 = vmatprep.mubr.f32.mxu0 0.0
        %1784 = vmatmul.mubr.f32.gmra.mrb[0].mxu0 %v1708
        %v1785 = vpop.f32.mrb[0].mxu0
        %v1786 = vadd.f32 0.0, %v1785
        %v1787 = vpop.f32.mrb[0].mxu0
        %v1788 = vadd.f32 0.0, %v1787
        %1789 = vmatprep.mubr.f32.mxu0 0.0
        %1790 = vmatmul.mubr.f32.gmra.mrb[0].mxu0 %v1711
        %v1791 = vpop.f32.mrb[0].mxu0
        %v1792 = vadd.f32 0.0, %v1791
        %v1793 = vpop.f32.mrb[0].mxu0
        %v1794 = vadd.f32 0.0, %v1793
        %1795 = vdwg.mxu0
        %1796 = vmatprep.subr.mxu0 0.0
        %1797 = vmatpush1.msra.mxu0 %v1717
        %1798 = vmatprep.subr.mxu0 0.0
        %1799 = vmatpush1.msra.mxu0 0.0
        %1800 = vmatprep.subr.mxu0 0.0
        %1801 = vmatpush1.msra.mxu0 0.0
        %1802 = vmatprep.subr.mxu0 0.0
        %1803 = vmatpush1.msra.mxu0 0.0
        %1804 = vmatprep.subr.mxu0 0.0
        %1805 = vmatpush1.msra.mxu0 0.0
        %1806 = vmatprep.subr.mxu0 0.0
        %1807 = vmatpush1.msra.mxu0 0.0
        %1808 = vmatprep.subr.mxu0 0.0
        %1809 = vmatpush1.msra.mxu0 0.0
        %1810 = vmatprep.subr.mxu0 0.0
        %1811 = vmatpush1.msra.mxu0 0.0
        %1812 = vmatprep.subr.mxu0 0.0
        %1813 = vmatpush1.msra.mxu0 0.0
        %1814 = vmatprep.subr.mxu0 0.0
        %1815 = vmatpush1.msra.mxu0 0.0
        %1816 = vmatprep.subr.mxu0 0.0
        %1817 = vmatpush1.msra.mxu0 0.0
        %1818 = vmatprep.subr.mxu0 0.0
        %1819 = vmatpush1.msra.mxu0 0.0
        %1820 = vmatprep.subr.mxu0 0.0
        %1821 = vmatpush1.msra.mxu0 0.0
        %1822 = vmatprep.subr.mxu0 0.0
        %1823 = vmatpush1.msra.mxu0 0.0
        %1824 = vmatprep.subr.mxu0 0.0
        %1825 = vmatpush1.msra.mxu0 0.0
        %1826 = vmatprep.subr.mxu0 0.0
        %1827 = vmatpush1.msra.mxu0 0.0
        %1828 = vmatprep.subr.mxu0 0.0
        %1829 = vmatpush1.msra.mxu0 0.0
        %1830 = vmatprep.subr.mxu0 0.0
        %1831 = vmatpush1.msra.mxu0 0.0
        %1832 = vmatprep.subr.mxu0 0.0
        %1833 = vmatpush1.msra.mxu0 0.0
        %1834 = vmatprep.subr.mxu0 0.0
        %1835 = vmatpush1.msra.mxu0 0.0
        %1836 = vmatprep.subr.mxu0 0.0
        %1837 = vmatpush1.msra.mxu0 0.0
        %1838 = vmatprep.subr.mxu0 0.0
        %1839 = vmatpush1.msra.mxu0 0.0
        %1840 = vmatprep.subr.mxu0 0.0
        %1841 = vmatpush1.msra.mxu0 0.0
        %1842 = vmatprep.subr.mxu0 0.0
        %1843 = vmatpush1.msra.mxu0 0.0
        %1844 = vmatprep.subr.mxu0 0.0
        %1845 = vmatpush1.msra.mxu0 0.0
        %1846 = vmatprep.subr.mxu0 0.0
        %1847 = vmatpush1.msra.mxu0 0.0
        %1848 = vmatprep.subr.mxu0 0.0
        %1849 = vmatpush1.msra.mxu0 0.0
        %1850 = vmatprep.subr.mxu0 0.0
        %1851 = vmatpush1.msra.mxu0 0.0
        %1852 = vmatprep.subr.mxu0 0.0
        %1853 = vmatpush1.msra.mxu0 0.0
        %1854 = vmatprep.subr.mxu0 0.0
        %1855 = vmatpush1.msra.mxu0 0.0
        %1856 = vmatprep.subr.mxu0 0.0
        %1857 = vmatpush1.msra.mxu0 0.0
        %1858 = vmatprep.subr.mxu0 0.0
        %1859 = vmatpush1.msra.mxu0 0.0
        %1860 = vmatprep.mubr.f32.mxu0 0.0
        %1861 = vmatmul.mubr.f32.gmra.mrb[0].mxu0 %v1708
        %v1862 = vpop.f32.mrb[0].mxu0
        %v1863 = vadd.f32 0.0, %v1862
        %v1864 = vpop.f32.mrb[0].mxu0
        %1865 = vmatprep.mubr.f32.mxu0 0.0
        %1866 = vmatmul.mubr.f32.gmra.mrb[0].mxu0 %v1711
        %v1867 = vpop.f32.mrb[0].mxu0
        %v1868 = vadd.f32 0.0, %v1867
        %v1869 = vpop.f32.mrb[0].mxu0
        %1870 = vdwg.mxu0
        %v1871 = vadd.f32 %v1689, %v1786
        %v1872 = vadd.f32 %v1690, %v1788
        %v1873 = vadd.f32 %v1691, %v1863
        %v1874 = vadd.f32 %v1692, %v1792
        %v1875 = vadd.f32 %v1693, %v1794
        %v1876 = vadd.f32 %v1694, %v1868
        %1878 = vset.pattern.permute.xlu0 0
        %1879 = vperm.xlu0 %1878, %v252
        %v1880 = vpop.permute.xlu0 %1879
        %v1882 = vadd.f32 %v1871, %v1880
        %v1883 = vadd.f32 %v1872, %v1880
        %v1884 = vadd.f32 %v1873, %v1880
        %1885 = vset.pattern.permute.xlu0 1
        %1886 = vperm.xlu0 %1885, %v252
        %v1887 = vpop.permute.xlu0 %1886
        %v1889 = vmul.f32 %v1874, %v1887
        %v1890 = vmul.f32 %v1875, %v1887
        %v1891 = vmul.f32 %v1876, %v1887
        %1892 = vset.pattern.permute.xlu0 2
        %1893 = vperm.xlu0 %1892, %v252
        %v1894 = vpop.permute.xlu0 %1893
        %v1896 = vadd.f32 %v1889, %v1894
        %v1897 = vadd.f32 %v1890, %v1894
        %v1898 = vadd.f32 %v1891, %v1894
        %v1899 = vmax.f32 %v1896, 0.0
        %v1900 = vmax.f32 %v1897, 0.0
        %v1901 = vmax.f32 %v1898, 0.0
        %v1903 = vlaneseq
        %v1904 = vshrl.u32 %v1903, 7
        %v1905 = vsub.s32 0, %v1904
        %v1906 = vrot.slane %v253, %v1905
        %v1907 = vlaneseq
        %v1908 = vshrl.u32 %v1907, 7
        %v1909 = vsub.s32 1, %v1908
        %v1910 = vrot.slane %v253, %v1909
        %v1911 = vlaneseq
        %v1912 = vshrl.u32 %v1911, 7
        %v1913 = vsub.s32 2, %v1912
        %v1914 = vrot.slane %v253, %v1913
        %v1918 = vmul.f32 %v1899, %v1906
        %v1919 = vmul.f32 %v1900, %v1910
        %v1920 = vmul.f32 %v1901, %v1914
        %vm1921 = vcmask 154624
        %1922 = vst.msk [vmem:[#allocation2] sm:$0xff] %vm1921, 0.0
        %vm1923 = vcmask 868024
        %1924 = vst.msk [vmem:[#allocation2 + $0x10] sm:$0xff] %vm1923, 0.0
        %1928 = vrot.lane.b32.xlu0 %v1918, 19
        %v1929 = vpop.permute.xlu0 %1928
        %1930 = vrot.lane.b32.xlu0 %v1919, 19
        %v1931 = vpop.permute.xlu0 %1930
        %1932 = vrot.lane.b32.xlu0 %v1920, 19
        %v1933 = vpop.permute.xlu0 %1932
        %v1934 = vsel %vm1921, %v1929, %v1931
        %v1935 = vsel %vm1921, %v1931, %v1933
        %vm1939 = vcmask 1047704
        %1940 = vst.msk [vmem:[#allocation2] sm:$0xff] %vm1939, %v1929
        %1941 = vst [vmem:[#allocation2 + $0x8] sm:$0xff] %v1934
        %vm1942 = vcmask 711680
        %1943 = vst.msk [vmem:[#allocation2 + $0x10] sm:$0xff] %vm1942, %v1935
        %v1944 = vld [vmem:[#allocation2] sm:$0xff]
        %v1945 = vld [vmem:[#allocation2 + $0x8] sm:$0xff]
        %v1946 = vld [vmem:[#allocation2 + $0x10] sm:$0xff]
        %v1947 = vld [vmem:[%s2] sm:$0xff]
        %s1948 = scalar_lea.vmem %s2, 8
        %v1949 = vld [vmem:[%s1948] sm:$0xff]
        %1953 = vrot.lane.b32.xlu0 %v1944, 127
        %v1954 = vpop.permute.xlu0 %1953
        %1955 = vrot.lane.b32.xlu0 %v1945, 127
        %v1956 = vpop.permute.xlu0 %1955
        %1957 = vrot.lane.b32.xlu0 %v1946, 127
        %v1958 = vpop.permute.xlu0 %1957
        %v1959 = vsel %vm270, %v1954, %v1956
        %v1960 = vsel %vm270, %v1956, %v1958
        %vm1964 = vcmask 64512
        %v1966 = vsel %vm1964, %v1949, 0
        %1968 = vmatprep.subr.mxu0 %v1960
        %1969 = vmatpush1.msra.mxu0 %v1959
        %1970 = vmatprep.subr.mxu0 0.0
        %1971 = vmatpush1.msra.mxu0 0.0
        %1972 = vmatprep.subr.mxu0 0.0
        %1973 = vmatpush1.msra.mxu0 0.0
        %1974 = vmatprep.subr.mxu0 0.0
        %1975 = vmatpush1.msra.mxu0 0.0
        %1976 = vmatprep.subr.mxu0 0.0
        %1977 = vmatpush1.msra.mxu0 0.0
        %1978 = vmatprep.subr.mxu0 0.0
        %1979 = vmatpush1.msra.mxu0 0.0
        %1980 = vmatprep.subr.mxu0 0.0
        %1981 = vmatpush1.msra.mxu0 0.0
        %1982 = vmatprep.subr.mxu0 0.0
        %1983 = vmatpush1.msra.mxu0 0.0
        %1984 = vmatprep.subr.mxu0 0.0
        %1985 = vmatpush1.msra.mxu0 0.0
        %1986 = vmatprep.subr.mxu0 0.0
        %1987 = vmatpush1.msra.mxu0 0.0
        %1988 = vmatprep.subr.mxu0 0.0
        %1989 = vmatpush1.msra.mxu0 0.0
        %1990 = vmatprep.subr.mxu0 0.0
        %1991 = vmatpush1.msra.mxu0 0.0
        %1992 = vmatprep.subr.mxu0 0.0
        %1993 = vmatpush1.msra.mxu0 0.0
        %1994 = vmatprep.subr.mxu0 0.0
        %1995 = vmatpush1.msra.mxu0 0.0
        %1996 = vmatprep.subr.mxu0 0.0
        %1997 = vmatpush1.msra.mxu0 0.0
        %1998 = vmatprep.subr.mxu0 0.0
        %1999 = vmatpush1.msra.mxu0 0.0
        %2000 = vmatprep.subr.mxu0 0.0
        %2001 = vmatpush1.msra.mxu0 0.0
        %2002 = vmatprep.subr.mxu0 0.0
        %2003 = vmatpush1.msra.mxu0 0.0
        %2004 = vmatprep.subr.mxu0 0.0
        %2005 = vmatpush1.msra.mxu0 0.0
        %2006 = vmatprep.subr.mxu0 0.0
        %2007 = vmatpush1.msra.mxu0 0.0
        %2008 = vmatprep.subr.mxu0 0.0
        %2009 = vmatpush1.msra.mxu0 0.0
        %2010 = vmatprep.subr.mxu0 0.0
        %2011 = vmatpush1.msra.mxu0 0.0
        %2012 = vmatprep.subr.mxu0 0.0
        %2013 = vmatpush1.msra.mxu0 0.0
        %2014 = vmatprep.subr.mxu0 0.0
        %2015 = vmatpush1.msra.mxu0 0.0
        %2016 = vmatprep.subr.mxu0 0.0
        %2017 = vmatpush1.msra.mxu0 0.0
        %2018 = vmatprep.subr.mxu0 0.0
        %2019 = vmatpush1.msra.mxu0 0.0
        %2020 = vmatprep.subr.mxu0 0.0
        %2021 = vmatpush1.msra.mxu0 0.0
        %2022 = vmatprep.subr.mxu0 0.0
        %2023 = vmatpush1.msra.mxu0 0.0
        %2024 = vmatprep.subr.mxu0 0.0
        %2025 = vmatpush1.msra.mxu0 0.0
        %2026 = vmatprep.subr.mxu0 0.0
        %2027 = vmatpush1.msra.mxu0 0.0
        %2028 = vmatprep.subr.mxu0 0.0
        %2029 = vmatpush1.msra.mxu0 0.0
        %2030 = vmatprep.subr.mxu0 0.0
        %2031 = vmatpush1.msra.mxu0 0.0
        %2032 = vmatprep.mubr.f32.mxu0 0.0
        %2033 = vmatmul.mubr.f32.gmra.mrb[0].mxu0 %v1966
        %v2034 = vpop.f32.mrb[0].mxu0
        %v2035 = vadd.f32 0.0, %v2034
        %v2036 = vpop.f32.mrb[0].mxu0
        %v2037 = vadd.f32 0.0, %v2036
        %2038 = vdwg.mxu0
        %2039 = vmatprep.subr.mxu0 0.0
        %2040 = vmatpush1.msra.mxu0 %v1958
        %2041 = vmatprep.subr.mxu0 0.0
        %2042 = vmatpush1.msra.mxu0 0.0
        %2043 = vmatprep.subr.mxu0 0.0
        %2044 = vmatpush1.msra.mxu0 0.0
        %2045 = vmatprep.subr.mxu0 0.0
        %2046 = vmatpush1.msra.mxu0 0.0
        %2047 = vmatprep.subr.mxu0 0.0
        %2048 = vmatpush1.msra.mxu0 0.0
        %2049 = vmatprep.subr.mxu0 0.0
        %2050 = vmatpush1.msra.mxu0 0.0
        %2051 = vmatprep.subr.mxu0 0.0
        %2052 = vmatpush1.msra.mxu0 0.0
        %2053 = vmatprep.subr.mxu0 0.0
        %2054 = vmatpush1.msra.mxu0 0.0
        %2055 = vmatprep.subr.mxu0 0.0
        %2056 = vmatpush1.msra.mxu0 0.0
        %2057 = vmatprep.subr.mxu0 0.0
        %2058 = vmatpush1.msra.mxu0 0.0
        %2059 = vmatprep.subr.mxu0 0.0
        %2060 = vmatpush1.msra.mxu0 0.0
        %2061 = vmatprep.subr.mxu0 0.0
        %2062 = vmatpush1.msra.mxu0 0.0
        %2063 = vmatprep.subr.mxu0 0.0
        %2064 = vmatpush1.msra.mxu0 0.0
        %2065 = vmatprep.subr.mxu0 0.0
        %2066 = vmatpush1.msra.mxu0 0.0
        %2067 = vmatprep.subr.mxu0 0.0
        %2068 = vmatpush1.msra.mxu0 0.0
        %2069 = vmatprep.subr.mxu0 0.0
        %2070 = vmatpush1.msra.mxu0 0.0
        %2071 = vmatprep.subr.mxu0 0.0
        %2072 = vmatpush1.msra.mxu0 0.0
        %2073 = vmatprep.subr.mxu0 0.0
        %2074 = vmatpush1.msra.mxu0 0.0
        %2075 = vmatprep.subr.mxu0 0.0
        %2076 = vmatpush1.msra.mxu0 0.0
        %2077 = vmatprep.subr.mxu0 0.0
        %2078 = vmatpush1.msra.mxu0 0.0
        %2079 = vmatprep.subr.mxu0 0.0
        %2080 = vmatpush1.msra.mxu0 0.0
        %2081 = vmatprep.subr.mxu0 0.0
        %2082 = vmatpush1.msra.mxu0 0.0
        %2083 = vmatprep.subr.mxu0 0.0
        %2084 = vmatpush1.msra.mxu0 0.0
        %2085 = vmatprep.subr.mxu0 0.0
        %2086 = vmatpush1.msra.mxu0 0.0
        %2087 = vmatprep.subr.mxu0 0.0
        %2088 = vmatpush1.msra.mxu0 0.0
        %2089 = vmatprep.subr.mxu0 0.0
        %2090 = vmatpush1.msra.mxu0 0.0
        %2091 = vmatprep.subr.mxu0 0.0
        %2092 = vmatpush1.msra.mxu0 0.0
        %2093 = vmatprep.subr.mxu0 0.0
        %2094 = vmatpush1.msra.mxu0 0.0
        %2095 = vmatprep.subr.mxu0 0.0
        %2096 = vmatpush1.msra.mxu0 0.0
        %2097 = vmatprep.subr.mxu0 0.0
        %2098 = vmatpush1.msra.mxu0 0.0
        %2099 = vmatprep.subr.mxu0 0.0
        %2100 = vmatpush1.msra.mxu0 0.0
        %2101 = vmatprep.subr.mxu0 0.0
        %2102 = vmatpush1.msra.mxu0 0.0
        %2103 = vmatprep.mubr.f32.mxu0 0.0
        %2104 = vmatmul.mubr.f32.gmra.mrb[0].mxu0 %v1966
        %v2105 = vpop.f32.mrb[0].mxu0
        %v2106 = vadd.f32 0.0, %v2105
        %v2107 = vpop.f32.mrb[0].mxu0
        %2108 = vdwg.mxu0
        %v2110 = vsel %vm1964, %v1947, 0
        %2112 = vmatprep.subr.mxu0 %v1945
        %2113 = vmatpush1.msra.mxu0 %v1944
        %2114 = vmatprep.subr.mxu0 0.0
        %2115 = vmatpush1.msra.mxu0 0.0
        %2116 = vmatprep.subr.mxu0 0.0
        %2117 = vmatpush1.msra.mxu0 0.0
        %2118 = vmatprep.subr.mxu0 0.0
        %2119 = vmatpush1.msra.mxu0 0.0
        %2120 = vmatprep.subr.mxu0 0.0
        %2121 = vmatpush1.msra.mxu0 0.0
        %2122 = vmatprep.subr.mxu0 0.0
        %2123 = vmatpush1.msra.mxu0 0.0
        %2124 = vmatprep.subr.mxu0 0.0
        %2125 = vmatpush1.msra.mxu0 0.0
        %2126 = vmatprep.subr.mxu0 0.0
        %2127 = vmatpush1.msra.mxu0 0.0
        %2128 = vmatprep.subr.mxu0 0.0
        %2129 = vmatpush1.msra.mxu0 0.0
        %2130 = vmatprep.subr.mxu0 0.0
        %2131 = vmatpush1.msra.mxu0 0.0
        %2132 = vmatprep.subr.mxu0 0.0
        %2133 = vmatpush1.msra.mxu0 0.0
        %2134 = vmatprep.subr.mxu0 0.0
        %2135 = vmatpush1.msra.mxu0 0.0
        %2136 = vmatprep.subr.mxu0 0.0
        %2137 = vmatpush1.msra.mxu0 0.0
        %2138 = vmatprep.subr.mxu0 0.0
        %2139 = vmatpush1.msra.mxu0 0.0
        %2140 = vmatprep.subr.mxu0 0.0
        %2141 = vmatpush1.msra.mxu0 0.0
        %2142 = vmatprep.subr.mxu0 0.0
        %2143 = vmatpush1.msra.mxu0 0.0
        %2144 = vmatprep.subr.mxu0 0.0
        %2145 = vmatpush1.msra.mxu0 0.0
        %2146 = vmatprep.subr.mxu0 0.0
        %2147 = vmatpush1.msra.mxu0 0.0
        %2148 = vmatprep.subr.mxu0 0.0
        %2149 = vmatpush1.msra.mxu0 0.0
        %2150 = vmatprep.subr.mxu0 0.0
        %2151 = vmatpush1.msra.mxu0 0.0
        %2152 = vmatprep.subr.mxu0 0.0
        %2153 = vmatpush1.msra.mxu0 0.0
        %2154 = vmatprep.subr.mxu0 0.0
        %2155 = vmatpush1.msra.mxu0 0.0
        %2156 = vmatprep.subr.mxu0 0.0
        %2157 = vmatpush1.msra.mxu0 0.0
        %2158 = vmatprep.subr.mxu0 0.0
        %2159 = vmatpush1.msra.mxu0 0.0
        %2160 = vmatprep.subr.mxu0 0.0
        %2161 = vmatpush1.msra.mxu0 0.0
        %2162 = vmatprep.subr.mxu0 0.0
        %2163 = vmatpush1.msra.mxu0 0.0
        %2164 = vmatprep.subr.mxu0 0.0
        %2165 = vmatpush1.msra.mxu0 0.0
        %2166 = vmatprep.subr.mxu0 0.0
        %2167 = vmatpush1.msra.mxu0 0.0
        %2168 = vmatprep.subr.mxu0 0.0
        %2169 = vmatpush1.msra.mxu0 0.0
        %2170 = vmatprep.subr.mxu0 0.0
        %2171 = vmatpush1.msra.mxu0 0.0
        %2172 = vmatprep.subr.mxu0 0.0
        %2173 = vmatpush1.msra.mxu0 0.0
        %2174 = vmatprep.subr.mxu0 0.0
        %2175 = vmatpush1.msra.mxu0 0.0
        %2176 = vmatprep.mubr.f32.mxu0 0.0
        %2177 = vmatmul.mubr.f32.gmra.mrb[0].mxu0 %v2110
        %v2178 = vpop.f32.mrb[0].mxu0
        %v2179 = vadd.f32 %v2035, %v2178
        %v2180 = vpop.f32.mrb[0].mxu0
        %v2181 = vadd.f32 %v2037, %v2180
        %2182 = vdwg.mxu0
        %2183 = vmatprep.subr.mxu0 0.0
        %2184 = vmatpush1.msra.mxu0 %v1946
        %2185 = vmatprep.subr.mxu0 0.0
        %2186 = vmatpush1.msra.mxu0 0.0
        %2187 = vmatprep.subr.mxu0 0.0
        %2188 = vmatpush1.msra.mxu0 0.0
        %2189 = vmatprep.subr.mxu0 0.0
        %2190 = vmatpush1.msra.mxu0 0.0
        %2191 = vmatprep.subr.mxu0 0.0
        %2192 = vmatpush1.msra.mxu0 0.0
        %2193 = vmatprep.subr.mxu0 0.0
        %2194 = vmatpush1.msra.mxu0 0.0
        %2195 = vmatprep.subr.mxu0 0.0
        %2196 = vmatpush1.msra.mxu0 0.0
        %2197 = vmatprep.subr.mxu0 0.0
        %2198 = vmatpush1.msra.mxu0 0.0
        %2199 = vmatprep.subr.mxu0 0.0
        %2200 = vmatpush1.msra.mxu0 0.0
        %2201 = vmatprep.subr.mxu0 0.0
        %2202 = vmatpush1.msra.mxu0 0.0
        %2203 = vmatprep.subr.mxu0 0.0
        %2204 = vmatpush1.msra.mxu0 0.0
        %2205 = vmatprep.subr.mxu0 0.0
        %2206 = vmatpush1.msra.mxu0 0.0
        %2207 = vmatprep.subr.mxu0 0.0
        %2208 = vmatpush1.msra.mxu0 0.0
        %2209 = vmatprep.subr.mxu0 0.0
        %2210 = vmatpush1.msra.mxu0 0.0
        %2211 = vmatprep.subr.mxu0 0.0
        %2212 = vmatpush1.msra.mxu0 0.0
        %2213 = vmatprep.subr.mxu0 0.0
        %2214 = vmatpush1.msra.mxu0 0.0
        %2215 = vmatprep.subr.mxu0 0.0
        %2216 = vmatpush1.msra.mxu0 0.0
        %2217 = vmatprep.subr.mxu0 0.0
        %2218 = vmatpush1.msra.mxu0 0.0
        %2219 = vmatprep.subr.mxu0 0.0
        %2220 = vmatpush1.msra.mxu0 0.0
        %2221 = vmatprep.subr.mxu0 0.0
        %2222 = vmatpush1.msra.mxu0 0.0
        %2223 = vmatprep.subr.mxu0 0.0
        %2224 = vmatpush1.msra.mxu0 0.0
        %2225 = vmatprep.subr.mxu0 0.0
        %2226 = vmatpush1.msra.mxu0 0.0
        %2227 = vmatprep.subr.mxu0 0.0
        %2228 = vmatpush1.msra.mxu0 0.0
        %2229 = vmatprep.subr.mxu0 0.0
        %2230 = vmatpush1.msra.mxu0 0.0
        %2231 = vmatprep.subr.mxu0 0.0
        %2232 = vmatpush1.msra.mxu0 0.0
        %2233 = vmatprep.subr.mxu0 0.0
        %2234 = vmatpush1.msra.mxu0 0.0
        %2235 = vmatprep.subr.mxu0 0.0
        %2236 = vmatpush1.msra.mxu0 0.0
        %2237 = vmatprep.subr.mxu0 0.0
        %2238 = vmatpush1.msra.mxu0 0.0
        %2239 = vmatprep.subr.mxu0 0.0
        %2240 = vmatpush1.msra.mxu0 0.0
        %2241 = vmatprep.subr.mxu0 0.0
        %2242 = vmatpush1.msra.mxu0 0.0
        %2243 = vmatprep.subr.mxu0 0.0
        %2244 = vmatpush1.msra.mxu0 0.0
        %2245 = vmatprep.subr.mxu0 0.0
        %2246 = vmatpush1.msra.mxu0 0.0
        %2247 = vmatprep.mubr.f32.mxu0 0.0
        %2248 = vmatmul.mubr.f32.gmra.mrb[0].mxu0 %v2110
        %v2249 = vpop.f32.mrb[0].mxu0
        %v2250 = vadd.f32 %v2106, %v2249
        %v2251 = vpop.f32.mrb[0].mxu0
        %2252 = vdwg.mxu0
        %s2253 = scalar_lea.vmem %s2, 16
        %v2254 = vld [vmem:[%s2253] sm:$0xff]
        %2255 = vrot.lane.b32.xlu0 %v1944, 126
        %v2256 = vpop.permute.xlu0 %2255
        %2257 = vrot.lane.b32.xlu0 %v1945, 126
        %v2258 = vpop.permute.xlu0 %2257
        %2259 = vrot.lane.b32.xlu0 %v1946, 126
        %v2260 = vpop.permute.xlu0 %2259
        %v2261 = vsel %vm612, %v2256, %v2258
        %v2262 = vsel %vm612, %v2258, %v2260
        %v2267 = vsel %vm1964, %v2254, 0
        %2269 = vmatprep.subr.mxu0 %v2262
        %2270 = vmatpush1.msra.mxu0 %v2261
        %2271 = vmatprep.subr.mxu0 0.0
        %2272 = vmatpush1.msra.mxu0 0.0
        %2273 = vmatprep.subr.mxu0 0.0
        %2274 = vmatpush1.msra.mxu0 0.0
        %2275 = vmatprep.subr.mxu0 0.0
        %2276 = vmatpush1.msra.mxu0 0.0
        %2277 = vmatprep.subr.mxu0 0.0
        %2278 = vmatpush1.msra.mxu0 0.0
        %2279 = vmatprep.subr.mxu0 0.0
        %2280 = vmatpush1.msra.mxu0 0.0
        %2281 = vmatprep.subr.mxu0 0.0
        %2282 = vmatpush1.msra.mxu0 0.0
        %2283 = vmatprep.subr.mxu0 0.0
        %2284 = vmatpush1.msra.mxu0 0.0
        %2285 = vmatprep.subr.mxu0 0.0
        %2286 = vmatpush1.msra.mxu0 0.0
        %2287 = vmatprep.subr.mxu0 0.0
        %2288 = vmatpush1.msra.mxu0 0.0
        %2289 = vmatprep.subr.mxu0 0.0
        %2290 = vmatpush1.msra.mxu0 0.0
        %2291 = vmatprep.subr.mxu0 0.0
        %2292 = vmatpush1.msra.mxu0 0.0
        %2293 = vmatprep.subr.mxu0 0.0
        %2294 = vmatpush1.msra.mxu0 0.0
        %2295 = vmatprep.subr.mxu0 0.0
        %2296 = vmatpush1.msra.mxu0 0.0
        %2297 = vmatprep.subr.mxu0 0.0
        %2298 = vmatpush1.msra.mxu0 0.0
        %2299 = vmatprep.subr.mxu0 0.0
        %2300 = vmatpush1.msra.mxu0 0.0
        %2301 = vmatprep.subr.mxu0 0.0
        %2302 = vmatpush1.msra.mxu0 0.0
        %2303 = vmatprep.subr.mxu0 0.0
        %2304 = vmatpush1.msra.mxu0 0.0
        %2305 = vmatprep.subr.mxu0 0.0
        %2306 = vmatpush1.msra.mxu0 0.0
        %2307 = vmatprep.subr.mxu0 0.0
        %2308 = vmatpush1.msra.mxu0 0.0
        %2309 = vmatprep.subr.mxu0 0.0
        %2310 = vmatpush1.msra.mxu0 0.0
        %2311 = vmatprep.subr.mxu0 0.0
        %2312 = vmatpush1.msra.mxu0 0.0
        %2313 = vmatprep.subr.mxu0 0.0
        %2314 = vmatpush1.msra.mxu0 0.0
        %2315 = vmatprep.subr.mxu0 0.0
        %2316 = vmatpush1.msra.mxu0 0.0
        %2317 = vmatprep.subr.mxu0 0.0
        %2318 = vmatpush1.msra.mxu0 0.0
        %2319 = vmatprep.subr.mxu0 0.0
        %2320 = vmatpush1.msra.mxu0 0.0
        %2321 = vmatprep.subr.mxu0 0.0
        %2322 = vmatpush1.msra.mxu0 0.0
        %2323 = vmatprep.subr.mxu0 0.0
        %2324 = vmatpush1.msra.mxu0 0.0
        %2325 = vmatprep.subr.mxu0 0.0
        %2326 = vmatpush1.msra.mxu0 0.0
        %2327 = vmatprep.subr.mxu0 0.0
        %2328 = vmatpush1.msra.mxu0 0.0
        %2329 = vmatprep.subr.mxu0 0.0
        %2330 = vmatpush1.msra.mxu0 0.0
        %2331 = vmatprep.subr.mxu0 0.0
        %2332 = vmatpush1.msra.mxu0 0.0
        %2333 = vmatprep.mubr.f32.mxu0 0.0
        %2334 = vmatmul.mubr.f32.gmra.mrb[0].mxu0 %v2267
        %v2335 = vpop.f32.mrb[0].mxu0
        %v2336 = vadd.f32 0.0, %v2335
        %v2337 = vpop.f32.mrb[0].mxu0
        %v2338 = vadd.f32 0.0, %v2337
        %2339 = vdwg.mxu0
        %2340 = vmatprep.subr.mxu0 0.0
        %2341 = vmatpush1.msra.mxu0 %v2260
        %2342 = vmatprep.subr.mxu0 0.0
        %2343 = vmatpush1.msra.mxu0 0.0
        %2344 = vmatprep.subr.mxu0 0.0
        %2345 = vmatpush1.msra.mxu0 0.0
        %2346 = vmatprep.subr.mxu0 0.0
        %2347 = vmatpush1.msra.mxu0 0.0
        %2348 = vmatprep.subr.mxu0 0.0
        %2349 = vmatpush1.msra.mxu0 0.0
        %2350 = vmatprep.subr.mxu0 0.0
        %2351 = vmatpush1.msra.mxu0 0.0
        %2352 = vmatprep.subr.mxu0 0.0
        %2353 = vmatpush1.msra.mxu0 0.0
        %2354 = vmatprep.subr.mxu0 0.0
        %2355 = vmatpush1.msra.mxu0 0.0
        %2356 = vmatprep.subr.mxu0 0.0
        %2357 = vmatpush1.msra.mxu0 0.0
        %2358 = vmatprep.subr.mxu0 0.0
        %2359 = vmatpush1.msra.mxu0 0.0
        %2360 = vmatprep.subr.mxu0 0.0
        %2361 = vmatpush1.msra.mxu0 0.0
        %2362 = vmatprep.subr.mxu0 0.0
        %2363 = vmatpush1.msra.mxu0 0.0
        %2364 = vmatprep.subr.mxu0 0.0
        %2365 = vmatpush1.msra.mxu0 0.0
        %2366 = vmatprep.subr.mxu0 0.0
        %2367 = vmatpush1.msra.mxu0 0.0
        %2368 = vmatprep.subr.mxu0 0.0
        %2369 = vmatpush1.msra.mxu0 0.0
        %2370 = vmatprep.subr.mxu0 0.0
        %2371 = vmatpush1.msra.mxu0 0.0
        %2372 = vmatprep.subr.mxu0 0.0
        %2373 = vmatpush1.msra.mxu0 0.0
        %2374 = vmatprep.subr.mxu0 0.0
        %2375 = vmatpush1.msra.mxu0 0.0
        %2376 = vmatprep.subr.mxu0 0.0
        %2377 = vmatpush1.msra.mxu0 0.0
        %2378 = vmatprep.subr.mxu0 0.0
        %2379 = vmatpush1.msra.mxu0 0.0
        %2380 = vmatprep.subr.mxu0 0.0
        %2381 = vmatpush1.msra.mxu0 0.0
        %2382 = vmatprep.subr.mxu0 0.0
        %2383 = vmatpush1.msra.mxu0 0.0
        %2384 = vmatprep.subr.mxu0 0.0
        %2385 = vmatpush1.msra.mxu0 0.0
        %2386 = vmatprep.subr.mxu0 0.0
        %2387 = vmatpush1.msra.mxu0 0.0
        %2388 = vmatprep.subr.mxu0 0.0
        %2389 = vmatpush1.msra.mxu0 0.0
        %2390 = vmatprep.subr.mxu0 0.0
        %2391 = vmatpush1.msra.mxu0 0.0
        %2392 = vmatprep.subr.mxu0 0.0
        %2393 = vmatpush1.msra.mxu0 0.0
        %2394 = vmatprep.subr.mxu0 0.0
        %2395 = vmatpush1.msra.mxu0 0.0
        %2396 = vmatprep.subr.mxu0 0.0
        %2397 = vmatpush1.msra.mxu0 0.0
        %2398 = vmatprep.subr.mxu0 0.0
        %2399 = vmatpush1.msra.mxu0 0.0
        %2400 = vmatprep.subr.mxu0 0.0
        %2401 = vmatpush1.msra.mxu0 0.0
        %2402 = vmatprep.subr.mxu0 0.0
        %2403 = vmatpush1.msra.mxu0 0.0
        %2404 = vmatprep.mubr.f32.mxu0 0.0
        %2405 = vmatmul.mubr.f32.gmra.mrb[0].mxu0 %v2267
        %v2406 = vpop.f32.mrb[0].mxu0
        %v2407 = vadd.f32 0.0, %v2406
        %v2408 = vpop.f32.mrb[0].mxu0
        %2409 = vdwg.mxu0
        %v2410 = vadd.f32 %v2179, %v2336
        %v2411 = vadd.f32 %v2181, %v2338
        %v2412 = vadd.f32 %v2250, %v2407
        %s2413 = scalar_lea.vmem %s2, 24
        %v2414 = vld [vmem:[%s2413] sm:$0xff]
        %2415 = vrot.lane.b32.xlu0 %v1944, 110
        %v2416 = vpop.permute.xlu0 %2415
        %2417 = vrot.lane.b32.xlu0 %v1945, 110
        %v2418 = vpop.permute.xlu0 %2417
        %2419 = vrot.lane.b32.xlu0 %v1946, 110
        %v2420 = vpop.permute.xlu0 %2419
        %v2421 = vsel %vm794, %v2416, %v2418
        %v2422 = vsel %vm794, %v2418, %v2420
        %v2427 = vsel %vm1964, %v2414, 0
        %2429 = vmatprep.subr.mxu0 %v2422
        %2430 = vmatpush1.msra.mxu0 %v2421
        %2431 = vmatprep.subr.mxu0 0.0
        %2432 = vmatpush1.msra.mxu0 0.0
        %2433 = vmatprep.subr.mxu0 0.0
        %2434 = vmatpush1.msra.mxu0 0.0
        %2435 = vmatprep.subr.mxu0 0.0
        %2436 = vmatpush1.msra.mxu0 0.0
        %2437 = vmatprep.subr.mxu0 0.0
        %2438 = vmatpush1.msra.mxu0 0.0
        %2439 = vmatprep.subr.mxu0 0.0
        %2440 = vmatpush1.msra.mxu0 0.0
        %2441 = vmatprep.subr.mxu0 0.0
        %2442 = vmatpush1.msra.mxu0 0.0
        %2443 = vmatprep.subr.mxu0 0.0
        %2444 = vmatpush1.msra.mxu0 0.0
        %2445 = vmatprep.subr.mxu0 0.0
        %2446 = vmatpush1.msra.mxu0 0.0
        %2447 = vmatprep.subr.mxu0 0.0
        %2448 = vmatpush1.msra.mxu0 0.0
        %2449 = vmatprep.subr.mxu0 0.0
        %2450 = vmatpush1.msra.mxu0 0.0
        %2451 = vmatprep.subr.mxu0 0.0
        %2452 = vmatpush1.msra.mxu0 0.0
        %2453 = vmatprep.subr.mxu0 0.0
        %2454 = vmatpush1.msra.mxu0 0.0
        %2455 = vmatprep.subr.mxu0 0.0
        %2456 = vmatpush1.msra.mxu0 0.0
        %2457 = vmatprep.subr.mxu0 0.0
        %2458 = vmatpush1.msra.mxu0 0.0
        %2459 = vmatprep.subr.mxu0 0.0
        %2460 = vmatpush1.msra.mxu0 0.0
        %2461 = vmatprep.subr.mxu0 0.0
        %2462 = vmatpush1.msra.mxu0 0.0
        %2463 = vmatprep.subr.mxu0 0.0
        %2464 = vmatpush1.msra.mxu0 0.0
        %2465 = vmatprep.subr.mxu0 0.0
        %2466 = vmatpush1.msra.mxu0 0.0
        %2467 = vmatprep.subr.mxu0 0.0
        %2468 = vmatpush1.msra.mxu0 0.0
        %2469 = vmatprep.subr.mxu0 0.0
        %2470 = vmatpush1.msra.mxu0 0.0
        %2471 = vmatprep.subr.mxu0 0.0
        %2472 = vmatpush1.msra.mxu0 0.0
        %2473 = vmatprep.subr.mxu0 0.0
        %2474 = vmatpush1.msra.mxu0 0.0
        %2475 = vmatprep.subr.mxu0 0.0
        %2476 = vmatpush1.msra.mxu0 0.0
        %2477 = vmatprep.subr.mxu0 0.0
        %2478 = vmatpush1.msra.mxu0 0.0
        %2479 = vmatprep.subr.mxu0 0.0
        %2480 = vmatpush1.msra.mxu0 0.0
        %2481 = vmatprep.subr.mxu0 0.0
        %2482 = vmatpush1.msra.mxu0 0.0
        %2483 = vmatprep.subr.mxu0 0.0
        %2484 = vmatpush1.msra.mxu0 0.0
        %2485 = vmatprep.subr.mxu0 0.0
        %2486 = vmatpush1.msra.mxu0 0.0
        %2487 = vmatprep.subr.mxu0 0.0
        %2488 = vmatpush1.msra.mxu0 0.0
        %2489 = vmatprep.subr.mxu0 0.0
        %2490 = vmatpush1.msra.mxu0 0.0
        %2491 = vmatprep.subr.mxu0 0.0
        %2492 = vmatpush1.msra.mxu0 0.0
        %2493 = vmatprep.mubr.f32.mxu0 0.0
        %2494 = vmatmul.mubr.f32.gmra.mrb[0].mxu0 %v2427
        %v2495 = vpop.f32.mrb[0].mxu0
        %v2496 = vadd.f32 0.0, %v2495
        %v2497 = vpop.f32.mrb[0].mxu0
        %v2498 = vadd.f32 0.0, %v2497
        %2499 = vdwg.mxu0
        %2500 = vmatprep.subr.mxu0 0.0
        %2501 = vmatpush1.msra.mxu0 %v2420
        %2502 = vmatprep.subr.mxu0 0.0
        %2503 = vmatpush1.msra.mxu0 0.0
        %2504 = vmatprep.subr.mxu0 0.0
        %2505 = vmatpush1.msra.mxu0 0.0
        %2506 = vmatprep.subr.mxu0 0.0
        %2507 = vmatpush1.msra.mxu0 0.0
        %2508 = vmatprep.subr.mxu0 0.0
        %2509 = vmatpush1.msra.mxu0 0.0
        %2510 = vmatprep.subr.mxu0 0.0
        %2511 = vmatpush1.msra.mxu0 0.0
        %2512 = vmatprep.subr.mxu0 0.0
        %2513 = vmatpush1.msra.mxu0 0.0
        %2514 = vmatprep.subr.mxu0 0.0
        %2515 = vmatpush1.msra.mxu0 0.0
        %2516 = vmatprep.subr.mxu0 0.0
        %2517 = vmatpush1.msra.mxu0 0.0
        %2518 = vmatprep.subr.mxu0 0.0
        %2519 = vmatpush1.msra.mxu0 0.0
        %2520 = vmatprep.subr.mxu0 0.0
        %2521 = vmatpush1.msra.mxu0 0.0
        %2522 = vmatprep.subr.mxu0 0.0
        %2523 = vmatpush1.msra.mxu0 0.0
        %2524 = vmatprep.subr.mxu0 0.0
        %2525 = vmatpush1.msra.mxu0 0.0
        %2526 = vmatprep.subr.mxu0 0.0
        %2527 = vmatpush1.msra.mxu0 0.0
        %2528 = vmatprep.subr.mxu0 0.0
        %2529 = vmatpush1.msra.mxu0 0.0
        %2530 = vmatprep.subr.mxu0 0.0
        %2531 = vmatpush1.msra.mxu0 0.0
        %2532 = vmatprep.subr.mxu0 0.0
        %2533 = vmatpush1.msra.mxu0 0.0
        %2534 = vmatprep.subr.mxu0 0.0
        %2535 = vmatpush1.msra.mxu0 0.0
        %2536 = vmatprep.subr.mxu0 0.0
        %2537 = vmatpush1.msra.mxu0 0.0
        %2538 = vmatprep.subr.mxu0 0.0
        %2539 = vmatpush1.msra.mxu0 0.0
        %2540 = vmatprep.subr.mxu0 0.0
        %2541 = vmatpush1.msra.mxu0 0.0
        %2542 = vmatprep.subr.mxu0 0.0
        %2543 = vmatpush1.msra.mxu0 0.0
        %2544 = vmatprep.subr.mxu0 0.0
        %2545 = vmatpush1.msra.mxu0 0.0
        %2546 = vmatprep.subr.mxu0 0.0
        %2547 = vmatpush1.msra.mxu0 0.0
        %2548 = vmatprep.subr.mxu0 0.0
        %2549 = vmatpush1.msra.mxu0 0.0
        %2550 = vmatprep.subr.mxu0 0.0
        %2551 = vmatpush1.msra.mxu0 0.0
        %2552 = vmatprep.subr.mxu0 0.0
        %2553 = vmatpush1.msra.mxu0 0.0
        %2554 = vmatprep.subr.mxu0 0.0
        %2555 = vmatpush1.msra.mxu0 0.0
        %2556 = vmatprep.subr.mxu0 0.0
        %2557 = vmatpush1.msra.mxu0 0.0
        %2558 = vmatprep.subr.mxu0 0.0
        %2559 = vmatpush1.msra.mxu0 0.0
        %2560 = vmatprep.subr.mxu0 0.0
        %2561 = vmatpush1.msra.mxu0 0.0
        %2562 = vmatprep.subr.mxu0 0.0
        %2563 = vmatpush1.msra.mxu0 0.0
        %2564 = vmatprep.mubr.f32.mxu0 0.0
        %2565 = vmatmul.mubr.f32.gmra.mrb[0].mxu0 %v2427
        %v2566 = vpop.f32.mrb[0].mxu0
        %v2567 = vadd.f32 0.0, %v2566
        %v2568 = vpop.f32.mrb[0].mxu0
        %2569 = vdwg.mxu0
        %v2570 = vadd.f32 %v2410, %v2496
        %v2571 = vadd.f32 %v2411, %v2498
        %v2572 = vadd.f32 %v2412, %v2567
        %s2573 = scalar_lea.vmem %s2, 32
        %v2574 = vld [vmem:[%s2573] sm:$0xff]
        %2575 = vrot.lane.b32.xlu0 %v1944, 109
        %v2576 = vpop.permute.xlu0 %2575
        %2577 = vrot.lane.b32.xlu0 %v1945, 109
        %v2578 = vpop.permute.xlu0 %2577
        %2579 = vrot.lane.b32.xlu0 %v1946, 109
        %v2580 = vpop.permute.xlu0 %2579
        %v2581 = vsel %vm976, %v2576, %v2578
        %v2582 = vsel %vm976, %v2578, %v2580
        %v2587 = vsel %vm1964, %v2574, 0
        %2589 = vmatprep.subr.mxu0 %v2582
        %2590 = vmatpush1.msra.mxu0 %v2581
        %2591 = vmatprep.subr.mxu0 0.0
        %2592 = vmatpush1.msra.mxu0 0.0
        %2593 = vmatprep.subr.mxu0 0.0
        %2594 = vmatpush1.msra.mxu0 0.0
        %2595 = vmatprep.subr.mxu0 0.0
        %2596 = vmatpush1.msra.mxu0 0.0
        %2597 = vmatprep.subr.mxu0 0.0
        %2598 = vmatpush1.msra.mxu0 0.0
        %2599 = vmatprep.subr.mxu0 0.0
        %2600 = vmatpush1.msra.mxu0 0.0
        %2601 = vmatprep.subr.mxu0 0.0
        %2602 = vmatpush1.msra.mxu0 0.0
        %2603 = vmatprep.subr.mxu0 0.0
        %2604 = vmatpush1.msra.mxu0 0.0
        %2605 = vmatprep.subr.mxu0 0.0
        %2606 = vmatpush1.msra.mxu0 0.0
        %2607 = vmatprep.subr.mxu0 0.0
        %2608 = vmatpush1.msra.mxu0 0.0
        %2609 = vmatprep.subr.mxu0 0.0
        %2610 = vmatpush1.msra.mxu0 0.0
        %2611 = vmatprep.subr.mxu0 0.0
        %2612 = vmatpush1.msra.mxu0 0.0
        %2613 = vmatprep.subr.mxu0 0.0
        %2614 = vmatpush1.msra.mxu0 0.0
        %2615 = vmatprep.subr.mxu0 0.0
        %2616 = vmatpush1.msra.mxu0 0.0
        %2617 = vmatprep.subr.mxu0 0.0
        %2618 = vmatpush1.msra.mxu0 0.0
        %2619 = vmatprep.subr.mxu0 0.0
        %2620 = vmatpush1.msra.mxu0 0.0
        %2621 = vmatprep.subr.mxu0 0.0
        %2622 = vmatpush1.msra.mxu0 0.0
        %2623 = vmatprep.subr.mxu0 0.0
        %2624 = vmatpush1.msra.mxu0 0.0
        %2625 = vmatprep.subr.mxu0 0.0
        %2626 = vmatpush1.msra.mxu0 0.0
        %2627 = vmatprep.subr.mxu0 0.0
        %2628 = vmatpush1.msra.mxu0 0.0
        %2629 = vmatprep.subr.mxu0 0.0
        %2630 = vmatpush1.msra.mxu0 0.0
        %2631 = vmatprep.subr.mxu0 0.0
        %2632 = vmatpush1.msra.mxu0 0.0
        %2633 = vmatprep.subr.mxu0 0.0
        %2634 = vmatpush1.msra.mxu0 0.0
        %2635 = vmatprep.subr.mxu0 0.0
        %2636 = vmatpush1.msra.mxu0 0.0
        %2637 = vmatprep.subr.mxu0 0.0
        %2638 = vmatpush1.msra.mxu0 0.0
        %2639 = vmatprep.subr.mxu0 0.0
        %2640 = vmatpush1.msra.mxu0 0.0
        %2641 = vmatprep.subr.mxu0 0.0
        %2642 = vmatpush1.msra.mxu0 0.0
        %2643 = vmatprep.subr.mxu0 0.0
        %2644 = vmatpush1.msra.mxu0 0.0
        %2645 = vmatprep.subr.mxu0 0.0
        %2646 = vmatpush1.msra.mxu0 0.0
        %2647 = vmatprep.subr.mxu0 0.0
        %2648 = vmatpush1.msra.mxu0 0.0
        %2649 = vmatprep.subr.mxu0 0.0
        %2650 = vmatpush1.msra.mxu0 0.0
        %2651 = vmatprep.subr.mxu0 0.0
        %2652 = vmatpush1.msra.mxu0 0.0
        %2653 = vmatprep.mubr.f32.mxu0 0.0
        %2654 = vmatmul.mubr.f32.gmra.mrb[0].mxu0 %v2587
        %v2655 = vpop.f32.mrb[0].mxu0
        %v2656 = vadd.f32 0.0, %v2655
        %v2657 = vpop.f32.mrb[0].mxu0
        %v2658 = vadd.f32 0.0, %v2657
        %2659 = vdwg.mxu0
        %2660 = vmatprep.subr.mxu0 0.0
        %2661 = vmatpush1.msra.mxu0 %v2580
        %2662 = vmatprep.subr.mxu0 0.0
        %2663 = vmatpush1.msra.mxu0 0.0
        %2664 = vmatprep.subr.mxu0 0.0
        %2665 = vmatpush1.msra.mxu0 0.0
        %2666 = vmatprep.subr.mxu0 0.0
        %2667 = vmatpush1.msra.mxu0 0.0
        %2668 = vmatprep.subr.mxu0 0.0
        %2669 = vmatpush1.msra.mxu0 0.0
        %2670 = vmatprep.subr.mxu0 0.0
        %2671 = vmatpush1.msra.mxu0 0.0
        %2672 = vmatprep.subr.mxu0 0.0
        %2673 = vmatpush1.msra.mxu0 0.0
        %2674 = vmatprep.subr.mxu0 0.0
        %2675 = vmatpush1.msra.mxu0 0.0
        %2676 = vmatprep.subr.mxu0 0.0
        %2677 = vmatpush1.msra.mxu0 0.0
        %2678 = vmatprep.subr.mxu0 0.0
        %2679 = vmatpush1.msra.mxu0 0.0
        %2680 = vmatprep.subr.mxu0 0.0
        %2681 = vmatpush1.msra.mxu0 0.0
        %2682 = vmatprep.subr.mxu0 0.0
        %2683 = vmatpush1.msra.mxu0 0.0
        %2684 = vmatprep.subr.mxu0 0.0
        %2685 = vmatpush1.msra.mxu0 0.0
        %2686 = vmatprep.subr.mxu0 0.0
        %2687 = vmatpush1.msra.mxu0 0.0
        %2688 = vmatprep.subr.mxu0 0.0
        %2689 = vmatpush1.msra.mxu0 0.0
        %2690 = vmatprep.subr.mxu0 0.0
        %2691 = vmatpush1.msra.mxu0 0.0
        %2692 = vmatprep.subr.mxu0 0.0
        %2693 = vmatpush1.msra.mxu0 0.0
        %2694 = vmatprep.subr.mxu0 0.0
        %2695 = vmatpush1.msra.mxu0 0.0
        %2696 = vmatprep.subr.mxu0 0.0
        %2697 = vmatpush1.msra.mxu0 0.0
        %2698 = vmatprep.subr.mxu0 0.0
        %2699 = vmatpush1.msra.mxu0 0.0
        %2700 = vmatprep.subr.mxu0 0.0
        %2701 = vmatpush1.msra.mxu0 0.0
        %2702 = vmatprep.subr.mxu0 0.0
        %2703 = vmatpush1.msra.mxu0 0.0
        %2704 = vmatprep.subr.mxu0 0.0
        %2705 = vmatpush1.msra.mxu0 0.0
        %2706 = vmatprep.subr.mxu0 0.0
        %2707 = vmatpush1.msra.mxu0 0.0
        %2708 = vmatprep.subr.mxu0 0.0
        %2709 = vmatpush1.msra.mxu0 0.0
        %2710 = vmatprep.subr.mxu0 0.0
        %2711 = vmatpush1.msra.mxu0 0.0
        %2712 = vmatprep.subr.mxu0 0.0
        %2713 = vmatpush1.msra.mxu0 0.0
        %2714 = vmatprep.subr.mxu0 0.0
        %2715 = vmatpush1.msra.mxu0 0.0
        %2716 = vmatprep.subr.mxu0 0.0
        %2717 = vmatpush1.msra.mxu0 0.0
        %2718 = vmatprep.subr.mxu0 0.0
        %2719 = vmatpush1.msra.mxu0 0.0
        %2720 = vmatprep.subr.mxu0 0.0
        %2721 = vmatpush1.msra.mxu0 0.0
        %2722 = vmatprep.subr.mxu0 0.0
        %2723 = vmatpush1.msra.mxu0 0.0
        %2724 = vmatprep.mubr.f32.mxu0 0.0
        %2725 = vmatmul.mubr.f32.gmra.mrb[0].mxu0 %v2587
        %v2726 = vpop.f32.mrb[0].mxu0
        %v2727 = vadd.f32 0.0, %v2726
        %v2728 = vpop.f32.mrb[0].mxu0
        %2729 = vdwg.mxu0
        %v2730 = vadd.f32 %v2570, %v2656
        %v2731 = vadd.f32 %v2571, %v2658
        %v2732 = vadd.f32 %v2572, %v2727
        %s2733 = scalar_lea.vmem %s2, 40
        %v2734 = vld [vmem:[%s2733] sm:$0xff]
        %2735 = vrot.lane.b32.xlu0 %v1944, 108
        %v2736 = vpop.permute.xlu0 %2735
        %2737 = vrot.lane.b32.xlu0 %v1945, 108
        %v2738 = vpop.permute.xlu0 %2737
        %2739 = vrot.lane.b32.xlu0 %v1946, 108
        %v2740 = vpop.permute.xlu0 %2739
        %v2741 = vsel %vm1158, %v2736, %v2738
        %v2742 = vsel %vm1158, %v2738, %v2740
        %v2747 = vsel %vm1964, %v2734, 0
        %2749 = vmatprep.subr.mxu0 %v2742
        %2750 = vmatpush1.msra.mxu0 %v2741
        %2751 = vmatprep.subr.mxu0 0.0
        %2752 = vmatpush1.msra.mxu0 0.0
        %2753 = vmatprep.subr.mxu0 0.0
        %2754 = vmatpush1.msra.mxu0 0.0
        %2755 = vmatprep.subr.mxu0 0.0
        %2756 = vmatpush1.msra.mxu0 0.0
        %2757 = vmatprep.subr.mxu0 0.0
        %2758 = vmatpush1.msra.mxu0 0.0
        %2759 = vmatprep.subr.mxu0 0.0
        %2760 = vmatpush1.msra.mxu0 0.0
        %2761 = vmatprep.subr.mxu0 0.0
        %2762 = vmatpush1.msra.mxu0 0.0
        %2763 = vmatprep.subr.mxu0 0.0
        %2764 = vmatpush1.msra.mxu0 0.0
        %2765 = vmatprep.subr.mxu0 0.0
        %2766 = vmatpush1.msra.mxu0 0.0
        %2767 = vmatprep.subr.mxu0 0.0
        %2768 = vmatpush1.msra.mxu0 0.0
        %2769 = vmatprep.subr.mxu0 0.0
        %2770 = vmatpush1.msra.mxu0 0.0
        %2771 = vmatprep.subr.mxu0 0.0
        %2772 = vmatpush1.msra.mxu0 0.0
        %2773 = vmatprep.subr.mxu0 0.0
        %2774 = vmatpush1.msra.mxu0 0.0
        %2775 = vmatprep.subr.mxu0 0.0
        %2776 = vmatpush1.msra.mxu0 0.0
        %2777 = vmatprep.subr.mxu0 0.0
        %2778 = vmatpush1.msra.mxu0 0.0
        %2779 = vmatprep.subr.mxu0 0.0
        %2780 = vmatpush1.msra.mxu0 0.0
        %2781 = vmatprep.subr.mxu0 0.0
        %2782 = vmatpush1.msra.mxu0 0.0
        %2783 = vmatprep.subr.mxu0 0.0
        %2784 = vmatpush1.msra.mxu0 0.0
        %2785 = vmatprep.subr.mxu0 0.0
        %2786 = vmatpush1.msra.mxu0 0.0
        %2787 = vmatprep.subr.mxu0 0.0
        %2788 = vmatpush1.msra.mxu0 0.0
        %2789 = vmatprep.subr.mxu0 0.0
        %2790 = vmatpush1.msra.mxu0 0.0
        %2791 = vmatprep.subr.mxu0 0.0
        %2792 = vmatpush1.msra.mxu0 0.0
        %2793 = vmatprep.subr.mxu0 0.0
        %2794 = vmatpush1.msra.mxu0 0.0
        %2795 = vmatprep.subr.mxu0 0.0
        %2796 = vmatpush1.msra.mxu0 0.0
        %2797 = vmatprep.subr.mxu0 0.0
        %2798 = vmatpush1.msra.mxu0 0.0
        %2799 = vmatprep.subr.mxu0 0.0
        %2800 = vmatpush1.msra.mxu0 0.0
        %2801 = vmatprep.subr.mxu0 0.0
        %2802 = vmatpush1.msra.mxu0 0.0
        %2803 = vmatprep.subr.mxu0 0.0
        %2804 = vmatpush1.msra.mxu0 0.0
        %2805 = vmatprep.subr.mxu0 0.0
        %2806 = vmatpush1.msra.mxu0 0.0
        %2807 = vmatprep.subr.mxu0 0.0
        %2808 = vmatpush1.msra.mxu0 0.0
        %2809 = vmatprep.subr.mxu0 0.0
        %2810 = vmatpush1.msra.mxu0 0.0
        %2811 = vmatprep.subr.mxu0 0.0
        %2812 = vmatpush1.msra.mxu0 0.0
        %2813 = vmatprep.mubr.f32.mxu0 0.0
        %2814 = vmatmul.mubr.f32.gmra.mrb[0].mxu0 %v2747
        %v2815 = vpop.f32.mrb[0].mxu0
        %v2816 = vadd.f32 0.0, %v2815
        %v2817 = vpop.f32.mrb[0].mxu0
        %v2818 = vadd.f32 0.0, %v2817
        %2819 = vdwg.mxu0
        %2820 = vmatprep.subr.mxu0 0.0
        %2821 = vmatpush1.msra.mxu0 %v2740
        %2822 = vmatprep.subr.mxu0 0.0
        %2823 = vmatpush1.msra.mxu0 0.0
        %2824 = vmatprep.subr.mxu0 0.0
        %2825 = vmatpush1.msra.mxu0 0.0
        %2826 = vmatprep.subr.mxu0 0.0
        %2827 = vmatpush1.msra.mxu0 0.0
        %2828 = vmatprep.subr.mxu0 0.0
        %2829 = vmatpush1.msra.mxu0 0.0
        %2830 = vmatprep.subr.mxu0 0.0
        %2831 = vmatpush1.msra.mxu0 0.0
        %2832 = vmatprep.subr.mxu0 0.0
        %2833 = vmatpush1.msra.mxu0 0.0
        %2834 = vmatprep.subr.mxu0 0.0
        %2835 = vmatpush1.msra.mxu0 0.0
        %2836 = vmatprep.subr.mxu0 0.0
        %2837 = vmatpush1.msra.mxu0 0.0
        %2838 = vmatprep.subr.mxu0 0.0
        %2839 = vmatpush1.msra.mxu0 0.0
        %2840 = vmatprep.subr.mxu0 0.0
        %2841 = vmatpush1.msra.mxu0 0.0
        %2842 = vmatprep.subr.mxu0 0.0
        %2843 = vmatpush1.msra.mxu0 0.0
        %2844 = vmatprep.subr.mxu0 0.0
        %2845 = vmatpush1.msra.mxu0 0.0
        %2846 = vmatprep.subr.mxu0 0.0
        %2847 = vmatpush1.msra.mxu0 0.0
        %2848 = vmatprep.subr.mxu0 0.0
        %2849 = vmatpush1.msra.mxu0 0.0
        %2850 = vmatprep.subr.mxu0 0.0
        %2851 = vmatpush1.msra.mxu0 0.0
        %2852 = vmatprep.subr.mxu0 0.0
        %2853 = vmatpush1.msra.mxu0 0.0
        %2854 = vmatprep.subr.mxu0 0.0
        %2855 = vmatpush1.msra.mxu0 0.0
        %2856 = vmatprep.subr.mxu0 0.0
        %2857 = vmatpush1.msra.mxu0 0.0
        %2858 = vmatprep.subr.mxu0 0.0
        %2859 = vmatpush1.msra.mxu0 0.0
        %2860 = vmatprep.subr.mxu0 0.0
        %2861 = vmatpush1.msra.mxu0 0.0
        %2862 = vmatprep.subr.mxu0 0.0
        %2863 = vmatpush1.msra.mxu0 0.0
        %2864 = vmatprep.subr.mxu0 0.0
        %2865 = vmatpush1.msra.mxu0 0.0
        %2866 = vmatprep.subr.mxu0 0.0
        %2867 = vmatpush1.msra.mxu0 0.0
        %2868 = vmatprep.subr.mxu0 0.0
        %2869 = vmatpush1.msra.mxu0 0.0
        %2870 = vmatprep.subr.mxu0 0.0
        %2871 = vmatpush1.msra.mxu0 0.0
        %2872 = vmatprep.subr.mxu0 0.0
        %2873 = vmatpush1.msra.mxu0 0.0
        %2874 = vmatprep.subr.mxu0 0.0
        %2875 = vmatpush1.msra.mxu0 0.0
        %2876 = vmatprep.subr.mxu0 0.0
        %2877 = vmatpush1.msra.mxu0 0.0
        %2878 = vmatprep.subr.mxu0 0.0
        %2879 = vmatpush1.msra.mxu0 0.0
        %2880 = vmatprep.subr.mxu0 0.0
        %2881 = vmatpush1.msra.mxu0 0.0
        %2882 = vmatprep.subr.mxu0 0.0
        %2883 = vmatpush1.msra.mxu0 0.0
        %2884 = vmatprep.mubr.f32.mxu0 0.0
        %2885 = vmatmul.mubr.f32.gmra.mrb[0].mxu0 %v2747
        %v2886 = vpop.f32.mrb[0].mxu0
        %v2887 = vadd.f32 0.0, %v2886
        %v2888 = vpop.f32.mrb[0].mxu0
        %2889 = vdwg.mxu0
        %v2890 = vadd.f32 %v2730, %v2816
        %v2891 = vadd.f32 %v2731, %v2818
        %v2892 = vadd.f32 %v2732, %v2887
        %s2893 = scalar_lea.vmem %s2, 48
        %v2894 = vld [vmem:[%s2893] sm:$0xff]
        %2895 = vrot.lane.b32.xlu0 %v1944, 92
        %v2896 = vpop.permute.xlu0 %2895
        %2897 = vrot.lane.b32.xlu0 %v1945, 92
        %v2898 = vpop.permute.xlu0 %2897
        %2899 = vrot.lane.b32.xlu0 %v1946, 92
        %v2900 = vpop.permute.xlu0 %2899
        %v2901 = vsel %vm1340, %v2896, %v2898
        %v2902 = vsel %vm1340, %v2898, %v2900
        %v2907 = vsel %vm1964, %v2894, 0
        %2909 = vmatprep.subr.mxu0 %v2902
        %2910 = vmatpush1.msra.mxu0 %v2901
        %2911 = vmatprep.subr.mxu0 0.0
        %2912 = vmatpush1.msra.mxu0 0.0
        %2913 = vmatprep.subr.mxu0 0.0
        %2914 = vmatpush1.msra.mxu0 0.0
        %2915 = vmatprep.subr.mxu0 0.0
        %2916 = vmatpush1.msra.mxu0 0.0
        %2917 = vmatprep.subr.mxu0 0.0
        %2918 = vmatpush1.msra.mxu0 0.0
        %2919 = vmatprep.subr.mxu0 0.0
        %2920 = vmatpush1.msra.mxu0 0.0
        %2921 = vmatprep.subr.mxu0 0.0
        %2922 = vmatpush1.msra.mxu0 0.0
        %2923 = vmatprep.subr.mxu0 0.0
        %2924 = vmatpush1.msra.mxu0 0.0
        %2925 = vmatprep.subr.mxu0 0.0
        %2926 = vmatpush1.msra.mxu0 0.0
        %2927 = vmatprep.subr.mxu0 0.0
        %2928 = vmatpush1.msra.mxu0 0.0
        %2929 = vmatprep.subr.mxu0 0.0
        %2930 = vmatpush1.msra.mxu0 0.0
        %2931 = vmatprep.subr.mxu0 0.0
        %2932 = vmatpush1.msra.mxu0 0.0
        %2933 = vmatprep.subr.mxu0 0.0
        %2934 = vmatpush1.msra.mxu0 0.0
        %2935 = vmatprep.subr.mxu0 0.0
        %2936 = vmatpush1.msra.mxu0 0.0
        %2937 = vmatprep.subr.mxu0 0.0
        %2938 = vmatpush1.msra.mxu0 0.0
        %2939 = vmatprep.subr.mxu0 0.0
        %2940 = vmatpush1.msra.mxu0 0.0
        %2941 = vmatprep.subr.mxu0 0.0
        %2942 = vmatpush1.msra.mxu0 0.0
        %2943 = vmatprep.subr.mxu0 0.0
        %2944 = vmatpush1.msra.mxu0 0.0
        %2945 = vmatprep.subr.mxu0 0.0
        %2946 = vmatpush1.msra.mxu0 0.0
        %2947 = vmatprep.subr.mxu0 0.0
        %2948 = vmatpush1.msra.mxu0 0.0
        %2949 = vmatprep.subr.mxu0 0.0
        %2950 = vmatpush1.msra.mxu0 0.0
        %2951 = vmatprep.subr.mxu0 0.0
        %2952 = vmatpush1.msra.mxu0 0.0
        %2953 = vmatprep.subr.mxu0 0.0
        %2954 = vmatpush1.msra.mxu0 0.0
        %2955 = vmatprep.subr.mxu0 0.0
        %2956 = vmatpush1.msra.mxu0 0.0
        %2957 = vmatprep.subr.mxu0 0.0
        %2958 = vmatpush1.msra.mxu0 0.0
        %2959 = vmatprep.subr.mxu0 0.0
        %2960 = vmatpush1.msra.mxu0 0.0
        %2961 = vmatprep.subr.mxu0 0.0
        %2962 = vmatpush1.msra.mxu0 0.0
        %2963 = vmatprep.subr.mxu0 0.0
        %2964 = vmatpush1.msra.mxu0 0.0
        %2965 = vmatprep.subr.mxu0 0.0
        %2966 = vmatpush1.msra.mxu0 0.0
        %2967 = vmatprep.subr.mxu0 0.0
        %2968 = vmatpush1.msra.mxu0 0.0
        %2969 = vmatprep.subr.mxu0 0.0
        %2970 = vmatpush1.msra.mxu0 0.0
        %2971 = vmatprep.subr.mxu0 0.0
        %2972 = vmatpush1.msra.mxu0 0.0
        %2973 = vmatprep.mubr.f32.mxu0 0.0
        %2974 = vmatmul.mubr.f32.gmra.mrb[0].mxu0 %v2907
        %v2975 = vpop.f32.mrb[0].mxu0
        %v2976 = vadd.f32 0.0, %v2975
        %v2977 = vpop.f32.mrb[0].mxu0
        %v2978 = vadd.f32 0.0, %v2977
        %2979 = vdwg.mxu0
        %2980 = vmatprep.subr.mxu0 0.0
        %2981 = vmatpush1.msra.mxu0 %v2900
        %2982 = vmatprep.subr.mxu0 0.0
        %2983 = vmatpush1.msra.mxu0 0.0
        %2984 = vmatprep.subr.mxu0 0.0
        %2985 = vmatpush1.msra.mxu0 0.0
        %2986 = vmatprep.subr.mxu0 0.0
        %2987 = vmatpush1.msra.mxu0 0.0
        %2988 = vmatprep.subr.mxu0 0.0
        %2989 = vmatpush1.msra.mxu0 0.0
        %2990 = vmatprep.subr.mxu0 0.0
        %2991 = vmatpush1.msra.mxu0 0.0
        %2992 = vmatprep.subr.mxu0 0.0
        %2993 = vmatpush1.msra.mxu0 0.0
        %2994 = vmatprep.subr.mxu0 0.0
        %2995 = vmatpush1.msra.mxu0 0.0
        %2996 = vmatprep.subr.mxu0 0.0
        %2997 = vmatpush1.msra.mxu0 0.0
        %2998 = vmatprep.subr.mxu0 0.0
        %2999 = vmatpush1.msra.mxu0 0.0
        %3000 = vmatprep.subr.mxu0 0.0
        %3001 = vmatpush1.msra.mxu0 0.0
        %3002 = vmatprep.subr.mxu0 0.0
        %3003 = vmatpush1.msra.mxu0 0.0
        %3004 = vmatprep.subr.mxu0 0.0
        %3005 = vmatpush1.msra.mxu0 0.0
        %3006 = vmatprep.subr.mxu0 0.0
        %3007 = vmatpush1.msra.mxu0 0.0
        %3008 = vmatprep.subr.mxu0 0.0
        %3009 = vmatpush1.msra.mxu0 0.0
        %3010 = vmatprep.subr.mxu0 0.0
        %3011 = vmatpush1.msra.mxu0 0.0
        %3012 = vmatprep.subr.mxu0 0.0
        %3013 = vmatpush1.msra.mxu0 0.0
        %3014 = vmatprep.subr.mxu0 0.0
        %3015 = vmatpush1.msra.mxu0 0.0
        %3016 = vmatprep.subr.mxu0 0.0
        %3017 = vmatpush1.msra.mxu0 0.0
        %3018 = vmatprep.subr.mxu0 0.0
        %3019 = vmatpush1.msra.mxu0 0.0
        %3020 = vmatprep.subr.mxu0 0.0
        %3021 = vmatpush1.msra.mxu0 0.0
        %3022 = vmatprep.subr.mxu0 0.0
        %3023 = vmatpush1.msra.mxu0 0.0
        %3024 = vmatprep.subr.mxu0 0.0
        %3025 = vmatpush1.msra.mxu0 0.0
        %3026 = vmatprep.subr.mxu0 0.0
        %3027 = vmatpush1.msra.mxu0 0.0
        %3028 = vmatprep.subr.mxu0 0.0
        %3029 = vmatpush1.msra.mxu0 0.0
        %3030 = vmatprep.subr.mxu0 0.0
        %3031 = vmatpush1.msra.mxu0 0.0
        %3032 = vmatprep.subr.mxu0 0.0
        %3033 = vmatpush1.msra.mxu0 0.0
        %3034 = vmatprep.subr.mxu0 0.0
        %3035 = vmatpush1.msra.mxu0 0.0
        %3036 = vmatprep.subr.mxu0 0.0
        %3037 = vmatpush1.msra.mxu0 0.0
        %3038 = vmatprep.subr.mxu0 0.0
        %3039 = vmatpush1.msra.mxu0 0.0
        %3040 = vmatprep.subr.mxu0 0.0
        %3041 = vmatpush1.msra.mxu0 0.0
        %3042 = vmatprep.subr.mxu0 0.0
        %3043 = vmatpush1.msra.mxu0 0.0
        %3044 = vmatprep.mubr.f32.mxu0 0.0
        %3045 = vmatmul.mubr.f32.gmra.mrb[0].mxu0 %v2907
        %v3046 = vpop.f32.mrb[0].mxu0
        %v3047 = vadd.f32 0.0, %v3046
        %v3048 = vpop.f32.mrb[0].mxu0
        %3049 = vdwg.mxu0
        %v3050 = vadd.f32 %v2890, %v2976
        %v3051 = vadd.f32 %v2891, %v2978
        %v3052 = vadd.f32 %v2892, %v3047
        %s3053 = scalar_lea.vmem %s2, 56
        %v3054 = vld [vmem:[%s3053] sm:$0xff]
        %3055 = vrot.lane.b32.xlu0 %v1944, 91
        %v3056 = vpop.permute.xlu0 %3055
        %3057 = vrot.lane.b32.xlu0 %v1945, 91
        %v3058 = vpop.permute.xlu0 %3057
        %3059 = vrot.lane.b32.xlu0 %v1946, 91
        %v3060 = vpop.permute.xlu0 %3059
        %v3061 = vsel %vm1522, %v3056, %v3058
        %v3062 = vsel %vm1522, %v3058, %v3060
        %v3067 = vsel %vm1964, %v3054, 0
        %3069 = vmatprep.subr.mxu0 %v3062
        %3070 = vmatpush1.msra.mxu0 %v3061
        %3071 = vmatprep.subr.mxu0 0.0
        %3072 = vmatpush1.msra.mxu0 0.0
        %3073 = vmatprep.subr.mxu0 0.0
        %3074 = vmatpush1.msra.mxu0 0.0
        %3075 = vmatprep.subr.mxu0 0.0
        %3076 = vmatpush1.msra.mxu0 0.0
        %3077 = vmatprep.subr.mxu0 0.0
        %3078 = vmatpush1.msra.mxu0 0.0
        %3079 = vmatprep.subr.mxu0 0.0
        %3080 = vmatpush1.msra.mxu0 0.0
        %3081 = vmatprep.subr.mxu0 0.0
        %3082 = vmatpush1.msra.mxu0 0.0
        %3083 = vmatprep.subr.mxu0 0.0
        %3084 = vmatpush1.msra.mxu0 0.0
        %3085 = vmatprep.subr.mxu0 0.0
        %3086 = vmatpush1.msra.mxu0 0.0
        %3087 = vmatprep.subr.mxu0 0.0
        %3088 = vmatpush1.msra.mxu0 0.0
        %3089 = vmatprep.subr.mxu0 0.0
        %3090 = vmatpush1.msra.mxu0 0.0
        %3091 = vmatprep.subr.mxu0 0.0
        %3092 = vmatpush1.msra.mxu0 0.0
        %3093 = vmatprep.subr.mxu0 0.0
        %3094 = vmatpush1.msra.mxu0 0.0
        %3095 = vmatprep.subr.mxu0 0.0
        %3096 = vmatpush1.msra.mxu0 0.0
        %3097 = vmatprep.subr.mxu0 0.0
        %3098 = vmatpush1.msra.mxu0 0.0
        %3099 = vmatprep.subr.mxu0 0.0
        %3100 = vmatpush1.msra.mxu0 0.0
        %3101 = vmatprep.subr.mxu0 0.0
        %3102 = vmatpush1.msra.mxu0 0.0
        %3103 = vmatprep.subr.mxu0 0.0
        %3104 = vmatpush1.msra.mxu0 0.0
        %3105 = vmatprep.subr.mxu0 0.0
        %3106 = vmatpush1.msra.mxu0 0.0
        %3107 = vmatprep.subr.mxu0 0.0
        %3108 = vmatpush1.msra.mxu0 0.0
        %3109 = vmatprep.subr.mxu0 0.0
        %3110 = vmatpush1.msra.mxu0 0.0
        %3111 = vmatprep.subr.mxu0 0.0
        %3112 = vmatpush1.msra.mxu0 0.0
        %3113 = vmatprep.subr.mxu0 0.0
        %3114 = vmatpush1.msra.mxu0 0.0
        %3115 = vmatprep.subr.mxu0 0.0
        %3116 = vmatpush1.msra.mxu0 0.0
        %3117 = vmatprep.subr.mxu0 0.0
        %3118 = vmatpush1.msra.mxu0 0.0
        %3119 = vmatprep.subr.mxu0 0.0
        %3120 = vmatpush1.msra.mxu0 0.0
        %3121 = vmatprep.subr.mxu0 0.0
        %3122 = vmatpush1.msra.mxu0 0.0
        %3123 = vmatprep.subr.mxu0 0.0
        %3124 = vmatpush1.msra.mxu0 0.0
        %3125 = vmatprep.subr.mxu0 0.0
        %3126 = vmatpush1.msra.mxu0 0.0
        %3127 = vmatprep.subr.mxu0 0.0
        %3128 = vmatpush1.msra.mxu0 0.0
        %3129 = vmatprep.subr.mxu0 0.0
        %3130 = vmatpush1.msra.mxu0 0.0
        %3131 = vmatprep.subr.mxu0 0.0
        %3132 = vmatpush1.msra.mxu0 0.0
        %3133 = vmatprep.mubr.f32.mxu0 0.0
        %3134 = vmatmul.mubr.f32.gmra.mrb[0].mxu0 %v3067
        %v3135 = vpop.f32.mrb[0].mxu0
        %v3136 = vadd.f32 0.0, %v3135
        %v3137 = vpop.f32.mrb[0].mxu0
        %v3138 = vadd.f32 0.0, %v3137
        %3139 = vdwg.mxu0
        %3140 = vmatprep.subr.mxu0 0.0
        %3141 = vmatpush1.msra.mxu0 %v3060
        %3142 = vmatprep.subr.mxu0 0.0
        %3143 = vmatpush1.msra.mxu0 0.0
        %3144 = vmatprep.subr.mxu0 0.0
        %3145 = vmatpush1.msra.mxu0 0.0
        %3146 = vmatprep.subr.mxu0 0.0
        %3147 = vmatpush1.msra.mxu0 0.0
        %3148 = vmatprep.subr.mxu0 0.0
        %3149 = vmatpush1.msra.mxu0 0.0
        %3150 = vmatprep.subr.mxu0 0.0
        %3151 = vmatpush1.msra.mxu0 0.0
        %3152 = vmatprep.subr.mxu0 0.0
        %3153 = vmatpush1.msra.mxu0 0.0
        %3154 = vmatprep.subr.mxu0 0.0
        %3155 = vmatpush1.msra.mxu0 0.0
        %3156 = vmatprep.subr.mxu0 0.0
        %3157 = vmatpush1.msra.mxu0 0.0
        %3158 = vmatprep.subr.mxu0 0.0
        %3159 = vmatpush1.msra.mxu0 0.0
        %3160 = vmatprep.subr.mxu0 0.0
        %3161 = vmatpush1.msra.mxu0 0.0
        %3162 = vmatprep.subr.mxu0 0.0
        %3163 = vmatpush1.msra.mxu0 0.0
        %3164 = vmatprep.subr.mxu0 0.0
        %3165 = vmatpush1.msra.mxu0 0.0
        %3166 = vmatprep.subr.mxu0 0.0
        %3167 = vmatpush1.msra.mxu0 0.0
        %3168 = vmatprep.subr.mxu0 0.0
        %3169 = vmatpush1.msra.mxu0 0.0
        %3170 = vmatprep.subr.mxu0 0.0
        %3171 = vmatpush1.msra.mxu0 0.0
        %3172 = vmatprep.subr.mxu0 0.0
        %3173 = vmatpush1.msra.mxu0 0.0
        %3174 = vmatprep.subr.mxu0 0.0
        %3175 = vmatpush1.msra.mxu0 0.0
        %3176 = vmatprep.subr.mxu0 0.0
        %3177 = vmatpush1.msra.mxu0 0.0
        %3178 = vmatprep.subr.mxu0 0.0
        %3179 = vmatpush1.msra.mxu0 0.0
        %3180 = vmatprep.subr.mxu0 0.0
        %3181 = vmatpush1.msra.mxu0 0.0
        %3182 = vmatprep.subr.mxu0 0.0
        %3183 = vmatpush1.msra.mxu0 0.0
        %3184 = vmatprep.subr.mxu0 0.0
        %3185 = vmatpush1.msra.mxu0 0.0
        %3186 = vmatprep.subr.mxu0 0.0
        %3187 = vmatpush1.msra.mxu0 0.0
        %3188 = vmatprep.subr.mxu0 0.0
        %3189 = vmatpush1.msra.mxu0 0.0
        %3190 = vmatprep.subr.mxu0 0.0
        %3191 = vmatpush1.msra.mxu0 0.0
        %3192 = vmatprep.subr.mxu0 0.0
        %3193 = vmatpush1.msra.mxu0 0.0
        %3194 = vmatprep.subr.mxu0 0.0
        %3195 = vmatpush1.msra.mxu0 0.0
        %3196 = vmatprep.subr.mxu0 0.0
        %3197 = vmatpush1.msra.mxu0 0.0
        %3198 = vmatprep.subr.mxu0 0.0
        %3199 = vmatpush1.msra.mxu0 0.0
        %3200 = vmatprep.subr.mxu0 0.0
        %3201 = vmatpush1.msra.mxu0 0.0
        %3202 = vmatprep.subr.mxu0 0.0
        %3203 = vmatpush1.msra.mxu0 0.0
        %3204 = vmatprep.mubr.f32.mxu0 0.0
        %3205 = vmatmul.mubr.f32.gmra.mrb[0].mxu0 %v3067
        %v3206 = vpop.f32.mrb[0].mxu0
        %v3207 = vadd.f32 0.0, %v3206
        %v3208 = vpop.f32.mrb[0].mxu0
        %3209 = vdwg.mxu0
        %v3210 = vadd.f32 %v3050, %v3136
        %v3211 = vadd.f32 %v3051, %v3138
        %v3212 = vadd.f32 %v3052, %v3207
        %s3213 = scalar_lea.vmem %s2, 64
        %v3214 = vld [vmem:[%s3213] sm:$0xff]
        %3215 = vrot.lane.b32.xlu0 %v1944, 90
        %v3216 = vpop.permute.xlu0 %3215
        %3217 = vrot.lane.b32.xlu0 %v1945, 90
        %v3218 = vpop.permute.xlu0 %3217
        %3219 = vrot.lane.b32.xlu0 %v1946, 90
        %v3220 = vpop.permute.xlu0 %3219
        %v3221 = vsel %vm1704, %v3216, %v3218
        %v3222 = vsel %vm1704, %v3218, %v3220
        %v3227 = vsel %vm1964, %v3214, 0
        %3229 = vmatprep.subr.mxu0 %v3222
        %3230 = vmatpush1.msra.mxu0 %v3221
        %3231 = vmatprep.subr.mxu0 0.0
        %3232 = vmatpush1.msra.mxu0 0.0
        %3233 = vmatprep.subr.mxu0 0.0
        %3234 = vmatpush1.msra.mxu0 0.0
        %3235 = vmatprep.subr.mxu0 0.0
        %3236 = vmatpush1.msra.mxu0 0.0
        %3237 = vmatprep.subr.mxu0 0.0
        %3238 = vmatpush1.msra.mxu0 0.0
        %3239 = vmatprep.subr.mxu0 0.0
        %3240 = vmatpush1.msra.mxu0 0.0
        %3241 = vmatprep.subr.mxu0 0.0
        %3242 = vmatpush1.msra.mxu0 0.0
        %3243 = vmatprep.subr.mxu0 0.0
        %3244 = vmatpush1.msra.mxu0 0.0
        %3245 = vmatprep.subr.mxu0 0.0
        %3246 = vmatpush1.msra.mxu0 0.0
        %3247 = vmatprep.subr.mxu0 0.0
        %3248 = vmatpush1.msra.mxu0 0.0
        %3249 = vmatprep.subr.mxu0 0.0
        %3250 = vmatpush1.msra.mxu0 0.0
        %3251 = vmatprep.subr.mxu0 0.0
        %3252 = vmatpush1.msra.mxu0 0.0
        %3253 = vmatprep.subr.mxu0 0.0
        %3254 = vmatpush1.msra.mxu0 0.0
        %3255 = vmatprep.subr.mxu0 0.0
        %3256 = vmatpush1.msra.mxu0 0.0
        %3257 = vmatprep.subr.mxu0 0.0
        %3258 = vmatpush1.msra.mxu0 0.0
        %3259 = vmatprep.subr.mxu0 0.0
        %3260 = vmatpush1.msra.mxu0 0.0
        %3261 = vmatprep.subr.mxu0 0.0
        %3262 = vmatpush1.msra.mxu0 0.0
        %3263 = vmatprep.subr.mxu0 0.0
        %3264 = vmatpush1.msra.mxu0 0.0
        %3265 = vmatprep.subr.mxu0 0.0
        %3266 = vmatpush1.msra.mxu0 0.0
        %3267 = vmatprep.subr.mxu0 0.0
        %3268 = vmatpush1.msra.mxu0 0.0
        %3269 = vmatprep.subr.mxu0 0.0
        %3270 = vmatpush1.msra.mxu0 0.0
        %3271 = vmatprep.subr.mxu0 0.0
        %3272 = vmatpush1.msra.mxu0 0.0
        %3273 = vmatprep.subr.mxu0 0.0
        %3274 = vmatpush1.msra.mxu0 0.0
        %3275 = vmatprep.subr.mxu0 0.0
        %3276 = vmatpush1.msra.mxu0 0.0
        %3277 = vmatprep.subr.mxu0 0.0
        %3278 = vmatpush1.msra.mxu0 0.0
        %3279 = vmatprep.subr.mxu0 0.0
        %3280 = vmatpush1.msra.mxu0 0.0
        %3281 = vmatprep.subr.mxu0 0.0
        %3282 = vmatpush1.msra.mxu0 0.0
        %3283 = vmatprep.subr.mxu0 0.0
        %3284 = vmatpush1.msra.mxu0 0.0
        %3285 = vmatprep.subr.mxu0 0.0
        %3286 = vmatpush1.msra.mxu0 0.0
        %3287 = vmatprep.subr.mxu0 0.0
        %3288 = vmatpush1.msra.mxu0 0.0
        %3289 = vmatprep.subr.mxu0 0.0
        %3290 = vmatpush1.msra.mxu0 0.0
        %3291 = vmatprep.subr.mxu0 0.0
        %3292 = vmatpush1.msra.mxu0 0.0
        %3293 = vmatprep.mubr.f32.mxu0 0.0
        %3294 = vmatmul.mubr.f32.gmra.mrb[0].mxu0 %v3227
        %v3295 = vpop.f32.mrb[0].mxu0
        %v3296 = vadd.f32 0.0, %v3295
        %v3297 = vpop.f32.mrb[0].mxu0
        %v3298 = vadd.f32 0.0, %v3297
        %3299 = vdwg.mxu0
        %3300 = vmatprep.subr.mxu0 0.0
        %3301 = vmatpush1.msra.mxu0 %v3220
        %3302 = vmatprep.subr.mxu0 0.0
        %3303 = vmatpush1.msra.mxu0 0.0
        %3304 = vmatprep.subr.mxu0 0.0
        %3305 = vmatpush1.msra.mxu0 0.0
        %3306 = vmatprep.subr.mxu0 0.0
        %3307 = vmatpush1.msra.mxu0 0.0
        %3308 = vmatprep.subr.mxu0 0.0
        %3309 = vmatpush1.msra.mxu0 0.0
        %3310 = vmatprep.subr.mxu0 0.0
        %3311 = vmatpush1.msra.mxu0 0.0
        %3312 = vmatprep.subr.mxu0 0.0
        %3313 = vmatpush1.msra.mxu0 0.0
        %3314 = vmatprep.subr.mxu0 0.0
        %3315 = vmatpush1.msra.mxu0 0.0
        %3316 = vmatprep.subr.mxu0 0.0
        %3317 = vmatpush1.msra.mxu0 0.0
        %3318 = vmatprep.subr.mxu0 0.0
        %3319 = vmatpush1.msra.mxu0 0.0
        %3320 = vmatprep.subr.mxu0 0.0
        %3321 = vmatpush1.msra.mxu0 0.0
        %3322 = vmatprep.subr.mxu0 0.0
        %3323 = vmatpush1.msra.mxu0 0.0
        %3324 = vmatprep.subr.mxu0 0.0
        %3325 = vmatpush1.msra.mxu0 0.0
        %3326 = vmatprep.subr.mxu0 0.0
        %3327 = vmatpush1.msra.mxu0 0.0
        %3328 = vmatprep.subr.mxu0 0.0
        %3329 = vmatpush1.msra.mxu0 0.0
        %3330 = vmatprep.subr.mxu0 0.0
        %3331 = vmatpush1.msra.mxu0 0.0
        %3332 = vmatprep.subr.mxu0 0.0
        %3333 = vmatpush1.msra.mxu0 0.0
        %3334 = vmatprep.subr.mxu0 0.0
        %3335 = vmatpush1.msra.mxu0 0.0
        %3336 = vmatprep.subr.mxu0 0.0
        %3337 = vmatpush1.msra.mxu0 0.0
        %3338 = vmatprep.subr.mxu0 0.0
        %3339 = vmatpush1.msra.mxu0 0.0
        %3340 = vmatprep.subr.mxu0 0.0
        %3341 = vmatpush1.msra.mxu0 0.0
        %3342 = vmatprep.subr.mxu0 0.0
        %3343 = vmatpush1.msra.mxu0 0.0
        %3344 = vmatprep.subr.mxu0 0.0
        %3345 = vmatpush1.msra.mxu0 0.0
        %3346 = vmatprep.subr.mxu0 0.0
        %3347 = vmatpush1.msra.mxu0 0.0
        %3348 = vmatprep.subr.mxu0 0.0
        %3349 = vmatpush1.msra.mxu0 0.0
        %3350 = vmatprep.subr.mxu0 0.0
        %3351 = vmatpush1.msra.mxu0 0.0
        %3352 = vmatprep.subr.mxu0 0.0
        %3353 = vmatpush1.msra.mxu0 0.0
        %3354 = vmatprep.subr.mxu0 0.0
        %3355 = vmatpush1.msra.mxu0 0.0
        %3356 = vmatprep.subr.mxu0 0.0
        %3357 = vmatpush1.msra.mxu0 0.0
        %3358 = vmatprep.subr.mxu0 0.0
        %3359 = vmatpush1.msra.mxu0 0.0
        %3360 = vmatprep.subr.mxu0 0.0
        %3361 = vmatpush1.msra.mxu0 0.0
        %3362 = vmatprep.subr.mxu0 0.0
        %3363 = vmatpush1.msra.mxu0 0.0
        %3364 = vmatprep.mubr.f32.mxu0 0.0
        %3365 = vmatmul.mubr.f32.gmra.mrb[0].mxu0 %v3227
        %v3366 = vpop.f32.mrb[0].mxu0
        %v3367 = vadd.f32 0.0, %v3366
        %v3368 = vpop.f32.mrb[0].mxu0
        %3369 = vdwg.mxu0
        %v3370 = vadd.f32 %v3210, %v3296
        %v3371 = vadd.f32 %v3211, %v3298
        %v3372 = vadd.f32 %v3212, %v3367
        %3373 = vset.pattern.permute.xlu0 3
        %3374 = vperm.xlu0 %3373, %v252
        %v3375 = vpop.permute.xlu0 %3374
        %v3377 = vmul.f32 %v3370, %v3375
        %v3378 = vmul.f32 %v3371, %v3375
        %v3379 = vmul.f32 %v3372, %v3375
        %3380 = vset.pattern.permute.xlu0 4
        %3381 = vperm.xlu0 %3380, %v252
        %v3382 = vpop.permute.xlu0 %3381
        %v3384 = vadd.f32 %v3377, %v3382
        %v3385 = vadd.f32 %v3378, %v3382
        %v3386 = vadd.f32 %v3379, %v3382
        %v3387 = vmax.f32 %v3384, 0.0
        %v3388 = vmax.f32 %v3385, 0.0
        %v3389 = vmax.f32 %v3386, 0.0
        %v3390 = vadd.f32 %v3387, %v1882
        %v3391 = vadd.f32 %v3388, %v1883
        %v3392 = vadd.f32 %v3389, %v1884
        %v3393 = vmul.f32 %v3390, %v1906
        %v3394 = vmul.f32 %v3391, %v1910
        %v3395 = vmul.f32 %v3392, %v1914
        %v3397 = vlaneseq
        %v3398 = vshrl.u32 %v3397, 7
        %v3399 = vsub.s32 0, %v3398
        %v3400 = vrot.slane %v255, %v3399
        %v3401 = vlaneseq
        %v3402 = vshrl.u32 %v3401, 7
        %v3403 = vsub.s32 1, %v3402
        %v3404 = vrot.slane %v255, %v3403
        %v3405 = vlaneseq
        %v3406 = vshrl.u32 %v3405, 7
        %v3407 = vsub.s32 2, %v3406
        %v3408 = vrot.slane %v255, %v3407
        %v3412 = vadd.f32 %v3393, %v3400
        %v3413 = vadd.f32 %v3394, %v3404
        %v3414 = vadd.f32 %v3395, %v3408
        %3418 = vrot.lane.b32.xlu0 %v3412, 19
        %v3419 = vpop.permute.xlu0 %3418
        %3420 = vrot.lane.b32.xlu0 %v3413, 19
        %v3421 = vpop.permute.xlu0 %3420
        %3422 = vrot.lane.b32.xlu0 %v3414, 19
        %v3423 = vpop.permute.xlu0 %3422
        %v3424 = vsel %vm1921, %v3419, %v3421
        %v3425 = vsel %vm1921, %v3421, %v3423
        %3429 = vst.msk [vmem:[#allocation2] sm:$0xff] %vm1939, %v3419
        %3430 = vst [vmem:[#allocation2 + $0x8] sm:$0xff] %v3424
        %3431 = vst.msk [vmem:[#allocation2 + $0x10] sm:$0xff] %vm1942, %v3425
        %v3432 = vld [vmem:[#allocation2] sm:$0xff]
        %v3433 = vld [vmem:[#allocation2 + $0x8] sm:$0xff]
        %v3434 = vld [vmem:[#allocation2 + $0x10] sm:$0xff]
        %3438 = vrot.lane.b32.xlu0 %v3432, 127
        %v3439 = vpop.permute.xlu0 %3438
        %3440 = vrot.lane.b32.xlu0 %v3433, 127
        %v3441 = vpop.permute.xlu0 %3440
        %3442 = vrot.lane.b32.xlu0 %v3434, 127
        %v3443 = vpop.permute.xlu0 %3442
        %v3444 = vsel %vm270, %v3439, %v3441
        %v3445 = vsel %vm270, %v3441, %v3443
        %v3449 = vmax.f32 %v3432, %v3444
        %v3450 = vmax.f32 %v3433, %v3445
        %v3451 = vmax.f32 %v3434, %v3443
        %3452 = vrot.lane.b32.xlu0 %v3432, 126
        %v3453 = vpop.permute.xlu0 %3452
        %3454 = vrot.lane.b32.xlu0 %v3433, 126
        %v3455 = vpop.permute.xlu0 %3454
        %3456 = vrot.lane.b32.xlu0 %v3434, 126
        %v3457 = vpop.permute.xlu0 %3456
        %v3458 = vsel %vm612, %v3453, %v3455
        %v3459 = vsel %vm612, %v3455, %v3457
        %v3463 = vmax.f32 %v3449, %v3458
        %v3464 = vmax.f32 %v3450, %v3459
        %v3465 = vmax.f32 %v3451, %v3457
        %3466 = vrot.lane.b32.xlu0 %v3432, 110
        %v3467 = vpop.permute.xlu0 %3466
        %3468 = vrot.lane.b32.xlu0 %v3433, 110
        %v3469 = vpop.permute.xlu0 %3468
        %3470 = vrot.lane.b32.xlu0 %v3434, 110
        %v3471 = vpop.permute.xlu0 %3470
        %v3472 = vsel %vm794, %v3467, %v3469
        %v3473 = vsel %vm794, %v3469, %v3471
        %v3477 = vmax.f32 %v3463, %v3472
        %v3478 = vmax.f32 %v3464, %v3473
        %v3479 = vmax.f32 %v3465, %v3471
        %3480 = vrot.lane.b32.xlu0 %v3432, 109
        %v3481 = vpop.permute.xlu0 %3480
        %3482 = vrot.lane.b32.xlu0 %v3433, 109
        %v3483 = vpop.permute.xlu0 %3482
        %3484 = vrot.lane.b32.xlu0 %v3434, 109
        %v3485 = vpop.permute.xlu0 %3484
        %v3486 = vsel %vm976, %v3481, %v3483
        %v3487 = vsel %vm976, %v3483, %v3485
        %v3491 = vmax.f32 %v3477, %v3486
        %v3492 = vmax.f32 %v3478, %v3487
        %v3493 = vmax.f32 %v3479, %v3485
        %3494 = vrot.lane.b32.xlu0 %v3432, 108
        %v3495 = vpop.permute.xlu0 %3494
        %3496 = vrot.lane.b32.xlu0 %v3433, 108
        %v3497 = vpop.permute.xlu0 %3496
        %3498 = vrot.lane.b32.xlu0 %v3434, 108
        %v3499 = vpop.permute.xlu0 %3498
        %v3500 = vsel %vm1158, %v3495, %v3497
        %v3501 = vsel %vm1158, %v3497, %v3499
        %v3505 = vmax.f32 %v3491, %v3500
        %v3506 = vmax.f32 %v3492, %v3501
        %v3507 = vmax.f32 %v3493, %v3499
        %3508 = vrot.lane.b32.xlu0 %v3432, 92
        %v3509 = vpop.permute.xlu0 %3508
        %3510 = vrot.lane.b32.xlu0 %v3433, 92
        %v3511 = vpop.permute.xlu0 %3510
        %3512 = vrot.lane.b32.xlu0 %v3434, 92
        %v3513 = vpop.permute.xlu0 %3512
        %v3514 = vsel %vm1340, %v3509, %v3511
        %v3515 = vsel %vm1340, %v3511, %v3513
        %v3519 = vmax.f32 %v3505, %v3514
        %v3520 = vmax.f32 %v3506, %v3515
        %v3521 = vmax.f32 %v3507, %v3513
        %3522 = vrot.lane.b32.xlu0 %v3432, 91
        %v3523 = vpop.permute.xlu0 %3522
        %3524 = vrot.lane.b32.xlu0 %v3433, 91
        %v3525 = vpop.permute.xlu0 %3524
        %3526 = vrot.lane.b32.xlu0 %v3434, 91
        %v3527 = vpop.permute.xlu0 %3526
        %v3528 = vsel %vm1522, %v3523, %v3525
        %v3529 = vsel %vm1522, %v3525, %v3527
        %v3533 = vmax.f32 %v3519, %v3528
        %v3534 = vmax.f32 %v3520, %v3529
        %v3535 = vmax.f32 %v3521, %v3527
        %3536 = vrot.lane.b32.xlu0 %v3432, 90
        %v3537 = vpop.permute.xlu0 %3536
        %3538 = vrot.lane.b32.xlu0 %v3433, 90
        %v3539 = vpop.permute.xlu0 %3538
        %3540 = vrot.lane.b32.xlu0 %v3434, 90
        %v3541 = vpop.permute.xlu0 %3540
        %v3542 = vsel %vm1704, %v3537, %v3539
        %v3543 = vsel %vm1704, %v3539, %v3541
        %v3547 = vmax.f32 %v3533, %v3542
        %v3548 = vmax.f32 %v3534, %v3543
        %v3549 = vmax.f32 %v3535, %v3541
        %v3550 = vld [vmem:[%s5] sm:$0xff]
        %v3551 = vld [vmem:[%s5 + $0x8] sm:$0xff]
        %v3552 = vld [vmem:[%s5 + $0x10] sm:$0xff]
        %v3553 = vld [vmem:[%s5 + $0x18] sm:$0xff]
        %v3554 = vld [vmem:[%s5 + $0x20] sm:$0xff]
        %v3555 = vld [vmem:[%s5 + $0x28] sm:$0xff]
        %v3556 = vld [vmem:[%s5 + $0x30] sm:$0xff]
        %v3557 = vld [vmem:[%s5 + $0x38] sm:$0xff]
        %v3558 = vld [vmem:[%s5 + $0x40] sm:$0xff]
        %v3559 = vld [vmem:[%s5 + $0x48] sm:$0xff]
        %v3560 = vld [vmem:[%s5 + $0x50] sm:$0xff]
        %v3561 = vld [vmem:[%s5 + $0x58] sm:$0xff]
        %v3562 = vld [vmem:[%s5 + $0x60] sm:$0xff]
        %v3563 = vld [vmem:[%s5 + $0x68] sm:$0xff]
        %v3564 = vld [vmem:[%s5 + $0x70] sm:$0xff]
        %v3565 = vld [vmem:[%s5 + $0x78] sm:$0xff]
        %v3566 = vld [vmem:[%s5 + $0x80] sm:$0xff]
        %v3567 = vld [vmem:[%s5 + $0x88] sm:$0xff]
        %v3568 = vld [vmem:[%s5 + $0x90] sm:$0xff]
        %v3569 = vld [vmem:[%s5 + $0x98] sm:$0xff]
        %v3570 = vld [vmem:[%s5 + $0xa0] sm:$0xff]
        %v3571 = vld [vmem:[%s5 + $0xa8] sm:$0xff]
        %v3572 = vld [vmem:[%s5 + $0xb0] sm:$0xff]
        %v3573 = vld [vmem:[%s5 + $0xb8] sm:$0xff]
        %v3574 = vld [vmem:[%s5 + $0xc0] sm:$0xff]
        %v3575 = vld [vmem:[%s5 + $0xc8] sm:$0xff]
        %v3576 = vld [vmem:[%s5 + $0xd0] sm:$0xff]
        %v3577 = vld [vmem:[%s5 + $0xd8] sm:$0xff]
        %v3578 = vld [vmem:[%s5 + $0xe0] sm:$0xff]
        %v3579 = vld [vmem:[%s5 + $0xe8] sm:$0xff]
        %v3580 = vld [vmem:[%s5 + $0xf0] sm:$0xff]
        %v3581 = vld [vmem:[%s5 + $0xf8] sm:$0xff]
        %v3582 = vld [vmem:[%s5 + $0x100] sm:$0xff]
        %v3583 = vld [vmem:[%s5 + $0x108] sm:$0xff]
        %v3584 = vld [vmem:[%s5 + $0x110] sm:$0xff]
        %v3585 = vld [vmem:[%s5 + $0x118] sm:$0xff]
        %v3586 = vld [vmem:[%s5 + $0x120] sm:$0xff]
        %v3587 = vld [vmem:[%s5 + $0x128] sm:$0xff]
        %v3588 = vld [vmem:[%s5 + $0x130] sm:$0xff]
        %v3589 = vld [vmem:[%s5 + $0x138] sm:$0xff]
        %v3590 = vld [vmem:[%s5 + $0x140] sm:$0xf]
        %vm3591 = vcmask 556032
        %v3593 = vsel %vm3591, %v3549, 0
        %v3596 = vsel %vm280, %v3590, 0
        %3598 = vmatprep.subr.mxu0 0.0
        %3599 = vmatpush1.msra.mxu0 %v3550
        %3600 = vmatprep.subr.mxu0 0.0
        %3601 = vmatpush1.msra.mxu0 %v3551
        %3602 = vmatprep.subr.mxu0 0.0
        %3603 = vmatpush1.msra.mxu0 %v3552
        %3604 = vmatprep.subr.mxu0 0.0
        %3605 = vmatpush1.msra.mxu0 %v3553
        %3606 = vmatprep.subr.mxu0 0.0
        %3607 = vmatpush1.msra.mxu0 %v3554
        %3608 = vmatprep.subr.mxu0 0.0
        %3609 = vmatpush1.msra.mxu0 %v3555
        %3610 = vmatprep.subr.mxu0 0.0
        %3611 = vmatpush1.msra.mxu0 %v3556
        %3612 = vmatprep.subr.mxu0 0.0
        %3613 = vmatpush1.msra.mxu0 %v3557
        %3614 = vmatprep.subr.mxu0 0.0
        %3615 = vmatpush1.msra.mxu0 %v3558
        %3616 = vmatprep.subr.mxu0 0.0
        %3617 = vmatpush1.msra.mxu0 %v3559
        %3618 = vmatprep.subr.mxu0 0.0
        %3619 = vmatpush1.msra.mxu0 %v3560
        %3620 = vmatprep.subr.mxu0 0.0
        %3621 = vmatpush1.msra.mxu0 %v3561
        %3622 = vmatprep.subr.mxu0 0.0
        %3623 = vmatpush1.msra.mxu0 %v3562
        %3624 = vmatprep.subr.mxu0 0.0
        %3625 = vmatpush1.msra.mxu0 %v3563
        %3626 = vmatprep.subr.mxu0 0.0
        %3627 = vmatpush1.msra.mxu0 %v3564
        %3628 = vmatprep.subr.mxu0 0.0
        %3629 = vmatpush1.msra.mxu0 %v3565
        %3630 = vmatprep.subr.mxu0 0.0
        %3631 = vmatpush1.msra.mxu0 %v3566
        %3632 = vmatprep.subr.mxu0 0.0
        %3633 = vmatpush1.msra.mxu0 %v3567
        %3634 = vmatprep.subr.mxu0 0.0
        %3635 = vmatpush1.msra.mxu0 %v3568
        %3636 = vmatprep.subr.mxu0 0.0
        %3637 = vmatpush1.msra.mxu0 %v3569
        %3638 = vmatprep.subr.mxu0 0.0
        %3639 = vmatpush1.msra.mxu0 %v3570
        %3640 = vmatprep.subr.mxu0 0.0
        %3641 = vmatpush1.msra.mxu0 %v3571
        %3642 = vmatprep.subr.mxu0 0.0
        %3643 = vmatpush1.msra.mxu0 %v3572
        %3644 = vmatprep.subr.mxu0 0.0
        %3645 = vmatpush1.msra.mxu0 %v3573
        %3646 = vmatprep.subr.mxu0 0.0
        %3647 = vmatpush1.msra.mxu0 %v3574
        %3648 = vmatprep.subr.mxu0 0.0
        %3649 = vmatpush1.msra.mxu0 %v3575
        %3650 = vmatprep.subr.mxu0 0.0
        %3651 = vmatpush1.msra.mxu0 %v3576
        %3652 = vmatprep.subr.mxu0 0.0
        %3653 = vmatpush1.msra.mxu0 %v3577
        %3654 = vmatprep.subr.mxu0 0.0
        %3655 = vmatpush1.msra.mxu0 %v3578
        %3656 = vmatprep.subr.mxu0 0.0
        %3657 = vmatpush1.msra.mxu0 %v3579
        %3658 = vmatprep.subr.mxu0 0.0
        %3659 = vmatpush1.msra.mxu0 %v3580
        %3660 = vmatprep.subr.mxu0 0.0
        %3661 = vmatpush1.msra.mxu0 %v3581
        %3662 = vmatprep.mubr.f32.mxu0 %v3548
        %3663 = vmatmul.mubr.f32.gmra.mrb[0].mxu0 %v3547
        %v3664 = vpop.f32.mrb[0].mxu0
        %v3665 = vadd.f32 0.0, %v3664
        %v3666 = vpop.f32.mrb[0].mxu0
        %3667 = vdwg.mxu0
        %3668 = vmatprep.subr.mxu0 0.0
        %3669 = vmatpush1.msra.mxu0 %v3582
        %3670 = vmatprep.subr.mxu0 0.0
        %3671 = vmatpush1.msra.mxu0 %v3583
        %3672 = vmatprep.subr.mxu0 0.0
        %3673 = vmatpush1.msra.mxu0 %v3584
        %3674 = vmatprep.subr.mxu0 0.0
        %3675 = vmatpush1.msra.mxu0 %v3585
        %3676 = vmatprep.subr.mxu0 0.0
        %3677 = vmatpush1.msra.mxu0 %v3586
        %3678 = vmatprep.subr.mxu0 0.0
        %3679 = vmatpush1.msra.mxu0 %v3587
        %3680 = vmatprep.subr.mxu0 0.0
        %3681 = vmatpush1.msra.mxu0 %v3588
        %3682 = vmatprep.subr.mxu0 0.0
        %3683 = vmatpush1.msra.mxu0 %v3589
        %3684 = vmatprep.subr.mxu0 0.0
        %3685 = vmatpush1.msra.mxu0 %v3596
        %3686 = vmatprep.subr.mxu0 0.0
        %3687 = vmatpush1.msra.mxu0 0.0
        %3688 = vmatprep.subr.mxu0 0.0
        %3689 = vmatpush1.msra.mxu0 0.0
        %3690 = vmatprep.subr.mxu0 0.0
        %3691 = vmatpush1.msra.mxu0 0.0
        %3692 = vmatprep.subr.mxu0 0.0
        %3693 = vmatpush1.msra.mxu0 0.0
        %3694 = vmatprep.subr.mxu0 0.0
        %3695 = vmatpush1.msra.mxu0 0.0
        %3696 = vmatprep.subr.mxu0 0.0
        %3697 = vmatpush1.msra.mxu0 0.0
        %3698 = vmatprep.subr.mxu0 0.0
        %3699 = vmatpush1.msra.mxu0 0.0
        %3700 = vmatprep.subr.mxu0 0.0
        %3701 = vmatpush1.msra.mxu0 0.0
        %3702 = vmatprep.subr.mxu0 0.0
        %3703 = vmatpush1.msra.mxu0 0.0
        %3704 = vmatprep.subr.mxu0 0.0
        %3705 = vmatpush1.msra.mxu0 0.0
        %3706 = vmatprep.subr.mxu0 0.0
        %3707 = vmatpush1.msra.mxu0 0.0
        %3708 = vmatprep.subr.mxu0 0.0
        %3709 = vmatpush1.msra.mxu0 0.0
        %3710 = vmatprep.subr.mxu0 0.0
        %3711 = vmatpush1.msra.mxu0 0.0
        %3712 = vmatprep.subr.mxu0 0.0
        %3713 = vmatpush1.msra.mxu0 0.0
        %3714 = vmatprep.subr.mxu0 0.0
        %3715 = vmatpush1.msra.mxu0 0.0
        %3716 = vmatprep.subr.mxu0 0.0
        %3717 = vmatpush1.msra.mxu0 0.0
        %3718 = vmatprep.subr.mxu0 0.0
        %3719 = vmatpush1.msra.mxu0 0.0
        %3720 = vmatprep.subr.mxu0 0.0
        %3721 = vmatpush1.msra.mxu0 0.0
        %3722 = vmatprep.subr.mxu0 0.0
        %3723 = vmatpush1.msra.mxu0 0.0
        %3724 = vmatprep.subr.mxu0 0.0
        %3725 = vmatpush1.msra.mxu0 0.0
        %3726 = vmatprep.subr.mxu0 0.0
        %3727 = vmatpush1.msra.mxu0 0.0
        %3728 = vmatprep.subr.mxu0 0.0
        %3729 = vmatpush1.msra.mxu0 0.0
        %3730 = vmatprep.subr.mxu0 0.0
        %3731 = vmatpush1.msra.mxu0 0.0
        %3732 = vmatprep.mubr.f32.mxu0 0.0
        %3733 = vmatmul.mubr.f32.gmra.mrb[0].mxu0 %v3593
        %v3734 = vpop.f32.mrb[0].mxu0
        %v3735 = vadd.f32 %v3665, %v3734
        %v3736 = vpop.f32.mrb[0].mxu0
        %3737 = vdwg.mxu0
        %vm3738 = vcmask 523264
        %3739 = vst.msk [vmem:[%s244] sm:$0xff] %vm3738, %v3735
        %s3740 = sand.u32 %s159, 1
        %s3741 = scalar_lea.sflag [#allocation4], %s3740
        %s3742 = sand.u32 %s159, 1
        %s3743 = smul.addr %s3742, 8
        %s3744 = scalar_lea.vmem [#allocation3], %s3743
        // Predicated region
        $region45: #{tpu_custom_call.1} parent=43 // pred_check
          %p3745 = pneg %p169
        $region46: #{tpu_custom_call.1} parent=43 // pred_check_branch
          %3747 = sbr.rel (%p3745) target = $region48
        $region47: #{tpu_custom_call.1} parent=43 // pred_region
          %s3749 = ssub.s32 128, 128
          %3750 = vsyncadd %s3741, %s3749
          %s3751 = smul.addr %s20, 128
          %s3752 = scalar_lea.hbm %s6, %s3751
          %s3754 = sshll.u32 %s3744, 4
          %s3755 = int_to_ptr.vmem [resolvable:$true] %s3754
          %3757 = dma.vmem_to_hbm [thread:$0]  %s3755, 128, %s3752, %s3741
        $region48: #{tpu_custom_call.1} parent=43 // pred_fallthru
          _
      $region44: #{tpu_custom_call.1} parent=5 // pred_fallthru
        _
      %p3758 = scmp.le.s32.totalorder 2, %s15
      // Predicated region
      $region49: #{tpu_custom_call.1} parent=5 // pred_check
        %p3759 = pneg %p3758
      $region50: #{tpu_custom_call.1} parent=5 // pred_check_branch
        %3761 = sbr.rel (%p3759) target = $region52
      $region51: #{tpu_custom_call.1} parent=5 // pred_region
        %s3762 = ssub.s32 %s15, 2
        // Predicated region
        $region53: #{tpu_custom_call.1} parent=51 // pred_check
          %p3763 = pneg %p175
        $region54: #{tpu_custom_call.1} parent=51 // pred_check_branch
          %3765 = sbr.rel (%p3763) target = $region56
        $region55: #{tpu_custom_call.1} parent=51 // pred_region
          %s3766 = sand.u32 %s160, 1
          %s3767 = scalar_lea.sflag [#allocation4], %s3766
          %s3768 = sand.u32 %s160, 1
          %s3769 = smul.addr %s3768, 8
          %s3770 = scalar_lea.vmem [#allocation3], %s3769
          %3771 = dma.done %s3767, 128
        $region56: #{tpu_custom_call.1} parent=51 // pred_fallthru
          _
      $region52: #{tpu_custom_call.1} parent=5 // pred_fallthru
        _
    $region6: #{tpu_custom_call.1} parent=1 // loop_footer
      %s19 = sadd.s32 1, %s15
    $region7: #{tpu_custom_call.1} parent=1 // loop_footer_branch
      %14 = sbr.rel target = $region3
    $region8: #{tpu_custom_call.1} parent=1 // loop_exit
      _
    %3772 = vsyncpa [#allocation4], 1
    %s3773 = scalar_lea.sflag [#allocation4], 1
    %3774 = vsyncpa %s3773, 1

</llo_original>
